<compile_context>
chip_gen: v7x
topology: tpu7x:2x2x1
jax: 0.10.0
libtpu: 0.0.40
codegen_flags: <defaults>
</compile_context>

<pallas_src>
import math

import numpy as np
import jax
import jax.numpy as jnp
from jax.experimental import pallas as pl
from jax.experimental.pallas import tpu as pltpu

UP_RATIO = 2
UP_KSIZE = 12
DOWN_RATIO = 2
DOWN_KSIZE = 12
SNAKE_EPS = 1e-9
DILATIONS = (1, 3, 5)
KERNEL_SIZE = 3


# ----------------------------------------------------------------------------
# Filter construction (static setup glue, mirrors kaiser_sinc_filter1d)
# ----------------------------------------------------------------------------
def kaiser_sinc_filter1d(cutoff, half_width, kernel_size):
    even = kernel_size % 2 == 0
    half_size = kernel_size // 2
    delta_f = 4 * half_width
    A = 2.285 * (half_size - 1) * math.pi * delta_f + 7.95
    if A > 50.0:
        beta = 0.1102 * (A - 8.7)
    elif A >= 21.0:
        beta = 0.5842 * (A - 21) ** 0.4 + 0.07886 * (A - 21.0)
    else:
        beta = 0.0
    window = np.kaiser(kernel_size, beta)  # == torch.kaiser_window(periodic=False)
    if even:
        time = np.arange(-half_size, half_size) + 0.5
    else:
        time = np.arange(kernel_size) - half_size
    filt = 2 * cutoff * window * np.sinc(2 * cutoff * time)
    filt = filt / filt.sum()
    return filt.astype(np.float32)  # shape (kernel_size,)


# ----------------------------------------------------------------------------
# In-kernel helpers: column masks that reproduce the module's per-stage
# constant zero padding at the signal boundaries (only bite at edge tiles).
# ----------------------------------------------------------------------------
def _zero_left(v, g0):
    # zero columns whose global index (g0 + j) < 0
    g = jax.lax.broadcasted_iota(jnp.int32, v.shape, 1) + g0
    return jnp.where(g >= 0, v, 0.0)


def _zero_right(v, g0, limit):
    # zero columns whose global index (g0 + j) >= limit
    g = jax.lax.broadcasted_iota(jnp.int32, v.shape, 1) + g0
    return jnp.where(g < limit, v, 0.0)


# ----------------------------------------------------------------------------
# Fused per-dilation step kernel:
#   y = x + conv2_d1( act2( conv1_d( act1(x) ) ) )
# act = anti-aliased SnakeBeta (2x polyphase upsample -> snake -> 2x lowpass)
# ----------------------------------------------------------------------------
def make_fused_step_kernel(C, T, tT, d, fu, fd):
    K = KERNEL_SIZE
    HL = 21 + d                 # left halo on x (composed receptive field)
    WIN = tT + 22 + 2 * d       # haloed x window per tile
    LA1 = tT + 12 + 2 * d       # act1  window  [t0-11-d, t0+tT+1+d)
    LC1 = tT + 12               # conv1 window  [t0-11,   t0+tT+1)
    LA2 = tT + 2                # act2  window  [t0-1,    t0+tT+1)

    # Fold the 2x transposed-conv gain into the upsample taps (saves two full
    # VPU passes per activation).
    fu_odd = [2.0 * float(fu[2 * t + 1]) for t in range(6)]
    fu_even = [2.0 * float(fu[2 * t]) for t in range(6)]
    fdl = [float(v) for v in fd]

    def snake_act(xin, l_out, alpha, inv_beta, g_out):
        # xin covers global columns [g_out - 10, g_out + l_out); zero outside
        # the valid signal range.  Returns columns [g_out, g_out + l_out).
        lv = l_out + 5
        # polyphase 2x upsample: even/odd phases share the same 6 shifted reads
        ue = fu_odd[0] * xin[:, 5:5 + lv]
        uo = fu_even[0] * xin[:, 5:5 + lv]
        for t in range(1, 6):
            sl = xin[:, 5 - t:5 - t + lv]
            ue = ue + fu_odd[t] * sl
            uo = uo + fu_even[t] * sl
        # SnakeBeta: u + 1/(beta+eps) * sin(alpha*u)^2  (per-channel params)
        ve = ue + inv_beta * jnp.sin(ue * alpha) ** 2
        vo = uo + inv_beta * jnp.sin(uo * alpha) ** 2
        # The odd phase at global index -1 would otherwise pick up xin[0]; the
        # module's causal pad makes it exactly zero.  (ve is already zero there.)
        vo = _zero_left(vo, g_out - 6)
        # causal stride-2 lowpass (polyphase): same slice offsets for both phases
        z = fdl[1] * ve[:, 0:l_out] + fdl[0] * vo[:, 0:l_out]
        for j in range(1, 6):
            z = z + fdl[2 * j + 1] * ve[:, j:j + l_out] + fdl[2 * j] * vo[:, j:j + l_out]
        # The module's activation output has length exactly T: columns at
        # global index >= T must read as zero for the following conv's pad.
        return _zero_right(z, g_out, T)

    def conv3(a, w, b, dil, l_out):
        # "same" K=3 dilated conv as bf16 MXU matmul(s) with f32 accumulation.
        # w: (C, 3C) bf16 = [w_k0 | w_k1 | w_k2]
        if C % 128 == 0:
            # Single (C, 3C) x (3C, l_out) matmul: deeper contraction amortizes
            # weight push / result-FIFO drain (largest win on v5e/v6e).
            rhs = jnp.concatenate(
                [a[:, k * dil:k * dil + l_out] for k in range(K)], axis=0
            ).astype(jnp.bfloat16)
            acc = jnp.dot(w, rhs, preferred_element_type=jnp.float32)
        else:
            # Unaligned channel counts (demo): K accumulated MXU calls.
            acc = jnp.dot(w[:, 0:C], a[:, 0:l_out].astype(jnp.bfloat16),
                          preferred_element_type=jnp.float32)
            for k in range(1, K):
                acc = acc + jnp.dot(
                    w[:, k * C:(k + 1) * C],
                    a[:, k * dil:k * dil + l_out].astype(jnp.bfloat16),
                    preferred_element_type=jnp.float32)
        return acc + b  # bias add in f32

    def kernel(xw_ref, w1_ref, b1_ref, a1_ref, ib1_ref,
               w2_ref, b2_ref, a2_ref, ib2_ref, o_ref):
        t0 = pl.program_id(1) * tT          # global start of this output tile
        xw = xw_ref[...]                    # (C, WIN), x over [t0-HL, t0+tT+1+d)

        # act1 -> conv1(dilation d) -> act2 -> conv2(dilation 1) -> + residual,
        # all resident on-chip; only x tiles and y tiles touch HBM.
        a1 = snake_act(xw, LA1, a1_ref[...], ib1_ref[...], g_out=t0 - 11 - d)
        c1 = conv3(a1, w1_ref[...], b1_ref[...], d, LC1)
        # conv1 exists only on [0, T): its left "same"-pad must read as exact
        # zeros for act2's FIR taps (the right side only feeds masked columns).
        c1 = _zero_left(c1, t0 - 11)
        a2 = snake_act(c1, LA2, a2_ref[...], ib2_ref[...], g_out=t0 - 1)
        c2 = conv3(a2, w2_ref[...], b2_ref[...], 1, tT)

        o_ref[...] = c2 + xw[:, HL:HL + tT]   # residual add in f32

    return kernel


# ----------------------------------------------------------------------------
# Tile-size selection: biggest lane tile whose fused working set fits VMEM
# (budget sized for v7x's 64 MiB/TC; v5e/v6e have at least as much headroom).
# ----------------------------------------------------------------------------
def _fused_step_vmem_bytes(C, tT, d):
    win = tT + 22 + 2 * d
    f32 = 4
    io = 2 * C * (win + tT) * f32                                   # 2x-buffered in/out tiles
    inter = C * (win + 3 * (tT + 17 + 2 * d) + 3 * (tT + 12)) * f32  # resident intermediates
    rhs = 2 * 3 * C * (tT + 12)                                     # bf16 stacked matmul operand
    return io + inter + rhs


def _pick_time_tile(T, C, d, budget_bytes=40 << 20):
    for cand in (4096, 2048, 1024, 512, 256, 128):
        if cand < T and T % cand == 0 and _fused_step_vmem_bytes(C, cand, d) <= budget_bytes:
            return cand
    return T


# ----------------------------------------------------------------------------
# One fused residual step of AMPBlock1 (single pallas_call)
# ----------------------------------------------------------------------------
def amp_step(x, w1, b1, alpha1, beta1, w2, b2, alpha2, beta2, fu, fd, dilation):
    B, C, T = x.shape
    d = int(dilation)
    K = KERNEL_SIZE
    tT = _pick_time_tile(T, C, d)
    nT = T // tT
    HL, HR = 21 + d, 1 + d
    WIN = tT + HL + HR

    # Haloed, zero-extended x windows: (B, nT, C, WIN).  Overlapping windows let
    # BlockSpec auto-pipeline (double-buffer) every tile; the zero extension
    # reproduces the module's constant padding at the signal boundaries.
    xpad = jnp.pad(x, ((0, 0), (0, 0), (HL, HR)))
    xw = jnp.stack([xpad[:, :, j * tT:j * tT + WIN] for j in range(nT)], axis=1)

    # Effective (weight-normed) conv weights, stacked per tap: (C, 3C) bf16.
    w1s = jnp.concatenate([w1[:, :, k] for k in range(K)], axis=1).astype(jnp.bfloat16)
    w2s = jnp.concatenate([w2[:, :, k] for k in range(K)], axis=1).astype(jnp.bfloat16)
    b1c = b1.reshape(C, 1).astype(jnp.float32)
    b2c = b2.reshape(C, 1).astype(jnp.float32)
    a1c = alpha1.reshape(C, 1).astype(jnp.float32)
    a2c = alpha2.reshape(C, 1).astype(jnp.float32)
    # 1/(beta+eps) hoisted out of the kernel entirely (per-channel scalar).
    ib1 = (1.0 / (beta1.reshape(C, 1) + SNAKE_EPS)).astype(jnp.float32)
    ib2 = (1.0 / (beta2.reshape(C, 1) + SNAKE_EPS)).astype(jnp.float32)

    kernel = make_fused_step_kernel(C, T, tT, d, fu, fd)
    zmap2 = lambda b_, t_: (0, 0)

    return pl.pallas_call(
        kernel,
        out_shape=jax.ShapeDtypeStruct((B, C, T), jnp.float32),
        grid_spec=pltpu.PrefetchScalarGridSpec(
            num_scalar_prefetch=0,
            grid=(B, nT),
            in_specs=[
                pl.BlockSpec((None, None, C, WIN), lambda b_, t_: (b_, t_, 0, 0)),
                pl.BlockSpec((C, K * C), zmap2),
                pl.BlockSpec((C, 1), zmap2),
                pl.BlockSpec((C, 1), zmap2),
                pl.BlockSpec((C, 1), zmap2),
                pl.BlockSpec((C, K * C), zmap2),
                pl.BlockSpec((C, 1), zmap2),
                pl.BlockSpec((C, 1), zmap2),
                pl.BlockSpec((C, 1), zmap2),
            ],
            out_specs=pl.BlockSpec((None, C, tT), lambda b_, t_: (b_, 0, t_)),
        ),
        compiler_params=pltpu.CompilerParams(
            # both grid axes independent -> shards across v7x's two TensorCores
            dimension_semantics=("parallel", "parallel"),
            vmem_limit_bytes=48 * 1024 * 1024,
        ),
    )(xw, w1s, b1c, a1c, ib1, w2s, b2c, a2c, ib2)


# ----------------------------------------------------------------------------
# Parameter init (deterministic, synthetic)
# ----------------------------------------------------------------------------
def init_params(key, channels, kernel_size=KERNEL_SIZE, dilations=DILATIONS):
    params = {"w1": [], "b1": [], "w2": [], "b2": [], "alpha": [], "beta": []}
    keys = jax.random.split(key, 12)
    bound = 1.0 / math.sqrt(channels * kernel_size)
    idx = 0
    for _ in dilations:
        # weight_norm at init: g = ||v|| per out-channel -> effective weight == v
        wv = 0.01 * jax.random.normal(keys[idx], (channels, channels, kernel_size)); idx += 1
        params["w1"].append(wv.astype(jnp.float32))
        params["b1"].append(jax.random.uniform(
            keys[idx], (channels,), minval=-bound, maxval=bound).astype(jnp.float32)); idx += 1
    for _ in range(3):
        wv = 0.01 * jax.random.normal(keys[idx], (channels, channels, kernel_size)); idx += 1
        params["w2"].append(wv.astype(jnp.float32))
        params["b2"].append(jax.random.uniform(
            keys[idx], (channels,), minval=-bound, maxval=bound).astype(jnp.float32)); idx += 1
    for _ in range(6):  # SnakeBeta with alpha_logscale=False -> ones
        params["alpha"].append(jnp.ones((channels,), jnp.float32))
        params["beta"].append(jnp.ones((channels,), jnp.float32))
    return params


# ----------------------------------------------------------------------------
# AMPBlock1 forward (Pallas): three fused residual steps
# ----------------------------------------------------------------------------
def amp_block1_forward(x, params, fu, fd, dilations=DILATIONS):
    for i, d in enumerate(dilations):
        x = amp_step(x,
                     params["w1"][i], params["b1"][i],
                     params["alpha"][2 * i], params["beta"][2 * i],
                     params["w2"][i], params["b2"][i],
                     params["alpha"][2 * i + 1], params["beta"][2 * i + 1],
                     fu, fd, d)
    return x


# ----------------------------------------------------------------------------
# Pure-numpy reference (direct translation of the PyTorch forward)
# ----------------------------------------------------------------------------
def _np_act1d(x, fu, fd, alpha, beta):
    B, C, T = x.shape
    # UpSample1d (ratio=2, k=12), causal
    pad, stride, K = 5, 2, 12
    xp = np.pad(x, ((0, 0), (0, 0), (pad, pad)))
    L = xp.shape[-1]
    y = np.zeros((B, C, (L - 1) * stride + K))
    for i in range(L):
        y[:, :, i * stride:i * stride + K] += xp[:, :, i:i + 1] * fu[None, None, :]
    y *= 2.0
    y = y[:, :, 15 - 2 * stride: y.shape[-1] - (15 + 2 * stride)]
    # SnakeBeta
    a = alpha[None, :, None]
    bt = beta[None, :, None]
    y = y + 1.0 / (bt + SNAKE_EPS) * np.sin(y * a) ** 2
    # DownSample1d (ratio=2, k=12), causal lowpass
    yp = np.pad(y, ((0, 0), (0, 0), (11, 0)))
    Lo = (yp.shape[-1] - 12) // 2 + 1
    z = np.zeros((B, C, Lo))
    for n in range(Lo):
        z[:, :, n] = (yp[:, :, 2 * n:2 * n + 12] * fd[None, None, :]).sum(-1)
    return z


def _np_conv1d(x, w, b, dilation):
    B, C, T = x.shape
    Co, Ci, K = w.shape
    pad = (K * dilation - dilation) // 2
    xp = np.pad(x, ((0, 0), (0, 0), (pad, pad)))
    out = np.zeros((B, Co, T))
    for n in range(T):
        for k in range(K):
            out[:, :, n] += xp[:, :, n + k * dilation] @ w[:, :, k].T
    out += b[None, :, None]
    return out


def amp_block1_reference(x, params, fu, fd, dilations=DILATIONS):
    x = np.asarray(x, np.float64)
    fu = np.asarray(fu, np.float64)
    fd = np.asarray(fd, np.float64)
    for i, d in enumerate(dilations):
        xt = _np_act1d(x, fu, fd, np.asarray(params["alpha"][2 * i], np.float64),
                       np.asarray(params["beta"][2 * i], np.float64))
        xt = _np_conv1d(xt, np.asarray(params["w1"][i], np.float64),
                        np.asarray(params["b1"][i], np.float64), d)
        xt = _np_act1d(xt, fu, fd, np.asarray(params["alpha"][2 * i + 1], np.float64),
                       np.asarray(params["beta"][2 * i + 1], np.float64))
        xt = _np_conv1d(xt, np.asarray(params["w2"][i], np.float64),
                        np.asarray(params["b2"][i], np.float64), 1)
        x = xt + x
    return x


# ----------------------------------------------------------------------------
if __name__ == "__main__":
    B, C, T = 2, 4, 16
    key = jax.random.PRNGKey(0)
    kx, kp = jax.random.split(key)
    x = jax.random.normal(kx, (B, C, T), jnp.float32)
    params = init_params(kp, C)

    fu = kaiser_sinc_filter1d(0.5 / UP_RATIO, 0.6 / UP_RATIO, UP_KSIZE)
    fd = kaiser_sinc_filter1d(0.5 / DOWN_RATIO, 0.6 / DOWN_RATIO, DOWN_KSIZE)

    fwd = jax.jit(lambda xx: amp_block1_forward(xx, params, fu, fd))
    out = fwd(x)
    out = jax.block_until_ready(out)

    ref = amp_block1_reference(np.asarray(x), params, fu, fd)
    # bf16 MXU operands (f32 accumulation, f32 bias/residual) -> 5e-3 tolerance
    # vs the f64 reference.
    np.testing.assert_allclose(np.asarray(out), ref, rtol=5e-3, atol=5e-3)
    print("KERNEL_OK")
</pallas_src>

<mosaic_0001>
module attributes {stable_mosaic.version = 11 : i64} {
  func.func @kernel(%arg0: i32, %arg1: i32, %arg2: memref<1x1x4x40xf32, #tpu.memory_space<vmem>>, %arg3: memref<4x12xbf16, #tpu.memory_space<vmem>>, %arg4: memref<4x1xf32, #tpu.memory_space<vmem>>, %arg5: memref<4x1xf32, #tpu.memory_space<vmem>>, %arg6: memref<4x1xf32, #tpu.memory_space<vmem>>, %arg7: memref<4x12xbf16, #tpu.memory_space<vmem>>, %arg8: memref<4x1xf32, #tpu.memory_space<vmem>>, %arg9: memref<4x1xf32, #tpu.memory_space<vmem>>, %arg10: memref<4x1xf32, #tpu.memory_space<vmem>>, %arg11: memref<1x4x16xf32, #tpu.memory_space<vmem>>) attributes {dimension_semantics = [#tpu.dimension_semantics<parallel>, #tpu.dimension_semantics<parallel>], iteration_bounds = array<i64: 2, 1>, scalar_prefetch = 0 : i64, scratch_operands = 0 : i64, tpu.core_type = #tpu.core_type<tc>, window_params = [{transform_indices = @transform_0, window_bounds = array<i64: 1, 1, 4, 40>}, {pipeline_mode = #tpu.pipeline_mode<synchronous>, transform_indices = @transform_1, window_bounds = array<i64: 4, 12>}, {pipeline_mode = #tpu.pipeline_mode<synchronous>, transform_indices = @transform_2, window_bounds = array<i64: 4, 1>}, {pipeline_mode = #tpu.pipeline_mode<synchronous>, transform_indices = @transform_3, window_bounds = array<i64: 4, 1>}, {pipeline_mode = #tpu.pipeline_mode<synchronous>, transform_indices = @transform_4, window_bounds = array<i64: 4, 1>}, {pipeline_mode = #tpu.pipeline_mode<synchronous>, transform_indices = @transform_5, window_bounds = array<i64: 4, 12>}, {pipeline_mode = #tpu.pipeline_mode<synchronous>, transform_indices = @transform_6, window_bounds = array<i64: 4, 1>}, {pipeline_mode = #tpu.pipeline_mode<synchronous>, transform_indices = @transform_7, window_bounds = array<i64: 4, 1>}, {pipeline_mode = #tpu.pipeline_mode<synchronous>, transform_indices = @transform_8, window_bounds = array<i64: 4, 1>}, {transform_indices = @transform_9, window_bounds = array<i64: 1, 4, 16>}]} {
    %c16_i32 = arith.constant 16 : i32
    %0 = arith.muli %arg1, %c16_i32 : i32
    %c0 = arith.constant 0 : index
    %c0_0 = arith.constant 0 : index
    %c0_1 = arith.constant 0 : index
    %c0_2 = arith.constant 0 : index
    %1 = vector.load %arg2[%c0, %c0_0, %c0_1, %c0_2] : memref<1x1x4x40xf32, #tpu.memory_space<vmem>>, vector<1x1x4x40xf32>
    %2 = vector.shape_cast %1 : vector<1x1x4x40xf32> to vector<4x40xf32>
    %c0_3 = arith.constant 0 : index
    %c0_4 = arith.constant 0 : index
    %3 = vector.load %arg5[%c0_3, %c0_4] : memref<4x1xf32, #tpu.memory_space<vmem>>, vector<4x1xf32>
    %c0_5 = arith.constant 0 : index
    %c0_6 = arith.constant 0 : index
    %4 = vector.load %arg6[%c0_5, %c0_6] : memref<4x1xf32, #tpu.memory_space<vmem>>, vector<4x1xf32>
    %c11_i32 = arith.constant 11 : i32
    %5 = arith.subi %0, %c11_i32 : i32
    %c1_i32 = arith.constant 1 : i32
    %6 = arith.subi %5, %c1_i32 : i32
    %7 = vector.extract_strided_slice %2 {offsets = [0, 5], sizes = [4, 35], strides = [1, 1]} : vector<4x40xf32> to vector<4x35xf32>
    %cst = arith.constant 0.0187789276 : f32
    %8 = vector.broadcast %cst : f32 to vector<4x35xf32>
    %9 = arith.mulf %8, %7 : vector<4x35xf32>
    %10 = vector.extract_strided_slice %2 {offsets = [0, 5], sizes = [4, 35], strides = [1, 1]} : vector<4x40xf32> to vector<4x35xf32>
    %cst_7 = arith.constant 0.00405793311 : f32
    %11 = vector.broadcast %cst_7 : f32 to vector<4x35xf32>
    %12 = arith.mulf %11, %10 : vector<4x35xf32>
    %13 = vector.extract_strided_slice %2 {offsets = [0, 4], sizes = [4, 35], strides = [1, 1]} : vector<4x40xf32> to vector<4x35xf32>
    %cst_8 = arith.constant -0.115314752 : f32
    %14 = vector.broadcast %cst_8 : f32 to vector<4x35xf32>
    %15 = arith.mulf %14, %13 : vector<4x35xf32>
    %16 = arith.addf %9, %15 : vector<4x35xf32>
    %cst_9 = arith.constant -0.0510869287 : f32
    %17 = vector.broadcast %cst_9 : f32 to vector<4x35xf32>
    %18 = arith.mulf %17, %13 : vector<4x35xf32>
    %19 = arith.addf %12, %18 : vector<4x35xf32>
    %20 = vector.extract_strided_slice %2 {offsets = [0, 3], sizes = [4, 35], strides = [1, 1]} : vector<4x40xf32> to vector<4x35xf32>
    %cst_10 = arith.constant 0.886419594 : f32
    %21 = vector.broadcast %cst_10 : f32 to vector<4x35xf32>
    %22 = arith.mulf %21, %20 : vector<4x35xf32>
    %23 = arith.addf %16, %22 : vector<4x35xf32>
    %cst_11 = arith.constant 0.257145226 : f32
    %24 = vector.broadcast %cst_11 : f32 to vector<4x35xf32>
    %25 = arith.mulf %24, %20 : vector<4x35xf32>
    %26 = arith.addf %19, %25 : vector<4x35xf32>
    %27 = vector.extract_strided_slice %2 {offsets = [0, 2], sizes = [4, 35], strides = [1, 1]} : vector<4x40xf32> to vector<4x35xf32>
    %cst_12 = arith.constant 0.257145226 : f32
    %28 = vector.broadcast %cst_12 : f32 to vector<4x35xf32>
    %29 = arith.mulf %28, %27 : vector<4x35xf32>
    %30 = arith.addf %23, %29 : vector<4x35xf32>
    %cst_13 = arith.constant 0.886419594 : f32
    %31 = vector.broadcast %cst_13 : f32 to vector<4x35xf32>
    %32 = arith.mulf %31, %27 : vector<4x35xf32>
    %33 = arith.addf %26, %32 : vector<4x35xf32>
    %34 = vector.extract_strided_slice %2 {offsets = [0, 1], sizes = [4, 35], strides = [1, 1]} : vector<4x40xf32> to vector<4x35xf32>
    %cst_14 = arith.constant -0.0510869287 : f32
    %35 = vector.broadcast %cst_14 : f32 to vector<4x35xf32>
    %36 = arith.mulf %35, %34 : vector<4x35xf32>
    %37 = arith.addf %30, %36 : vector<4x35xf32>
    %cst_15 = arith.constant -0.115314752 : f32
    %38 = vector.broadcast %cst_15 : f32 to vector<4x35xf32>
    %39 = arith.mulf %38, %34 : vector<4x35xf32>
    %40 = arith.addf %33, %39 : vector<4x35xf32>
    %41 = vector.extract_strided_slice %2 {offsets = [0, 0], sizes = [4, 35], strides = [1, 1]} : vector<4x40xf32> to vector<4x35xf32>
    %cst_16 = arith.constant 0.00405793311 : f32
    %42 = vector.broadcast %cst_16 : f32 to vector<4x35xf32>
    %43 = arith.mulf %42, %41 : vector<4x35xf32>
    %44 = arith.addf %37, %43 : vector<4x35xf32>
    %cst_17 = arith.constant 0.0187789276 : f32
    %45 = vector.broadcast %cst_17 : f32 to vector<4x35xf32>
    %46 = arith.mulf %45, %41 : vector<4x35xf32>
    %47 = arith.addf %40, %46 : vector<4x35xf32>
    %48 = vector.broadcast %3 : vector<4x1xf32> to vector<4x35xf32>
    %49 = arith.mulf %44, %48 : vector<4x35xf32>
    %50 = math.sin %49 : vector<4x35xf32>
    %51 = arith.mulf %50, %50 : vector<4x35xf32>
    %52 = vector.broadcast %4 : vector<4x1xf32> to vector<4x35xf32>
    %53 = arith.mulf %52, %51 : vector<4x35xf32>
    %54 = arith.addf %44, %53 : vector<4x35xf32>
    %55 = vector.broadcast %3 : vector<4x1xf32> to vector<4x35xf32>
    %56 = arith.mulf %47, %55 : vector<4x35xf32>
    %57 = math.sin %56 : vector<4x35xf32>
    %58 = arith.mulf %57, %57 : vector<4x35xf32>
    %59 = vector.broadcast %4 : vector<4x1xf32> to vector<4x35xf32>
    %60 = arith.mulf %59, %58 : vector<4x35xf32>
    %61 = arith.addf %47, %60 : vector<4x35xf32>
    %c6_i32 = arith.constant 6 : i32
    %62 = arith.subi %6, %c6_i32 : i32
    %63 = tpu.iota {dimensions = array<i32: 1>} : vector<4x35xi32>
    %64 = vector.broadcast %62 : i32 to vector<4x35xi32>
    %65 = arith.addi %63, %64 : vector<4x35xi32>
    %c0_i32 = arith.constant 0 : i32
    %66 = vector.broadcast %c0_i32 : i32 to vector<4x35xi32>
    %67 = arith.cmpi sge, %65, %66 : vector<4x35xi32>
    %cst_18 = arith.constant 0.000000e+00 : f32
    %68 = vector.broadcast %cst_18 : f32 to vector<4x35xf32>
    %69 = arith.select %67, %61, %68 : vector<4x35xi1>, vector<4x35xf32>
    %70 = vector.extract_strided_slice %54 {offsets = [0, 0], sizes = [4, 30], strides = [1, 1]} : vector<4x35xf32> to vector<4x30xf32>
    %cst_19 = arith.constant 0.00938946381 : f32
    %71 = vector.broadcast %cst_19 : f32 to vector<4x30xf32>
    %72 = arith.mulf %71, %70 : vector<4x30xf32>
    %73 = vector.extract_strided_slice %69 {offsets = [0, 0], sizes = [4, 30], strides = [1, 1]} : vector<4x35xf32> to vector<4x30xf32>
    %cst_20 = arith.constant 0.00202896656 : f32
    %74 = vector.broadcast %cst_20 : f32 to vector<4x30xf32>
    %75 = arith.mulf %74, %73 : vector<4x30xf32>
    %76 = arith.addf %72, %75 : vector<4x30xf32>
    %77 = vector.extract_strided_slice %54 {offsets = [0, 1], sizes = [4, 30], strides = [1, 1]} : vector<4x35xf32> to vector<4x30xf32>
    %cst_21 = arith.constant -0.0576573759 : f32
    %78 = vector.broadcast %cst_21 : f32 to vector<4x30xf32>
    %79 = arith.mulf %78, %77 : vector<4x30xf32>
    %80 = arith.addf %76, %79 : vector<4x30xf32>
    %81 = vector.extract_strided_slice %69 {offsets = [0, 1], sizes = [4, 30], strides = [1, 1]} : vector<4x35xf32> to vector<4x30xf32>
    %cst_22 = arith.constant -0.0255434643 : f32
    %82 = vector.broadcast %cst_22 : f32 to vector<4x30xf32>
    %83 = arith.mulf %82, %81 : vector<4x30xf32>
    %84 = arith.addf %80, %83 : vector<4x30xf32>
    %85 = vector.extract_strided_slice %54 {offsets = [0, 2], sizes = [4, 30], strides = [1, 1]} : vector<4x35xf32> to vector<4x30xf32>
    %cst_23 = arith.constant 0.443209797 : f32
    %86 = vector.broadcast %cst_23 : f32 to vector<4x30xf32>
    %87 = arith.mulf %86, %85 : vector<4x30xf32>
    %88 = arith.addf %84, %87 : vector<4x30xf32>
    %89 = vector.extract_strided_slice %69 {offsets = [0, 2], sizes = [4, 30], strides = [1, 1]} : vector<4x35xf32> to vector<4x30xf32>
    %cst_24 = arith.constant 0.128572613 : f32
    %90 = vector.broadcast %cst_24 : f32 to vector<4x30xf32>
    %91 = arith.mulf %90, %89 : vector<4x30xf32>
    %92 = arith.addf %88, %91 : vector<4x30xf32>
    %93 = vector.extract_strided_slice %54 {offsets = [0, 3], sizes = [4, 30], strides = [1, 1]} : vector<4x35xf32> to vector<4x30xf32>
    %cst_25 = arith.constant 0.128572613 : f32
    %94 = vector.broadcast %cst_25 : f32 to vector<4x30xf32>
    %95 = arith.mulf %94, %93 : vector<4x30xf32>
    %96 = arith.addf %92, %95 : vector<4x30xf32>
    %97 = vector.extract_strided_slice %69 {offsets = [0, 3], sizes = [4, 30], strides = [1, 1]} : vector<4x35xf32> to vector<4x30xf32>
    %cst_26 = arith.constant 0.443209797 : f32
    %98 = vector.broadcast %cst_26 : f32 to vector<4x30xf32>
    %99 = arith.mulf %98, %97 : vector<4x30xf32>
    %100 = arith.addf %96, %99 : vector<4x30xf32>
    %101 = vector.extract_strided_slice %54 {offsets = [0, 4], sizes = [4, 30], strides = [1, 1]} : vector<4x35xf32> to vector<4x30xf32>
    %cst_27 = arith.constant -0.0255434643 : f32
    %102 = vector.broadcast %cst_27 : f32 to vector<4x30xf32>
    %103 = arith.mulf %102, %101 : vector<4x30xf32>
    %104 = arith.addf %100, %103 : vector<4x30xf32>
    %105 = vector.extract_strided_slice %69 {offsets = [0, 4], sizes = [4, 30], strides = [1, 1]} : vector<4x35xf32> to vector<4x30xf32>
    %cst_28 = arith.constant -0.0576573759 : f32
    %106 = vector.broadcast %cst_28 : f32 to vector<4x30xf32>
    %107 = arith.mulf %106, %105 : vector<4x30xf32>
    %108 = arith.addf %104, %107 : vector<4x30xf32>
    %109 = vector.extract_strided_slice %54 {offsets = [0, 5], sizes = [4, 30], strides = [1, 1]} : vector<4x35xf32> to vector<4x30xf32>
    %cst_29 = arith.constant 0.00202896656 : f32
    %110 = vector.broadcast %cst_29 : f32 to vector<4x30xf32>
    %111 = arith.mulf %110, %109 : vector<4x30xf32>
    %112 = arith.addf %108, %111 : vector<4x30xf32>
    %113 = vector.extract_strided_slice %69 {offsets = [0, 5], sizes = [4, 30], strides = [1, 1]} : vector<4x35xf32> to vector<4x30xf32>
    %cst_30 = arith.constant 0.00938946381 : f32
    %114 = vector.broadcast %cst_30 : f32 to vector<4x30xf32>
    %115 = arith.mulf %114, %113 : vector<4x30xf32>
    %116 = arith.addf %112, %115 : vector<4x30xf32>
    %117 = tpu.iota {dimensions = array<i32: 1>} : vector<4x30xi32>
    %118 = vector.broadcast %6 : i32 to vector<4x30xi32>
    %119 = arith.addi %117, %118 : vector<4x30xi32>
    %c16_i32_31 = arith.constant 16 : i32
    %120 = vector.broadcast %c16_i32_31 : i32 to vector<4x30xi32>
    %121 = arith.cmpi slt, %119, %120 : vector<4x30xi32>
    %cst_32 = arith.constant 0.000000e+00 : f32
    %122 = vector.broadcast %cst_32 : f32 to vector<4x30xf32>
    %123 = arith.select %121, %116, %122 : vector<4x30xi1>, vector<4x30xf32>
    %c0_33 = arith.constant 0 : index
    %c0_34 = arith.constant 0 : index
    %124 = vector.load %arg3[%c0_33, %c0_34] : memref<4x12xbf16, #tpu.memory_space<vmem>>, vector<4x12xbf16>
    %c0_35 = arith.constant 0 : index
    %c0_36 = arith.constant 0 : index
    %125 = vector.load %arg4[%c0_35, %c0_36] : memref<4x1xf32, #tpu.memory_space<vmem>>, vector<4x1xf32>
    %126 = vector.extract_strided_slice %124 {offsets = [0, 0], sizes = [4, 4], strides = [1, 1]} : vector<4x12xbf16> to vector<4x4xbf16>
    %127 = vector.extract_strided_slice %123 {offsets = [0, 0], sizes = [4, 28], strides = [1, 1]} : vector<4x30xf32> to vector<4x28xf32>
    %128 = arith.truncf %127 : vector<4x28xf32> to vector<4x28xbf16>
    %cst_37 = arith.constant dense<0.000000e+00> : vector<4x28xf32>
    %129 = tpu.matmul %126, %128, %cst_37 {dimension_numbers = #tpu.dot_dimension_numbers<[1], [0], [0], [1], [0, 0, 1, 1], [], []>} : vector<4x4xbf16>, vector<4x28xbf16>, vector<4x28xf32> -> vector<4x28xf32>
    %130 = vector.extract_strided_slice %124 {offsets = [0, 4], sizes = [4, 4], strides = [1, 1]} : vector<4x12xbf16> to vector<4x4xbf16>
    %131 = vector.extract_strided_slice %123 {offsets = [0, 1], sizes = [4, 28], strides = [1, 1]} : vector<4x30xf32> to vector<4x28xf32>
    %132 = arith.truncf %131 : vector<4x28xf32> to vector<4x28xbf16>
    %cst_38 = arith.constant dense<0.000000e+00> : vector<4x28xf32>
    %133 = tpu.matmul %130, %132, %cst_38 {dimension_numbers = #tpu.dot_dimension_numbers<[1], [0], [0], [1], [0, 0, 1, 1], [], []>} : vector<4x4xbf16>, vector<4x28xbf16>, vector<4x28xf32> -> vector<4x28xf32>
    %134 = arith.addf %129, %133 : vector<4x28xf32>
    %135 = vector.extract_strided_slice %124 {offsets = [0, 8], sizes = [4, 4], strides = [1, 1]} : vector<4x12xbf16> to vector<4x4xbf16>
    %136 = vector.extract_strided_slice %123 {offsets = [0, 2], sizes = [4, 28], strides = [1, 1]} : vector<4x30xf32> to vector<4x28xf32>
    %137 = arith.truncf %136 : vector<4x28xf32> to vector<4x28xbf16>
    %cst_39 = arith.constant dense<0.000000e+00> : vector<4x28xf32>
    %138 = tpu.matmul %135, %137, %cst_39 {dimension_numbers = #tpu.dot_dimension_numbers<[1], [0], [0], [1], [0, 0, 1, 1], [], []>} : vector<4x4xbf16>, vector<4x28xbf16>, vector<4x28xf32> -> vector<4x28xf32>
    %139 = arith.addf %134, %138 : vector<4x28xf32>
    %140 = vector.broadcast %125 : vector<4x1xf32> to vector<4x28xf32>
    %141 = arith.addf %139, %140 : vector<4x28xf32>
    %c11_i32_40 = arith.constant 11 : i32
    %142 = arith.subi %0, %c11_i32_40 : i32
    %143 = tpu.iota {dimensions = array<i32: 1>} : vector<4x28xi32>
    %144 = vector.broadcast %142 : i32 to vector<4x28xi32>
    %145 = arith.addi %143, %144 : vector<4x28xi32>
    %c0_i32_41 = arith.constant 0 : i32
    %146 = vector.broadcast %c0_i32_41 : i32 to vector<4x28xi32>
    %147 = arith.cmpi sge, %145, %146 : vector<4x28xi32>
    %cst_42 = arith.constant 0.000000e+00 : f32
    %148 = vector.broadcast %cst_42 : f32 to vector<4x28xf32>
    %149 = arith.select %147, %141, %148 : vector<4x28xi1>, vector<4x28xf32>
    %c0_43 = arith.constant 0 : index
    %c0_44 = arith.constant 0 : index
    %150 = vector.load %arg9[%c0_43, %c0_44] : memref<4x1xf32, #tpu.memory_space<vmem>>, vector<4x1xf32>
    %c0_45 = arith.constant 0 : index
    %c0_46 = arith.constant 0 : index
    %151 = vector.load %arg10[%c0_45, %c0_46] : memref<4x1xf32, #tpu.memory_space<vmem>>, vector<4x1xf32>
    %c1_i32_47 = arith.constant 1 : i32
    %152 = arith.subi %0, %c1_i32_47 : i32
    %153 = vector.extract_strided_slice %149 {offsets = [0, 5], sizes = [4, 23], strides = [1, 1]} : vector<4x28xf32> to vector<4x23xf32>
    %cst_48 = arith.constant 0.0187789276 : f32
    %154 = vector.broadcast %cst_48 : f32 to vector<4x23xf32>
    %155 = arith.mulf %154, %153 : vector<4x23xf32>
    %156 = vector.extract_strided_slice %149 {offsets = [0, 5], sizes = [4, 23], strides = [1, 1]} : vector<4x28xf32> to vector<4x23xf32>
    %cst_49 = arith.constant 0.00405793311 : f32
    %157 = vector.broadcast %cst_49 : f32 to vector<4x23xf32>
    %158 = arith.mulf %157, %156 : vector<4x23xf32>
    %159 = vector.extract_strided_slice %149 {offsets = [0, 4], sizes = [4, 23], strides = [1, 1]} : vector<4x28xf32> to vector<4x23xf32>
    %cst_50 = arith.constant -0.115314752 : f32
    %160 = vector.broadcast %cst_50 : f32 to vector<4x23xf32>
    %161 = arith.mulf %160, %159 : vector<4x23xf32>
    %162 = arith.addf %155, %161 : vector<4x23xf32>
    %cst_51 = arith.constant -0.0510869287 : f32
    %163 = vector.broadcast %cst_51 : f32 to vector<4x23xf32>
    %164 = arith.mulf %163, %159 : vector<4x23xf32>
    %165 = arith.addf %158, %164 : vector<4x23xf32>
    %166 = vector.extract_strided_slice %149 {offsets = [0, 3], sizes = [4, 23], strides = [1, 1]} : vector<4x28xf32> to vector<4x23xf32>
    %cst_52 = arith.constant 0.886419594 : f32
    %167 = vector.broadcast %cst_52 : f32 to vector<4x23xf32>
    %168 = arith.mulf %167, %166 : vector<4x23xf32>
    %169 = arith.addf %162, %168 : vector<4x23xf32>
    %cst_53 = arith.constant 0.257145226 : f32
    %170 = vector.broadcast %cst_53 : f32 to vector<4x23xf32>
    %171 = arith.mulf %170, %166 : vector<4x23xf32>
    %172 = arith.addf %165, %171 : vector<4x23xf32>
    %173 = vector.extract_strided_slice %149 {offsets = [0, 2], sizes = [4, 23], strides = [1, 1]} : vector<4x28xf32> to vector<4x23xf32>
    %cst_54 = arith.constant 0.257145226 : f32
    %174 = vector.broadcast %cst_54 : f32 to vector<4x23xf32>
    %175 = arith.mulf %174, %173 : vector<4x23xf32>
    %176 = arith.addf %169, %175 : vector<4x23xf32>
    %cst_55 = arith.constant 0.886419594 : f32
    %177 = vector.broadcast %cst_55 : f32 to vector<4x23xf32>
    %178 = arith.mulf %177, %173 : vector<4x23xf32>
    %179 = arith.addf %172, %178 : vector<4x23xf32>
    %180 = vector.extract_strided_slice %149 {offsets = [0, 1], sizes = [4, 23], strides = [1, 1]} : vector<4x28xf32> to vector<4x23xf32>
    %cst_56 = arith.constant -0.0510869287 : f32
    %181 = vector.broadcast %cst_56 : f32 to vector<4x23xf32>
    %182 = arith.mulf %181, %180 : vector<4x23xf32>
    %183 = arith.addf %176, %182 : vector<4x23xf32>
    %cst_57 = arith.constant -0.115314752 : f32
    %184 = vector.broadcast %cst_57 : f32 to vector<4x23xf32>
    %185 = arith.mulf %184, %180 : vector<4x23xf32>
    %186 = arith.addf %179, %185 : vector<4x23xf32>
    %187 = vector.extract_strided_slice %149 {offsets = [0, 0], sizes = [4, 23], strides = [1, 1]} : vector<4x28xf32> to vector<4x23xf32>
    %cst_58 = arith.constant 0.00405793311 : f32
    %188 = vector.broadcast %cst_58 : f32 to vector<4x23xf32>
    %189 = arith.mulf %188, %187 : vector<4x23xf32>
    %190 = arith.addf %183, %189 : vector<4x23xf32>
    %cst_59 = arith.constant 0.0187789276 : f32
    %191 = vector.broadcast %cst_59 : f32 to vector<4x23xf32>
    %192 = arith.mulf %191, %187 : vector<4x23xf32>
    %193 = arith.addf %186, %192 : vector<4x23xf32>
    %194 = vector.broadcast %150 : vector<4x1xf32> to vector<4x23xf32>
    %195 = arith.mulf %190, %194 : vector<4x23xf32>
    %196 = math.sin %195 : vector<4x23xf32>
    %197 = arith.mulf %196, %196 : vector<4x23xf32>
    %198 = vector.broadcast %151 : vector<4x1xf32> to vector<4x23xf32>
    %199 = arith.mulf %198, %197 : vector<4x23xf32>
    %200 = arith.addf %190, %199 : vector<4x23xf32>
    %201 = vector.broadcast %150 : vector<4x1xf32> to vector<4x23xf32>
    %202 = arith.mulf %193, %201 : vector<4x23xf32>
    %203 = math.sin %202 : vector<4x23xf32>
    %204 = arith.mulf %203, %203 : vector<4x23xf32>
    %205 = vector.broadcast %151 : vector<4x1xf32> to vector<4x23xf32>
    %206 = arith.mulf %205, %204 : vector<4x23xf32>
    %207 = arith.addf %193, %206 : vector<4x23xf32>
    %c6_i32_60 = arith.constant 6 : i32
    %208 = arith.subi %152, %c6_i32_60 : i32
    %209 = tpu.iota {dimensions = array<i32: 1>} : vector<4x23xi32>
    %210 = vector.broadcast %208 : i32 to vector<4x23xi32>
    %211 = arith.addi %209, %210 : vector<4x23xi32>
    %c0_i32_61 = arith.constant 0 : i32
    %212 = vector.broadcast %c0_i32_61 : i32 to vector<4x23xi32>
    %213 = arith.cmpi sge, %211, %212 : vector<4x23xi32>
    %cst_62 = arith.constant 0.000000e+00 : f32
    %214 = vector.broadcast %cst_62 : f32 to vector<4x23xf32>
    %215 = arith.select %213, %207, %214 : vector<4x23xi1>, vector<4x23xf32>
    %216 = vector.extract_strided_slice %200 {offsets = [0, 0], sizes = [4, 18], strides = [1, 1]} : vector<4x23xf32> to vector<4x18xf32>
    %cst_63 = arith.constant 0.00938946381 : f32
    %217 = vector.broadcast %cst_63 : f32 to vector<4x18xf32>
    %218 = arith.mulf %217, %216 : vector<4x18xf32>
    %219 = vector.extract_strided_slice %215 {offsets = [0, 0], sizes = [4, 18], strides = [1, 1]} : vector<4x23xf32> to vector<4x18xf32>
    %cst_64 = arith.constant 0.00202896656 : f32
    %220 = vector.broadcast %cst_64 : f32 to vector<4x18xf32>
    %221 = arith.mulf %220, %219 : vector<4x18xf32>
    %222 = arith.addf %218, %221 : vector<4x18xf32>
    %223 = vector.extract_strided_slice %200 {offsets = [0, 1], sizes = [4, 18], strides = [1, 1]} : vector<4x23xf32> to vector<4x18xf32>
    %cst_65 = arith.constant -0.0576573759 : f32
    %224 = vector.broadcast %cst_65 : f32 to vector<4x18xf32>
    %225 = arith.mulf %224, %223 : vector<4x18xf32>
    %226 = arith.addf %222, %225 : vector<4x18xf32>
    %227 = vector.extract_strided_slice %215 {offsets = [0, 1], sizes = [4, 18], strides = [1, 1]} : vector<4x23xf32> to vector<4x18xf32>
    %cst_66 = arith.constant -0.0255434643 : f32
    %228 = vector.broadcast %cst_66 : f32 to vector<4x18xf32>
    %229 = arith.mulf %228, %227 : vector<4x18xf32>
    %230 = arith.addf %226, %229 : vector<4x18xf32>
    %231 = vector.extract_strided_slice %200 {offsets = [0, 2], sizes = [4, 18], strides = [1, 1]} : vector<4x23xf32> to vector<4x18xf32>
    %cst_67 = arith.constant 0.443209797 : f32
    %232 = vector.broadcast %cst_67 : f32 to vector<4x18xf32>
    %233 = arith.mulf %232, %231 : vector<4x18xf32>
    %234 = arith.addf %230, %233 : vector<4x18xf32>
    %235 = vector.extract_strided_slice %215 {offsets = [0, 2], sizes = [4, 18], strides = [1, 1]} : vector<4x23xf32> to vector<4x18xf32>
    %cst_68 = arith.constant 0.128572613 : f32
    %236 = vector.broadcast %cst_68 : f32 to vector<4x18xf32>
    %237 = arith.mulf %236, %235 : vector<4x18xf32>
    %238 = arith.addf %234, %237 : vector<4x18xf32>
    %239 = vector.extract_strided_slice %200 {offsets = [0, 3], sizes = [4, 18], strides = [1, 1]} : vector<4x23xf32> to vector<4x18xf32>
    %cst_69 = arith.constant 0.128572613 : f32
    %240 = vector.broadcast %cst_69 : f32 to vector<4x18xf32>
    %241 = arith.mulf %240, %239 : vector<4x18xf32>
    %242 = arith.addf %238, %241 : vector<4x18xf32>
    %243 = vector.extract_strided_slice %215 {offsets = [0, 3], sizes = [4, 18], strides = [1, 1]} : vector<4x23xf32> to vector<4x18xf32>
    %cst_70 = arith.constant 0.443209797 : f32
    %244 = vector.broadcast %cst_70 : f32 to vector<4x18xf32>
    %245 = arith.mulf %244, %243 : vector<4x18xf32>
    %246 = arith.addf %242, %245 : vector<4x18xf32>
    %247 = vector.extract_strided_slice %200 {offsets = [0, 4], sizes = [4, 18], strides = [1, 1]} : vector<4x23xf32> to vector<4x18xf32>
    %cst_71 = arith.constant -0.0255434643 : f32
    %248 = vector.broadcast %cst_71 : f32 to vector<4x18xf32>
    %249 = arith.mulf %248, %247 : vector<4x18xf32>
    %250 = arith.addf %246, %249 : vector<4x18xf32>
    %251 = vector.extract_strided_slice %215 {offsets = [0, 4], sizes = [4, 18], strides = [1, 1]} : vector<4x23xf32> to vector<4x18xf32>
    %cst_72 = arith.constant -0.0576573759 : f32
    %252 = vector.broadcast %cst_72 : f32 to vector<4x18xf32>
    %253 = arith.mulf %252, %251 : vector<4x18xf32>
    %254 = arith.addf %250, %253 : vector<4x18xf32>
    %255 = vector.extract_strided_slice %200 {offsets = [0, 5], sizes = [4, 18], strides = [1, 1]} : vector<4x23xf32> to vector<4x18xf32>
    %cst_73 = arith.constant 0.00202896656 : f32
    %256 = vector.broadcast %cst_73 : f32 to vector<4x18xf32>
    %257 = arith.mulf %256, %255 : vector<4x18xf32>
    %258 = arith.addf %254, %257 : vector<4x18xf32>
    %259 = vector.extract_strided_slice %215 {offsets = [0, 5], sizes = [4, 18], strides = [1, 1]} : vector<4x23xf32> to vector<4x18xf32>
    %cst_74 = arith.constant 0.00938946381 : f32
    %260 = vector.broadcast %cst_74 : f32 to vector<4x18xf32>
    %261 = arith.mulf %260, %259 : vector<4x18xf32>
    %262 = arith.addf %258, %261 : vector<4x18xf32>
    %263 = tpu.iota {dimensions = array<i32: 1>} : vector<4x18xi32>
    %264 = vector.broadcast %152 : i32 to vector<4x18xi32>
    %265 = arith.addi %263, %264 : vector<4x18xi32>
    %c16_i32_75 = arith.constant 16 : i32
    %266 = vector.broadcast %c16_i32_75 : i32 to vector<4x18xi32>
    %267 = arith.cmpi slt, %265, %266 : vector<4x18xi32>
    %cst_76 = arith.constant 0.000000e+00 : f32
    %268 = vector.broadcast %cst_76 : f32 to vector<4x18xf32>
    %269 = arith.select %267, %262, %268 : vector<4x18xi1>, vector<4x18xf32>
    %c0_77 = arith.constant 0 : index
    %c0_78 = arith.constant 0 : index
    %270 = vector.load %arg7[%c0_77, %c0_78] : memref<4x12xbf16, #tpu.memory_space<vmem>>, vector<4x12xbf16>
    %c0_79 = arith.constant 0 : index
    %c0_80 = arith.constant 0 : index
    %271 = vector.load %arg8[%c0_79, %c0_80] : memref<4x1xf32, #tpu.memory_space<vmem>>, vector<4x1xf32>
    %272 = vector.extract_strided_slice %270 {offsets = [0, 0], sizes = [4, 4], strides = [1, 1]} : vector<4x12xbf16> to vector<4x4xbf16>
    %273 = vector.extract_strided_slice %269 {offsets = [0, 0], sizes = [4, 16], strides = [1, 1]} : vector<4x18xf32> to vector<4x16xf32>
    %274 = arith.truncf %273 : vector<4x16xf32> to vector<4x16xbf16>
    %cst_81 = arith.constant dense<0.000000e+00> : vector<4x16xf32>
    %275 = tpu.matmul %272, %274, %cst_81 {dimension_numbers = #tpu.dot_dimension_numbers<[1], [0], [0], [1], [0, 0, 1, 1], [], []>} : vector<4x4xbf16>, vector<4x16xbf16>, vector<4x16xf32> -> vector<4x16xf32>
    %276 = vector.extract_strided_slice %270 {offsets = [0, 4], sizes = [4, 4], strides = [1, 1]} : vector<4x12xbf16> to vector<4x4xbf16>
    %277 = vector.extract_strided_slice %269 {offsets = [0, 1], sizes = [4, 16], strides = [1, 1]} : vector<4x18xf32> to vector<4x16xf32>
    %278 = arith.truncf %277 : vector<4x16xf32> to vector<4x16xbf16>
    %cst_82 = arith.constant dense<0.000000e+00> : vector<4x16xf32>
    %279 = tpu.matmul %276, %278, %cst_82 {dimension_numbers = #tpu.dot_dimension_numbers<[1], [0], [0], [1], [0, 0, 1, 1], [], []>} : vector<4x4xbf16>, vector<4x16xbf16>, vector<4x16xf32> -> vector<4x16xf32>
    %280 = arith.addf %275, %279 : vector<4x16xf32>
    %281 = vector.extract_strided_slice %270 {offsets = [0, 8], sizes = [4, 4], strides = [1, 1]} : vector<4x12xbf16> to vector<4x4xbf16>
    %282 = vector.extract_strided_slice %269 {offsets = [0, 2], sizes = [4, 16], strides = [1, 1]} : vector<4x18xf32> to vector<4x16xf32>
    %283 = arith.truncf %282 : vector<4x16xf32> to vector<4x16xbf16>
    %cst_83 = arith.constant dense<0.000000e+00> : vector<4x16xf32>
    %284 = tpu.matmul %281, %283, %cst_83 {dimension_numbers = #tpu.dot_dimension_numbers<[1], [0], [0], [1], [0, 0, 1, 1], [], []>} : vector<4x4xbf16>, vector<4x16xbf16>, vector<4x16xf32> -> vector<4x16xf32>
    %285 = arith.addf %280, %284 : vector<4x16xf32>
    %286 = vector.broadcast %271 : vector<4x1xf32> to vector<4x16xf32>
    %287 = arith.addf %285, %286 : vector<4x16xf32>
    %288 = vector.extract_strided_slice %2 {offsets = [0, 22], sizes = [4, 16], strides = [1, 1]} : vector<4x40xf32> to vector<4x16xf32>
    %289 = arith.addf %287, %288 : vector<4x16xf32>
    %c0_84 = arith.constant 0 : index
    %c0_85 = arith.constant 0 : index
    %c0_86 = arith.constant 0 : index
    %290 = vector.load %arg11[%c0_84, %c0_85, %c0_86] : memref<1x4x16xf32, #tpu.memory_space<vmem>>, vector<1x4x16xf32>
    %291 = vector.shape_cast %290 : vector<1x4x16xf32> to vector<4x16xf32>
    %292 = vector.shape_cast %289 : vector<4x16xf32> to vector<1x4x16xf32>
    tpu.vector_store %arg11[%c0_84, %c0_85, %c0_86], %292 {strides = array<i32>} : memref<1x4x16xf32, #tpu.memory_space<vmem>>, vector<1x4x16xf32>,
    return
  }
  func.func @transform_0(%arg0: i32, %arg1: i32) -> (i32, i32, i32, i32) {
    %c0_i32 = arith.constant 0 : i32
    %c0_i32_0 = arith.constant 0 : i32
    %c0_i32_1 = arith.constant 0 : i32
    return %arg0, %arg1, %c0_i32, %c0_i32_0 : i32, i32, i32, i32
  }
  func.func @transform_1(%arg0: i32, %arg1: i32) -> (i32, i32) {
    %c0_i32 = arith.constant 0 : i32
    %c0_i32_0 = arith.constant 0 : i32
    %c0_i32_1 = arith.constant 0 : i32
    return %c0_i32, %c0_i32_0 : i32, i32
  }
  func.func @transform_2(%arg0: i32, %arg1: i32) -> (i32, i32) {
    %c0_i32 = arith.constant 0 : i32
    %c0_i32_0 = arith.constant 0 : i32
    %c0_i32_1 = arith.constant 0 : i32
    return %c0_i32, %c0_i32_0 : i32, i32
  }
  func.func @transform_3(%arg0: i32, %arg1: i32) -> (i32, i32) {
    %c0_i32 = arith.constant 0 : i32
    %c0_i32_0 = arith.constant 0 : i32
    %c0_i32_1 = arith.constant 0 : i32
    return %c0_i32, %c0_i32_0 : i32, i32
  }
  func.func @transform_4(%arg0: i32, %arg1: i32) -> (i32, i32) {
    %c0_i32 = arith.constant 0 : i32
    %c0_i32_0 = arith.constant 0 : i32
    %c0_i32_1 = arith.constant 0 : i32
    return %c0_i32, %c0_i32_0 : i32, i32
  }
  func.func @transform_5(%arg0: i32, %arg1: i32) -> (i32, i32) {
    %c0_i32 = arith.constant 0 : i32
    %c0_i32_0 = arith.constant 0 : i32
    %c0_i32_1 = arith.constant 0 : i32
    return %c0_i32, %c0_i32_0 : i32, i32
  }
  func.func @transform_6(%arg0: i32, %arg1: i32) -> (i32, i32) {
    %c0_i32 = arith.constant 0 : i32
    %c0_i32_0 = arith.constant 0 : i32
    %c0_i32_1 = arith.constant 0 : i32
    return %c0_i32, %c0_i32_0 : i32, i32
  }
  func.func @transform_7(%arg0: i32, %arg1: i32) -> (i32, i32) {
    %c0_i32 = arith.constant 0 : i32
    %c0_i32_0 = arith.constant 0 : i32
    %c0_i32_1 = arith.constant 0 : i32
    return %c0_i32, %c0_i32_0 : i32, i32
  }
  func.func @transform_8(%arg0: i32, %arg1: i32) -> (i32, i32) {
    %c0_i32 = arith.constant 0 : i32
    %c0_i32_0 = arith.constant 0 : i32
    %c0_i32_1 = arith.constant 0 : i32
    return %c0_i32, %c0_i32_0 : i32, i32
  }
  func.func @transform_9(%arg0: i32, %arg1: i32) -> (i32, i32, i32) {
    %c0_i32 = arith.constant 0 : i32
    %c0_i32_0 = arith.constant 0 : i32
    return %arg0, %c0_i32, %arg1 : i32, i32, i32
  }
}

module attributes {stable_mosaic.version = 11 : i64} {
  func.func @kernel(%arg0: i32, %arg1: i32, %arg2: memref<1x1x4x48xf32, #tpu.memory_space<vmem>>, %arg3: memref<4x12xbf16, #tpu.memory_space<vmem>>, %arg4: memref<4x1xf32, #tpu.memory_space<vmem>>, %arg5: memref<4x1xf32, #tpu.memory_space<vmem>>, %arg6: memref<4x1xf32, #tpu.memory_space<vmem>>, %arg7: memref<4x12xbf16, #tpu.memory_space<vmem>>, %arg8: memref<4x1xf32, #tpu.memory_space<vmem>>, %arg9: memref<4x1xf32, #tpu.memory_space<vmem>>, %arg10: memref<4x1xf32, #tpu.memory_space<vmem>>, %arg11: memref<1x4x16xf32, #tpu.memory_space<vmem>>) attributes {dimension_semantics = [#tpu.dimension_semantics<parallel>, #tpu.dimension_semantics<parallel>], iteration_bounds = array<i64: 2, 1>, scalar_prefetch = 0 : i64, scratch_operands = 0 : i64, tpu.core_type = #tpu.core_type<tc>, window_params = [{transform_indices = @transform_0, window_bounds = array<i64: 1, 1, 4, 48>}, {pipeline_mode = #tpu.pipeline_mode<synchronous>, transform_indices = @transform_1, window_bounds = array<i64: 4, 12>}, {pipeline_mode = #tpu.pipeline_mode<synchronous>, transform_indices = @transform_2, window_bounds = array<i64: 4, 1>}, {pipeline_mode = #tpu.pipeline_mode<synchronous>, transform_indices = @transform_3, window_bounds = array<i64: 4, 1>}, {pipeline_mode = #tpu.pipeline_mode<synchronous>, transform_indices = @transform_4, window_bounds = array<i64: 4, 1>}, {pipeline_mode = #tpu.pipeline_mode<synchronous>, transform_indices = @transform_5, window_bounds = array<i64: 4, 12>}, {pipeline_mode = #tpu.pipeline_mode<synchronous>, transform_indices = @transform_6, window_bounds = array<i64: 4, 1>}, {pipeline_mode = #tpu.pipeline_mode<synchronous>, transform_indices = @transform_7, window_bounds = array<i64: 4, 1>}, {pipeline_mode = #tpu.pipeline_mode<synchronous>, transform_indices = @transform_8, window_bounds = array<i64: 4, 1>}, {transform_indices = @transform_9, window_bounds = array<i64: 1, 4, 16>}]} {
    %c16_i32 = arith.constant 16 : i32
    %0 = arith.muli %arg1, %c16_i32 : i32
    %c0 = arith.constant 0 : index
    %c0_0 = arith.constant 0 : index
    %c0_1 = arith.constant 0 : index
    %c0_2 = arith.constant 0 : index
    %1 = vector.load %arg2[%c0, %c0_0, %c0_1, %c0_2] : memref<1x1x4x48xf32, #tpu.memory_space<vmem>>, vector<1x1x4x48xf32>
    %2 = vector.shape_cast %1 : vector<1x1x4x48xf32> to vector<4x48xf32>
    %c0_3 = arith.constant 0 : index
    %c0_4 = arith.constant 0 : index
    %3 = vector.load %arg5[%c0_3, %c0_4] : memref<4x1xf32, #tpu.memory_space<vmem>>, vector<4x1xf32>
    %c0_5 = arith.constant 0 : index
    %c0_6 = arith.constant 0 : index
    %4 = vector.load %arg6[%c0_5, %c0_6] : memref<4x1xf32, #tpu.memory_space<vmem>>, vector<4x1xf32>
    %c11_i32 = arith.constant 11 : i32
    %5 = arith.subi %0, %c11_i32 : i32
    %c5_i32 = arith.constant 5 : i32
    %6 = arith.subi %5, %c5_i32 : i32
    %7 = vector.extract_strided_slice %2 {offsets = [0, 5], sizes = [4, 43], strides = [1, 1]} : vector<4x48xf32> to vector<4x43xf32>
    %cst = arith.constant 0.0187789276 : f32
    %8 = vector.broadcast %cst : f32 to vector<4x43xf32>
    %9 = arith.mulf %8, %7 : vector<4x43xf32>
    %10 = vector.extract_strided_slice %2 {offsets = [0, 5], sizes = [4, 43], strides = [1, 1]} : vector<4x48xf32> to vector<4x43xf32>
    %cst_7 = arith.constant 0.00405793311 : f32
    %11 = vector.broadcast %cst_7 : f32 to vector<4x43xf32>
    %12 = arith.mulf %11, %10 : vector<4x43xf32>
    %13 = vector.extract_strided_slice %2 {offsets = [0, 4], sizes = [4, 43], strides = [1, 1]} : vector<4x48xf32> to vector<4x43xf32>
    %cst_8 = arith.constant -0.115314752 : f32
    %14 = vector.broadcast %cst_8 : f32 to vector<4x43xf32>
    %15 = arith.mulf %14, %13 : vector<4x43xf32>
    %16 = arith.addf %9, %15 : vector<4x43xf32>
    %cst_9 = arith.constant -0.0510869287 : f32
    %17 = vector.broadcast %cst_9 : f32 to vector<4x43xf32>
    %18 = arith.mulf %17, %13 : vector<4x43xf32>
    %19 = arith.addf %12, %18 : vector<4x43xf32>
    %20 = vector.extract_strided_slice %2 {offsets = [0, 3], sizes = [4, 43], strides = [1, 1]} : vector<4x48xf32> to vector<4x43xf32>
    %cst_10 = arith.constant 0.886419594 : f32
    %21 = vector.broadcast %cst_10 : f32 to vector<4x43xf32>
    %22 = arith.mulf %21, %20 : vector<4x43xf32>
    %23 = arith.addf %16, %22 : vector<4x43xf32>
    %cst_11 = arith.constant 0.257145226 : f32
    %24 = vector.broadcast %cst_11 : f32 to vector<4x43xf32>
    %25 = arith.mulf %24, %20 : vector<4x43xf32>
    %26 = arith.addf %19, %25 : vector<4x43xf32>
    %27 = vector.extract_strided_slice %2 {offsets = [0, 2], sizes = [4, 43], strides = [1, 1]} : vector<4x48xf32> to vector<4x43xf32>
    %cst_12 = arith.constant 0.257145226 : f32
    %28 = vector.broadcast %cst_12 : f32 to vector<4x43xf32>
    %29 = arith.mulf %28, %27 : vector<4x43xf32>
    %30 = arith.addf %23, %29 : vector<4x43xf32>
    %cst_13 = arith.constant 0.886419594 : f32
    %31 = vector.broadcast %cst_13 : f32 to vector<4x43xf32>
    %32 = arith.mulf %31, %27 : vector<4x43xf32>
    %33 = arith.addf %26, %32 : vector<4x43xf32>
    %34 = vector.extract_strided_slice %2 {offsets = [0, 1], sizes = [4, 43], strides = [1, 1]} : vector<4x48xf32> to vector<4x43xf32>
    %cst_14 = arith.constant -0.0510869287 : f32
    %35 = vector.broadcast %cst_14 : f32 to vector<4x43xf32>
    %36 = arith.mulf %35, %34 : vector<4x43xf32>
    %37 = arith.addf %30, %36 : vector<4x43xf32>
    %cst_15 = arith.constant -0.115314752 : f32
    %38 = vector.broadcast %cst_15 : f32 to vector<4x43xf32>
    %39 = arith.mulf %38, %34 : vector<4x43xf32>
    %40 = arith.addf %33, %39 : vector<4x43xf32>
    %41 = vector.extract_strided_slice %2 {offsets = [0, 0], sizes = [4, 43], strides = [1, 1]} : vector<4x48xf32> to vector<4x43xf32>
    %cst_16 = arith.constant 0.00405793311 : f32
    %42 = vector.broadcast %cst_16 : f32 to vector<4x43xf32>
    %43 = arith.mulf %42, %41 : vector<4x43xf32>
    %44 = arith.addf %37, %43 : vector<4x43xf32>
    %cst_17 = arith.constant 0.0187789276 : f32
    %45 = vector.broadcast %cst_17 : f32 to vector<4x43xf32>
    %46 = arith.mulf %45, %41 : vector<4x43xf32>
    %47 = arith.addf %40, %46 : vector<4x43xf32>
    %48 = vector.broadcast %3 : vector<4x1xf32> to vector<4x43xf32>
    %49 = arith.mulf %44, %48 : vector<4x43xf32>
    %50 = math.sin %49 : vector<4x43xf32>
    %51 = arith.mulf %50, %50 : vector<4x43xf32>
    %52 = vector.broadcast %4 : vector<4x1xf32> to vector<4x43xf32>
    %53 = arith.mulf %52, %51 : vector<4x43xf32>
    %54 = arith.addf %44, %53 : vector<4x43xf32>
    %55 = vector.broadcast %3 : vector<4x1xf32> to vector<4x43xf32>
    %56 = arith.mulf %47, %55 : vector<4x43xf32>
    %57 = math.sin %56 : vector<4x43xf32>
    %58 = arith.mulf %57, %57 : vector<4x43xf32>
    %59 = vector.broadcast %4 : vector<4x1xf32> to vector<4x43xf32>
    %60 = arith.mulf %59, %58 : vector<4x43xf32>
    %61 = arith.addf %47, %60 : vector<4x43xf32>
    %c6_i32 = arith.constant 6 : i32
    %62 = arith.subi %6, %c6_i32 : i32
    %63 = tpu.iota {dimensions = array<i32: 1>} : vector<4x43xi32>
    %64 = vector.broadcast %62 : i32 to vector<4x43xi32>
    %65 = arith.addi %63, %64 : vector<4x43xi32>
    %c0_i32 = arith.constant 0 : i32
    %66 = vector.broadcast %c0_i32 : i32 to vector<4x43xi32>
    %67 = arith.cmpi sge, %65, %66 : vector<4x43xi32>
    %cst_18 = arith.constant 0.000000e+00 : f32
    %68 = vector.broadcast %cst_18 : f32 to vector<4x43xf32>
    %69 = arith.select %67, %61, %68 : vector<4x43xi1>, vector<4x43xf32>
    %70 = vector.extract_strided_slice %54 {offsets = [0, 0], sizes = [4, 38], strides = [1, 1]} : vector<4x43xf32> to vector<4x38xf32>
    %cst_19 = arith.constant 0.00938946381 : f32
    %71 = vector.broadcast %cst_19 : f32 to vector<4x38xf32>
    %72 = arith.mulf %71, %70 : vector<4x38xf32>
    %73 = vector.extract_strided_slice %69 {offsets = [0, 0], sizes = [4, 38], strides = [1, 1]} : vector<4x43xf32> to vector<4x38xf32>
    %cst_20 = arith.constant 0.00202896656 : f32
    %74 = vector.broadcast %cst_20 : f32 to vector<4x38xf32>
    %75 = arith.mulf %74, %73 : vector<4x38xf32>
    %76 = arith.addf %72, %75 : vector<4x38xf32>
    %77 = vector.extract_strided_slice %54 {offsets = [0, 1], sizes = [4, 38], strides = [1, 1]} : vector<4x43xf32> to vector<4x38xf32>
    %cst_21 = arith.constant -0.0576573759 : f32
    %78 = vector.broadcast %cst_21 : f32 to vector<4x38xf32>
    %79 = arith.mulf %78, %77 : vector<4x38xf32>
    %80 = arith.addf %76, %79 : vector<4x38xf32>
    %81 = vector.extract_strided_slice %69 {offsets = [0, 1], sizes = [4, 38], strides = [1, 1]} : vector<4x43xf32> to vector<4x38xf32>
    %cst_22 = arith.constant -0.0255434643 : f32
    %82 = vector.broadcast %cst_22 : f32 to vector<4x38xf32>
    %83 = arith.mulf %82, %81 : vector<4x38xf32>
    %84 = arith.addf %80, %83 : vector<4x38xf32>
    %85 = vector.extract_strided_slice %54 {offsets = [0, 2], sizes = [4, 38], strides = [1, 1]} : vector<4x43xf32> to vector<4x38xf32>
    %cst_23 = arith.constant 0.443209797 : f32
    %86 = vector.broadcast %cst_23 : f32 to vector<4x38xf32>
    %87 = arith.mulf %86, %85 : vector<4x38xf32>
    %88 = arith.addf %84, %87 : vector<4x38xf32>
    %89 = vector.extract_strided_slice %69 {offsets = [0, 2], sizes = [4, 38], strides = [1, 1]} : vector<4x43xf32> to vector<4x38xf32>
    %cst_24 = arith.constant 0.128572613 : f32
    %90 = vector.broadcast %cst_24 : f32 to vector<4x38xf32>
    %91 = arith.mulf %90, %89 : vector<4x38xf32>
    %92 = arith.addf %88, %91 : vector<4x38xf32>
    %93 = vector.extract_strided_slice %54 {offsets = [0, 3], sizes = [4, 38], strides = [1, 1]} : vector<4x43xf32> to vector<4x38xf32>
    %cst_25 = arith.constant 0.128572613 : f32
    %94 = vector.broadcast %cst_25 : f32 to vector<4x38xf32>
    %95 = arith.mulf %94, %93 : vector<4x38xf32>
    %96 = arith.addf %92, %95 : vector<4x38xf32>
    %97 = vector.extract_strided_slice %69 {offsets = [0, 3], sizes = [4, 38], strides = [1, 1]} : vector<4x43xf32> to vector<4x38xf32>
    %cst_26 = arith.constant 0.443209797 : f32
    %98 = vector.broadcast %cst_26 : f32 to vector<4x38xf32>
    %99 = arith.mulf %98, %97 : vector<4x38xf32>
    %100 = arith.addf %96, %99 : vector<4x38xf32>
    %101 = vector.extract_strided_slice %54 {offsets = [0, 4], sizes = [4, 38], strides = [1, 1]} : vector<4x43xf32> to vector<4x38xf32>
    %cst_27 = arith.constant -0.0255434643 : f32
    %102 = vector.broadcast %cst_27 : f32 to vector<4x38xf32>
    %103 = arith.mulf %102, %101 : vector<4x38xf32>
    %104 = arith.addf %100, %103 : vector<4x38xf32>
    %105 = vector.extract_strided_slice %69 {offsets = [0, 4], sizes = [4, 38], strides = [1, 1]} : vector<4x43xf32> to vector<4x38xf32>
    %cst_28 = arith.constant -0.0576573759 : f32
    %106 = vector.broadcast %cst_28 : f32 to vector<4x38xf32>
    %107 = arith.mulf %106, %105 : vector<4x38xf32>
    %108 = arith.addf %104, %107 : vector<4x38xf32>
    %109 = vector.extract_strided_slice %54 {offsets = [0, 5], sizes = [4, 38], strides = [1, 1]} : vector<4x43xf32> to vector<4x38xf32>
    %cst_29 = arith.constant 0.00202896656 : f32
    %110 = vector.broadcast %cst_29 : f32 to vector<4x38xf32>
    %111 = arith.mulf %110, %109 : vector<4x38xf32>
    %112 = arith.addf %108, %111 : vector<4x38xf32>
    %113 = vector.extract_strided_slice %69 {offsets = [0, 5], sizes = [4, 38], strides = [1, 1]} : vector<4x43xf32> to vector<4x38xf32>
    %cst_30 = arith.constant 0.00938946381 : f32
    %114 = vector.broadcast %cst_30 : f32 to vector<4x38xf32>
    %115 = arith.mulf %114, %113 : vector<4x38xf32>
    %116 = arith.addf %112, %115 : vector<4x38xf32>
    %117 = tpu.iota {dimensions = array<i32: 1>} : vector<4x38xi32>
    %118 = vector.broadcast %6 : i32 to vector<4x38xi32>
    %119 = arith.addi %117, %118 : vector<4x38xi32>
    %c16_i32_31 = arith.constant 16 : i32
    %120 = vector.broadcast %c16_i32_31 : i32 to vector<4x38xi32>
    %121 = arith.cmpi slt, %119, %120 : vector<4x38xi32>
    %cst_32 = arith.constant 0.000000e+00 : f32
    %122 = vector.broadcast %cst_32 : f32 to vector<4x38xf32>
    %123 = arith.select %121, %116, %122 : vector<4x38xi1>, vector<4x38xf32>
    %c0_33 = arith.constant 0 : index
    %c0_34 = arith.constant 0 : index
    %124 = vector.load %arg3[%c0_33, %c0_34] : memref<4x12xbf16, #tpu.memory_space<vmem>>, vector<4x12xbf16>
    %c0_35 = arith.constant 0 : index
    %c0_36 = arith.constant 0 : index
    %125 = vector.load %arg4[%c0_35, %c0_36] : memref<4x1xf32, #tpu.memory_space<vmem>>, vector<4x1xf32>
    %126 = vector.extract_strided_slice %124 {offsets = [0, 0], sizes = [4, 4], strides = [1, 1]} : vector<4x12xbf16> to vector<4x4xbf16>
    %127 = vector.extract_strided_slice %123 {offsets = [0, 0], sizes = [4, 28], strides = [1, 1]} : vector<4x38xf32> to vector<4x28xf32>
    %128 = arith.truncf %127 : vector<4x28xf32> to vector<4x28xbf16>
    %cst_37 = arith.constant dense<0.000000e+00> : vector<4x28xf32>
    %129 = tpu.matmul %126, %128, %cst_37 {dimension_numbers = #tpu.dot_dimension_numbers<[1], [0], [0], [1], [0, 0, 1, 1], [], []>} : vector<4x4xbf16>, vector<4x28xbf16>, vector<4x28xf32> -> vector<4x28xf32>
    %130 = vector.extract_strided_slice %124 {offsets = [0, 4], sizes = [4, 4], strides = [1, 1]} : vector<4x12xbf16> to vector<4x4xbf16>
    %131 = vector.extract_strided_slice %123 {offsets = [0, 5], sizes = [4, 28], strides = [1, 1]} : vector<4x38xf32> to vector<4x28xf32>
    %132 = arith.truncf %131 : vector<4x28xf32> to vector<4x28xbf16>
    %cst_38 = arith.constant dense<0.000000e+00> : vector<4x28xf32>
    %133 = tpu.matmul %130, %132, %cst_38 {dimension_numbers = #tpu.dot_dimension_numbers<[1], [0], [0], [1], [0, 0, 1, 1], [], []>} : vector<4x4xbf16>, vector<4x28xbf16>, vector<4x28xf32> -> vector<4x28xf32>
    %134 = arith.addf %129, %133 : vector<4x28xf32>
    %135 = vector.extract_strided_slice %124 {offsets = [0, 8], sizes = [4, 4], strides = [1, 1]} : vector<4x12xbf16> to vector<4x4xbf16>
    %136 = vector.extract_strided_slice %123 {offsets = [0, 10], sizes = [4, 28], strides = [1, 1]} : vector<4x38xf32> to vector<4x28xf32>
    %137 = arith.truncf %136 : vector<4x28xf32> to vector<4x28xbf16>
    %cst_39 = arith.constant dense<0.000000e+00> : vector<4x28xf32>
    %138 = tpu.matmul %135, %137, %cst_39 {dimension_numbers = #tpu.dot_dimension_numbers<[1], [0], [0], [1], [0, 0, 1, 1], [], []>} : vector<4x4xbf16>, vector<4x28xbf16>, vector<4x28xf32> -> vector<4x28xf32>
    %139 = arith.addf %134, %138 : vector<4x28xf32>
    %140 = vector.broadcast %125 : vector<4x1xf32> to vector<4x28xf32>
    %141 = arith.addf %139, %140 : vector<4x28xf32>
    %c11_i32_40 = arith.constant 11 : i32
    %142 = arith.subi %0, %c11_i32_40 : i32
    %143 = tpu.iota {dimensions = array<i32: 1>} : vector<4x28xi32>
    %144 = vector.broadcast %142 : i32 to vector<4x28xi32>
    %145 = arith.addi %143, %144 : vector<4x28xi32>
    %c0_i32_41 = arith.constant 0 : i32
    %146 = vector.broadcast %c0_i32_41 : i32 to vector<4x28xi32>
    %147 = arith.cmpi sge, %145, %146 : vector<4x28xi32>
    %cst_42 = arith.constant 0.000000e+00 : f32
    %148 = vector.broadcast %cst_42 : f32 to vector<4x28xf32>
    %149 = arith.select %147, %141, %148 : vector<4x28xi1>, vector<4x28xf32>
    %c0_43 = arith.constant 0 : index
    %c0_44 = arith.constant 0 : index
    %150 = vector.load %arg9[%c0_43, %c0_44] : memref<4x1xf32, #tpu.memory_space<vmem>>, vector<4x1xf32>
    %c0_45 = arith.constant 0 : index
    %c0_46 = arith.constant 0 : index
    %151 = vector.load %arg10[%c0_45, %c0_46] : memref<4x1xf32, #tpu.memory_space<vmem>>, vector<4x1xf32>
    %c1_i32 = arith.constant 1 : i32
    %152 = arith.subi %0, %c1_i32 : i32
    %153 = vector.extract_strided_slice %149 {offsets = [0, 5], sizes = [4, 23], strides = [1, 1]} : vector<4x28xf32> to vector<4x23xf32>
    %cst_47 = arith.constant 0.0187789276 : f32
    %154 = vector.broadcast %cst_47 : f32 to vector<4x23xf32>
    %155 = arith.mulf %154, %153 : vector<4x23xf32>
    %156 = vector.extract_strided_slice %149 {offsets = [0, 5], sizes = [4, 23], strides = [1, 1]} : vector<4x28xf32> to vector<4x23xf32>
    %cst_48 = arith.constant 0.00405793311 : f32
    %157 = vector.broadcast %cst_48 : f32 to vector<4x23xf32>
    %158 = arith.mulf %157, %156 : vector<4x23xf32>
    %159 = vector.extract_strided_slice %149 {offsets = [0, 4], sizes = [4, 23], strides = [1, 1]} : vector<4x28xf32> to vector<4x23xf32>
    %cst_49 = arith.constant -0.115314752 : f32
    %160 = vector.broadcast %cst_49 : f32 to vector<4x23xf32>
    %161 = arith.mulf %160, %159 : vector<4x23xf32>
    %162 = arith.addf %155, %161 : vector<4x23xf32>
    %cst_50 = arith.constant -0.0510869287 : f32
    %163 = vector.broadcast %cst_50 : f32 to vector<4x23xf32>
    %164 = arith.mulf %163, %159 : vector<4x23xf32>
    %165 = arith.addf %158, %164 : vector<4x23xf32>
    %166 = vector.extract_strided_slice %149 {offsets = [0, 3], sizes = [4, 23], strides = [1, 1]} : vector<4x28xf32> to vector<4x23xf32>
    %cst_51 = arith.constant 0.886419594 : f32
    %167 = vector.broadcast %cst_51 : f32 to vector<4x23xf32>
    %168 = arith.mulf %167, %166 : vector<4x23xf32>
    %169 = arith.addf %162, %168 : vector<4x23xf32>
    %cst_52 = arith.constant 0.257145226 : f32
    %170 = vector.broadcast %cst_52 : f32 to vector<4x23xf32>
    %171 = arith.mulf %170, %166 : vector<4x23xf32>
    %172 = arith.addf %165, %171 : vector<4x23xf32>
    %173 = vector.extract_strided_slice %149 {offsets = [0, 2], sizes = [4, 23], strides = [1, 1]} : vector<4x28xf32> to vector<4x23xf32>
    %cst_53 = arith.constant 0.257145226 : f32
    %174 = vector.broadcast %cst_53 : f32 to vector<4x23xf32>
    %175 = arith.mulf %174, %173 : vector<4x23xf32>
    %176 = arith.addf %169, %175 : vector<4x23xf32>
    %cst_54 = arith.constant 0.886419594 : f32
    %177 = vector.broadcast %cst_54 : f32 to vector<4x23xf32>
    %178 = arith.mulf %177, %173 : vector<4x23xf32>
    %179 = arith.addf %172, %178 : vector<4x23xf32>
    %180 = vector.extract_strided_slice %149 {offsets = [0, 1], sizes = [4, 23], strides = [1, 1]} : vector<4x28xf32> to vector<4x23xf32>
    %cst_55 = arith.constant -0.0510869287 : f32
    %181 = vector.broadcast %cst_55 : f32 to vector<4x23xf32>
    %182 = arith.mulf %181, %180 : vector<4x23xf32>
    %183 = arith.addf %176, %182 : vector<4x23xf32>
    %cst_56 = arith.constant -0.115314752 : f32
    %184 = vector.broadcast %cst_56 : f32 to vector<4x23xf32>
    %185 = arith.mulf %184, %180 : vector<4x23xf32>
    %186 = arith.addf %179, %185 : vector<4x23xf32>
    %187 = vector.extract_strided_slice %149 {offsets = [0, 0], sizes = [4, 23], strides = [1, 1]} : vector<4x28xf32> to vector<4x23xf32>
    %cst_57 = arith.constant 0.00405793311 : f32
    %188 = vector.broadcast %cst_57 : f32 to vector<4x23xf32>
    %189 = arith.mulf %188, %187 : vector<4x23xf32>
    %190 = arith.addf %183, %189 : vector<4x23xf32>
    %cst_58 = arith.constant 0.0187789276 : f32
    %191 = vector.broadcast %cst_58 : f32 to vector<4x23xf32>
    %192 = arith.mulf %191, %187 : vector<4x23xf32>
    %193 = arith.addf %186, %192 : vector<4x23xf32>
    %194 = vector.broadcast %150 : vector<4x1xf32> to vector<4x23xf32>
    %195 = arith.mulf %190, %194 : vector<4x23xf32>
    %196 = math.sin %195 : vector<4x23xf32>
    %197 = arith.mulf %196, %196 : vector<4x23xf32>
    %198 = vector.broadcast %151 : vector<4x1xf32> to vector<4x23xf32>
    %199 = arith.mulf %198, %197 : vector<4x23xf32>
    %200 = arith.addf %190, %199 : vector<4x23xf32>
    %201 = vector.broadcast %150 : vector<4x1xf32> to vector<4x23xf32>
    %202 = arith.mulf %193, %201 : vector<4x23xf32>
    %203 = math.sin %202 : vector<4x23xf32>
    %204 = arith.mulf %203, %203 : vector<4x23xf32>
    %205 = vector.broadcast %151 : vector<4x1xf32> to vector<4x23xf32>
    %206 = arith.mulf %205, %204 : vector<4x23xf32>
    %207 = arith.addf %193, %206 : vector<4x23xf32>
    %c6_i32_59 = arith.constant 6 : i32
    %208 = arith.subi %152, %c6_i32_59 : i32
    %209 = tpu.iota {dimensions = array<i32: 1>} : vector<4x23xi32>
    %210 = vector.broadcast %208 : i32 to vector<4x23xi32>
    %211 = arith.addi %209, %210 : vector<4x23xi32>
    %c0_i32_60 = arith.constant 0 : i32
    %212 = vector.broadcast %c0_i32_60 : i32 to vector<4x23xi32>
    %213 = arith.cmpi sge, %211, %212 : vector<4x23xi32>
    %cst_61 = arith.constant 0.000000e+00 : f32
    %214 = vector.broadcast %cst_61 : f32 to vector<4x23xf32>
    %215 = arith.select %213, %207, %214 : vector<4x23xi1>, vector<4x23xf32>
    %216 = vector.extract_strided_slice %200 {offsets = [0, 0], sizes = [4, 18], strides = [1, 1]} : vector<4x23xf32> to vector<4x18xf32>
    %cst_62 = arith.constant 0.00938946381 : f32
    %217 = vector.broadcast %cst_62 : f32 to vector<4x18xf32>
    %218 = arith.mulf %217, %216 : vector<4x18xf32>
    %219 = vector.extract_strided_slice %215 {offsets = [0, 0], sizes = [4, 18], strides = [1, 1]} : vector<4x23xf32> to vector<4x18xf32>
    %cst_63 = arith.constant 0.00202896656 : f32
    %220 = vector.broadcast %cst_63 : f32 to vector<4x18xf32>
    %221 = arith.mulf %220, %219 : vector<4x18xf32>
    %222 = arith.addf %218, %221 : vector<4x18xf32>
    %223 = vector.extract_strided_slice %200 {offsets = [0, 1], sizes = [4, 18], strides = [1, 1]} : vector<4x23xf32> to vector<4x18xf32>
    %cst_64 = arith.constant -0.0576573759 : f32
    %224 = vector.broadcast %cst_64 : f32 to vector<4x18xf32>
    %225 = arith.mulf %224, %223 : vector<4x18xf32>
    %226 = arith.addf %222, %225 : vector<4x18xf32>
    %227 = vector.extract_strided_slice %215 {offsets = [0, 1], sizes = [4, 18], strides = [1, 1]} : vector<4x23xf32> to vector<4x18xf32>
    %cst_65 = arith.constant -0.0255434643 : f32
    %228 = vector.broadcast %cst_65 : f32 to vector<4x18xf32>
    %229 = arith.mulf %228, %227 : vector<4x18xf32>
    %230 = arith.addf %226, %229 : vector<4x18xf32>
    %231 = vector.extract_strided_slice %200 {offsets = [0, 2], sizes = [4, 18], strides = [1, 1]} : vector<4x23xf32> to vector<4x18xf32>
    %cst_66 = arith.constant 0.443209797 : f32
    %232 = vector.broadcast %cst_66 : f32 to vector<4x18xf32>
    %233 = arith.mulf %232, %231 : vector<4x18xf32>
    %234 = arith.addf %230, %233 : vector<4x18xf32>
    %235 = vector.extract_strided_slice %215 {offsets = [0, 2], sizes = [4, 18], strides = [1, 1]} : vector<4x23xf32> to vector<4x18xf32>
    %cst_67 = arith.constant 0.128572613 : f32
    %236 = vector.broadcast %cst_67 : f32 to vector<4x18xf32>
    %237 = arith.mulf %236, %235 : vector<4x18xf32>
    %238 = arith.addf %234, %237 : vector<4x18xf32>
    %239 = vector.extract_strided_slice %200 {offsets = [0, 3], sizes = [4, 18], strides = [1, 1]} : vector<4x23xf32> to vector<4x18xf32>
    %cst_68 = arith.constant 0.128572613 : f32
    %240 = vector.broadcast %cst_68 : f32 to vector<4x18xf32>
    %241 = arith.mulf %240, %239 : vector<4x18xf32>
    %242 = arith.addf %238, %241 : vector<4x18xf32>
    %243 = vector.extract_strided_slice %215 {offsets = [0, 3], sizes = [4, 18], strides = [1, 1]} : vector<4x23xf32> to vector<4x18xf32>
    %cst_69 = arith.constant 0.443209797 : f32
    %244 = vector.broadcast %cst_69 : f32 to vector<4x18xf32>
    %245 = arith.mulf %244, %243 : vector<4x18xf32>
    %246 = arith.addf %242, %245 : vector<4x18xf32>
    %247 = vector.extract_strided_slice %200 {offsets = [0, 4], sizes = [4, 18], strides = [1, 1]} : vector<4x23xf32> to vector<4x18xf32>
    %cst_70 = arith.constant -0.0255434643 : f32
    %248 = vector.broadcast %cst_70 : f32 to vector<4x18xf32>
    %249 = arith.mulf %248, %247 : vector<4x18xf32>
    %250 = arith.addf %246, %249 : vector<4x18xf32>
    %251 = vector.extract_strided_slice %215 {offsets = [0, 4], sizes = [4, 18], strides = [1, 1]} : vector<4x23xf32> to vector<4x18xf32>
    %cst_71 = arith.constant -0.0576573759 : f32
    %252 = vector.broadcast %cst_71 : f32 to vector<4x18xf32>
    %253 = arith.mulf %252, %251 : vector<4x18xf32>
    %254 = arith.addf %250, %253 : vector<4x18xf32>
    %255 = vector.extract_strided_slice %200 {offsets = [0, 5], sizes = [4, 18], strides = [1, 1]} : vector<4x23xf32> to vector<4x18xf32>
    %cst_72 = arith.constant 0.00202896656 : f32
    %256 = vector.broadcast %cst_72 : f32 to vector<4x18xf32>
    %257 = arith.mulf %256, %255 : vector<4x18xf32>
    %258 = arith.addf %254, %257 : vector<4x18xf32>
    %259 = vector.extract_strided_slice %215 {offsets = [0, 5], sizes = [4, 18], strides = [1, 1]} : vector<4x23xf32> to vector<4x18xf32>
    %cst_73 = arith.constant 0.00938946381 : f32
    %260 = vector.broadcast %cst_73 : f32 to vector<4x18xf32>
    %261 = arith.mulf %260, %259 : vector<4x18xf32>
    %262 = arith.addf %258, %261 : vector<4x18xf32>
    %263 = tpu.iota {dimensions = array<i32: 1>} : vector<4x18xi32>
    %264 = vector.broadcast %152 : i32 to vector<4x18xi32>
    %265 = arith.addi %263, %264 : vector<4x18xi32>
    %c16_i32_74 = arith.constant 16 : i32
    %266 = vector.broadcast %c16_i32_74 : i32 to vector<4x18xi32>
    %267 = arith.cmpi slt, %265, %266 : vector<4x18xi32>
    %cst_75 = arith.constant 0.000000e+00 : f32
    %268 = vector.broadcast %cst_75 : f32 to vector<4x18xf32>
    %269 = arith.select %267, %262, %268 : vector<4x18xi1>, vector<4x18xf32>
    %c0_76 = arith.constant 0 : index
    %c0_77 = arith.constant 0 : index
    %270 = vector.load %arg7[%c0_76, %c0_77] : memref<4x12xbf16, #tpu.memory_space<vmem>>, vector<4x12xbf16>
    %c0_78 = arith.constant 0 : index
    %c0_79 = arith.constant 0 : index
    %271 = vector.load %arg8[%c0_78, %c0_79] : memref<4x1xf32, #tpu.memory_space<vmem>>, vector<4x1xf32>
    %272 = vector.extract_strided_slice %270 {offsets = [0, 0], sizes = [4, 4], strides = [1, 1]} : vector<4x12xbf16> to vector<4x4xbf16>
    %273 = vector.extract_strided_slice %269 {offsets = [0, 0], sizes = [4, 16], strides = [1, 1]} : vector<4x18xf32> to vector<4x16xf32>
    %274 = arith.truncf %273 : vector<4x16xf32> to vector<4x16xbf16>
    %cst_80 = arith.constant dense<0.000000e+00> : vector<4x16xf32>
    %275 = tpu.matmul %272, %274, %cst_80 {dimension_numbers = #tpu.dot_dimension_numbers<[1], [0], [0], [1], [0, 0, 1, 1], [], []>} : vector<4x4xbf16>, vector<4x16xbf16>, vector<4x16xf32> -> vector<4x16xf32>
    %276 = vector.extract_strided_slice %270 {offsets = [0, 4], sizes = [4, 4], strides = [1, 1]} : vector<4x12xbf16> to vector<4x4xbf16>
    %277 = vector.extract_strided_slice %269 {offsets = [0, 1], sizes = [4, 16], strides = [1, 1]} : vector<4x18xf32> to vector<4x16xf32>
    %278 = arith.truncf %277 : vector<4x16xf32> to vector<4x16xbf16>
    %cst_81 = arith.constant dense<0.000000e+00> : vector<4x16xf32>
    %279 = tpu.matmul %276, %278, %cst_81 {dimension_numbers = #tpu.dot_dimension_numbers<[1], [0], [0], [1], [0, 0, 1, 1], [], []>} : vector<4x4xbf16>, vector<4x16xbf16>, vector<4x16xf32> -> vector<4x16xf32>
    %280 = arith.addf %275, %279 : vector<4x16xf32>
    %281 = vector.extract_strided_slice %270 {offsets = [0, 8], sizes = [4, 4], strides = [1, 1]} : vector<4x12xbf16> to vector<4x4xbf16>
    %282 = vector.extract_strided_slice %269 {offsets = [0, 2], sizes = [4, 16], strides = [1, 1]} : vector<4x18xf32> to vector<4x16xf32>
    %283 = arith.truncf %282 : vector<4x16xf32> to vector<4x16xbf16>
    %cst_82 = arith.constant dense<0.000000e+00> : vector<4x16xf32>
    %284 = tpu.matmul %281, %283, %cst_82 {dimension_numbers = #tpu.dot_dimension_numbers<[1], [0], [0], [1], [0, 0, 1, 1], [], []>} : vector<4x4xbf16>, vector<4x16xbf16>, vector<4x16xf32> -> vector<4x16xf32>
    %285 = arith.addf %280, %284 : vector<4x16xf32>
    %286 = vector.broadcast %271 : vector<4x1xf32> to vector<4x16xf32>
    %287 = arith.addf %285, %286 : vector<4x16xf32>
    %288 = vector.extract_strided_slice %2 {offsets = [0, 26], sizes = [4, 16], strides = [1, 1]} : vector<4x48xf32> to vector<4x16xf32>
    %289 = arith.addf %287, %288 : vector<4x16xf32>
    %c0_83 = arith.constant 0 : index
    %c0_84 = arith.constant 0 : index
    %c0_85 = arith.constant 0 : index
    %290 = vector.load %arg11[%c0_83, %c0_84, %c0_85] : memref<1x4x16xf32, #tpu.memory_space<vmem>>, vector<1x4x16xf32>
    %291 = vector.shape_cast %290 : vector<1x4x16xf32> to vector<4x16xf32>
    %292 = vector.shape_cast %289 : vector<4x16xf32> to vector<1x4x16xf32>
    tpu.vector_store %arg11[%c0_83, %c0_84, %c0_85], %292 {strides = array<i32>} : memref<1x4x16xf32, #tpu.memory_space<vmem>>, vector<1x4x16xf32>,
    return
  }
  func.func @transform_0(%arg0: i32, %arg1: i32) -> (i32, i32, i32, i32) {
    %c0_i32 = arith.constant 0 : i32
    %c0_i32_0 = arith.constant 0 : i32
    %c0_i32_1 = arith.constant 0 : i32
    return %arg0, %arg1, %c0_i32, %c0_i32_0 : i32, i32, i32, i32
  }
  func.func @transform_1(%arg0: i32, %arg1: i32) -> (i32, i32) {
    %c0_i32 = arith.constant 0 : i32
    %c0_i32_0 = arith.constant 0 : i32
    %c0_i32_1 = arith.constant 0 : i32
    return %c0_i32, %c0_i32_0 : i32, i32
  }
  func.func @transform_2(%arg0: i32, %arg1: i32) -> (i32, i32) {
    %c0_i32 = arith.constant 0 : i32
    %c0_i32_0 = arith.constant 0 : i32
    %c0_i32_1 = arith.constant 0 : i32
    return %c0_i32, %c0_i32_0 : i32, i32
  }
  func.func @transform_3(%arg0: i32, %arg1: i32) -> (i32, i32) {
    %c0_i32 = arith.constant 0 : i32
    %c0_i32_0 = arith.constant 0 : i32
    %c0_i32_1 = arith.constant 0 : i32
    return %c0_i32, %c0_i32_0 : i32, i32
  }
  func.func @transform_4(%arg0: i32, %arg1: i32) -> (i32, i32) {
    %c0_i32 = arith.constant 0 : i32
    %c0_i32_0 = arith.constant 0 : i32
    %c0_i32_1 = arith.constant 0 : i32
    return %c0_i32, %c0_i32_0 : i32, i32
  }
  func.func @transform_5(%arg0: i32, %arg1: i32) -> (i32, i32) {
    %c0_i32 = arith.constant 0 : i32
    %c0_i32_0 = arith.constant 0 : i32
    %c0_i32_1 = arith.constant 0 : i32
    return %c0_i32, %c0_i32_0 : i32, i32
  }
  func.func @transform_6(%arg0: i32, %arg1: i32) -> (i32, i32) {
    %c0_i32 = arith.constant 0 : i32
    %c0_i32_0 = arith.constant 0 : i32
    %c0_i32_1 = arith.constant 0 : i32
    return %c0_i32, %c0_i32_0 : i32, i32
  }
  func.func @transform_7(%arg0: i32, %arg1: i32) -> (i32, i32) {
    %c0_i32 = arith.constant 0 : i32
    %c0_i32_0 = arith.constant 0 : i32
    %c0_i32_1 = arith.constant 0 : i32
    return %c0_i32, %c0_i32_0 : i32, i32
  }
  func.func @transform_8(%arg0: i32, %arg1: i32) -> (i32, i32) {
    %c0_i32 = arith.constant 0 : i32
    %c0_i32_0 = arith.constant 0 : i32
    %c0_i32_1 = arith.constant 0 : i32
    return %c0_i32, %c0_i32_0 : i32, i32
  }
  func.func @transform_9(%arg0: i32, %arg1: i32) -> (i32, i32, i32) {
    %c0_i32 = arith.constant 0 : i32
    %c0_i32_0 = arith.constant 0 : i32
    return %arg0, %c0_i32, %arg1 : i32, i32, i32
  }
}

module attributes {stable_mosaic.version = 11 : i64} {
  func.func @kernel(%arg0: i32, %arg1: i32, %arg2: memref<1x1x4x44xf32, #tpu.memory_space<vmem>>, %arg3: memref<4x12xbf16, #tpu.memory_space<vmem>>, %arg4: memref<4x1xf32, #tpu.memory_space<vmem>>, %arg5: memref<4x1xf32, #tpu.memory_space<vmem>>, %arg6: memref<4x1xf32, #tpu.memory_space<vmem>>, %arg7: memref<4x12xbf16, #tpu.memory_space<vmem>>, %arg8: memref<4x1xf32, #tpu.memory_space<vmem>>, %arg9: memref<4x1xf32, #tpu.memory_space<vmem>>, %arg10: memref<4x1xf32, #tpu.memory_space<vmem>>, %arg11: memref<1x4x16xf32, #tpu.memory_space<vmem>>) attributes {dimension_semantics = [#tpu.dimension_semantics<parallel>, #tpu.dimension_semantics<parallel>], iteration_bounds = array<i64: 2, 1>, scalar_prefetch = 0 : i64, scratch_operands = 0 : i64, tpu.core_type = #tpu.core_type<tc>, window_params = [{transform_indices = @transform_0, window_bounds = array<i64: 1, 1, 4, 44>}, {pipeline_mode = #tpu.pipeline_mode<synchronous>, transform_indices = @transform_1, window_bounds = array<i64: 4, 12>}, {pipeline_mode = #tpu.pipeline_mode<synchronous>, transform_indices = @transform_2, window_bounds = array<i64: 4, 1>}, {pipeline_mode = #tpu.pipeline_mode<synchronous>, transform_indices = @transform_3, window_bounds = array<i64: 4, 1>}, {pipeline_mode = #tpu.pipeline_mode<synchronous>, transform_indices = @transform_4, window_bounds = array<i64: 4, 1>}, {pipeline_mode = #tpu.pipeline_mode<synchronous>, transform_indices = @transform_5, window_bounds = array<i64: 4, 12>}, {pipeline_mode = #tpu.pipeline_mode<synchronous>, transform_indices = @transform_6, window_bounds = array<i64: 4, 1>}, {pipeline_mode = #tpu.pipeline_mode<synchronous>, transform_indices = @transform_7, window_bounds = array<i64: 4, 1>}, {pipeline_mode = #tpu.pipeline_mode<synchronous>, transform_indices = @transform_8, window_bounds = array<i64: 4, 1>}, {transform_indices = @transform_9, window_bounds = array<i64: 1, 4, 16>}]} {
    %c16_i32 = arith.constant 16 : i32
    %0 = arith.muli %arg1, %c16_i32 : i32
    %c0 = arith.constant 0 : index
    %c0_0 = arith.constant 0 : index
    %c0_1 = arith.constant 0 : index
    %c0_2 = arith.constant 0 : index
    %1 = vector.load %arg2[%c0, %c0_0, %c0_1, %c0_2] : memref<1x1x4x44xf32, #tpu.memory_space<vmem>>, vector<1x1x4x44xf32>
    %2 = vector.shape_cast %1 : vector<1x1x4x44xf32> to vector<4x44xf32>
    %c0_3 = arith.constant 0 : index
    %c0_4 = arith.constant 0 : index
    %3 = vector.load %arg5[%c0_3, %c0_4] : memref<4x1xf32, #tpu.memory_space<vmem>>, vector<4x1xf32>
    %c0_5 = arith.constant 0 : index
    %c0_6 = arith.constant 0 : index
    %4 = vector.load %arg6[%c0_5, %c0_6] : memref<4x1xf32, #tpu.memory_space<vmem>>, vector<4x1xf32>
    %c11_i32 = arith.constant 11 : i32
    %5 = arith.subi %0, %c11_i32 : i32
    %c3_i32 = arith.constant 3 : i32
    %6 = arith.subi %5, %c3_i32 : i32
    %7 = vector.extract_strided_slice %2 {offsets = [0, 5], sizes = [4, 39], strides = [1, 1]} : vector<4x44xf32> to vector<4x39xf32>
    %cst = arith.constant 0.0187789276 : f32
    %8 = vector.broadcast %cst : f32 to vector<4x39xf32>
    %9 = arith.mulf %8, %7 : vector<4x39xf32>
    %10 = vector.extract_strided_slice %2 {offsets = [0, 5], sizes = [4, 39], strides = [1, 1]} : vector<4x44xf32> to vector<4x39xf32>
    %cst_7 = arith.constant 0.00405793311 : f32
    %11 = vector.broadcast %cst_7 : f32 to vector<4x39xf32>
    %12 = arith.mulf %11, %10 : vector<4x39xf32>
    %13 = vector.extract_strided_slice %2 {offsets = [0, 4], sizes = [4, 39], strides = [1, 1]} : vector<4x44xf32> to vector<4x39xf32>
    %cst_8 = arith.constant -0.115314752 : f32
    %14 = vector.broadcast %cst_8 : f32 to vector<4x39xf32>
    %15 = arith.mulf %14, %13 : vector<4x39xf32>
    %16 = arith.addf %9, %15 : vector<4x39xf32>
    %cst_9 = arith.constant -0.0510869287 : f32
    %17 = vector.broadcast %cst_9 : f32 to vector<4x39xf32>
    %18 = arith.mulf %17, %13 : vector<4x39xf32>
    %19 = arith.addf %12, %18 : vector<4x39xf32>
    %20 = vector.extract_strided_slice %2 {offsets = [0, 3], sizes = [4, 39], strides = [1, 1]} : vector<4x44xf32> to vector<4x39xf32>
    %cst_10 = arith.constant 0.886419594 : f32
    %21 = vector.broadcast %cst_10 : f32 to vector<4x39xf32>
    %22 = arith.mulf %21, %20 : vector<4x39xf32>
    %23 = arith.addf %16, %22 : vector<4x39xf32>
    %cst_11 = arith.constant 0.257145226 : f32
    %24 = vector.broadcast %cst_11 : f32 to vector<4x39xf32>
    %25 = arith.mulf %24, %20 : vector<4x39xf32>
    %26 = arith.addf %19, %25 : vector<4x39xf32>
    %27 = vector.extract_strided_slice %2 {offsets = [0, 2], sizes = [4, 39], strides = [1, 1]} : vector<4x44xf32> to vector<4x39xf32>
    %cst_12 = arith.constant 0.257145226 : f32
    %28 = vector.broadcast %cst_12 : f32 to vector<4x39xf32>
    %29 = arith.mulf %28, %27 : vector<4x39xf32>
    %30 = arith.addf %23, %29 : vector<4x39xf32>
    %cst_13 = arith.constant 0.886419594 : f32
    %31 = vector.broadcast %cst_13 : f32 to vector<4x39xf32>
    %32 = arith.mulf %31, %27 : vector<4x39xf32>
    %33 = arith.addf %26, %32 : vector<4x39xf32>
    %34 = vector.extract_strided_slice %2 {offsets = [0, 1], sizes = [4, 39], strides = [1, 1]} : vector<4x44xf32> to vector<4x39xf32>
    %cst_14 = arith.constant -0.0510869287 : f32
    %35 = vector.broadcast %cst_14 : f32 to vector<4x39xf32>
    %36 = arith.mulf %35, %34 : vector<4x39xf32>
    %37 = arith.addf %30, %36 : vector<4x39xf32>
    %cst_15 = arith.constant -0.115314752 : f32
    %38 = vector.broadcast %cst_15 : f32 to vector<4x39xf32>
    %39 = arith.mulf %38, %34 : vector<4x39xf32>
    %40 = arith.addf %33, %39 : vector<4x39xf32>
    %41 = vector.extract_strided_slice %2 {offsets = [0, 0], sizes = [4, 39], strides = [1, 1]} : vector<4x44xf32> to vector<4x39xf32>
    %cst_16 = arith.constant 0.00405793311 : f32
    %42 = vector.broadcast %cst_16 : f32 to vector<4x39xf32>
    %43 = arith.mulf %42, %41 : vector<4x39xf32>
    %44 = arith.addf %37, %43 : vector<4x39xf32>
    %cst_17 = arith.constant 0.0187789276 : f32
    %45 = vector.broadcast %cst_17 : f32 to vector<4x39xf32>
    %46 = arith.mulf %45, %41 : vector<4x39xf32>
    %47 = arith.addf %40, %46 : vector<4x39xf32>
    %48 = vector.broadcast %3 : vector<4x1xf32> to vector<4x39xf32>
    %49 = arith.mulf %44, %48 : vector<4x39xf32>
    %50 = math.sin %49 : vector<4x39xf32>
    %51 = arith.mulf %50, %50 : vector<4x39xf32>
    %52 = vector.broadcast %4 : vector<4x1xf32> to vector<4x39xf32>
    %53 = arith.mulf %52, %51 : vector<4x39xf32>
    %54 = arith.addf %44, %53 : vector<4x39xf32>
    %55 = vector.broadcast %3 : vector<4x1xf32> to vector<4x39xf32>
    %56 = arith.mulf %47, %55 : vector<4x39xf32>
    %57 = math.sin %56 : vector<4x39xf32>
    %58 = arith.mulf %57, %57 : vector<4x39xf32>
    %59 = vector.broadcast %4 : vector<4x1xf32> to vector<4x39xf32>
    %60 = arith.mulf %59, %58 : vector<4x39xf32>
    %61 = arith.addf %47, %60 : vector<4x39xf32>
    %c6_i32 = arith.constant 6 : i32
    %62 = arith.subi %6, %c6_i32 : i32
    %63 = tpu.iota {dimensions = array<i32: 1>} : vector<4x39xi32>
    %64 = vector.broadcast %62 : i32 to vector<4x39xi32>
    %65 = arith.addi %63, %64 : vector<4x39xi32>
    %c0_i32 = arith.constant 0 : i32
    %66 = vector.broadcast %c0_i32 : i32 to vector<4x39xi32>
    %67 = arith.cmpi sge, %65, %66 : vector<4x39xi32>
    %cst_18 = arith.constant 0.000000e+00 : f32
    %68 = vector.broadcast %cst_18 : f32 to vector<4x39xf32>
    %69 = arith.select %67, %61, %68 : vector<4x39xi1>, vector<4x39xf32>
    %70 = vector.extract_strided_slice %54 {offsets = [0, 0], sizes = [4, 34], strides = [1, 1]} : vector<4x39xf32> to vector<4x34xf32>
    %cst_19 = arith.constant 0.00938946381 : f32
    %71 = vector.broadcast %cst_19 : f32 to vector<4x34xf32>
    %72 = arith.mulf %71, %70 : vector<4x34xf32>
    %73 = vector.extract_strided_slice %69 {offsets = [0, 0], sizes = [4, 34], strides = [1, 1]} : vector<4x39xf32> to vector<4x34xf32>
    %cst_20 = arith.constant 0.00202896656 : f32
    %74 = vector.broadcast %cst_20 : f32 to vector<4x34xf32>
    %75 = arith.mulf %74, %73 : vector<4x34xf32>
    %76 = arith.addf %72, %75 : vector<4x34xf32>
    %77 = vector.extract_strided_slice %54 {offsets = [0, 1], sizes = [4, 34], strides = [1, 1]} : vector<4x39xf32> to vector<4x34xf32>
    %cst_21 = arith.constant -0.0576573759 : f32
    %78 = vector.broadcast %cst_21 : f32 to vector<4x34xf32>
    %79 = arith.mulf %78, %77 : vector<4x34xf32>
    %80 = arith.addf %76, %79 : vector<4x34xf32>
    %81 = vector.extract_strided_slice %69 {offsets = [0, 1], sizes = [4, 34], strides = [1, 1]} : vector<4x39xf32> to vector<4x34xf32>
    %cst_22 = arith.constant -0.0255434643 : f32
    %82 = vector.broadcast %cst_22 : f32 to vector<4x34xf32>
    %83 = arith.mulf %82, %81 : vector<4x34xf32>
    %84 = arith.addf %80, %83 : vector<4x34xf32>
    %85 = vector.extract_strided_slice %54 {offsets = [0, 2], sizes = [4, 34], strides = [1, 1]} : vector<4x39xf32> to vector<4x34xf32>
    %cst_23 = arith.constant 0.443209797 : f32
    %86 = vector.broadcast %cst_23 : f32 to vector<4x34xf32>
    %87 = arith.mulf %86, %85 : vector<4x34xf32>
    %88 = arith.addf %84, %87 : vector<4x34xf32>
    %89 = vector.extract_strided_slice %69 {offsets = [0, 2], sizes = [4, 34], strides = [1, 1]} : vector<4x39xf32> to vector<4x34xf32>
    %cst_24 = arith.constant 0.128572613 : f32
    %90 = vector.broadcast %cst_24 : f32 to vector<4x34xf32>
    %91 = arith.mulf %90, %89 : vector<4x34xf32>
    %92 = arith.addf %88, %91 : vector<4x34xf32>
    %93 = vector.extract_strided_slice %54 {offsets = [0, 3], sizes = [4, 34], strides = [1, 1]} : vector<4x39xf32> to vector<4x34xf32>
    %cst_25 = arith.constant 0.128572613 : f32
    %94 = vector.broadcast %cst_25 : f32 to vector<4x34xf32>
    %95 = arith.mulf %94, %93 : vector<4x34xf32>
    %96 = arith.addf %92, %95 : vector<4x34xf32>
    %97 = vector.extract_strided_slice %69 {offsets = [0, 3], sizes = [4, 34], strides = [1, 1]} : vector<4x39xf32> to vector<4x34xf32>
    %cst_26 = arith.constant 0.443209797 : f32
    %98 = vector.broadcast %cst_26 : f32 to vector<4x34xf32>
    %99 = arith.mulf %98, %97 : vector<4x34xf32>
    %100 = arith.addf %96, %99 : vector<4x34xf32>
    %101 = vector.extract_strided_slice %54 {offsets = [0, 4], sizes = [4, 34], strides = [1, 1]} : vector<4x39xf32> to vector<4x34xf32>
    %cst_27 = arith.constant -0.0255434643 : f32
    %102 = vector.broadcast %cst_27 : f32 to vector<4x34xf32>
    %103 = arith.mulf %102, %101 : vector<4x34xf32>
    %104 = arith.addf %100, %103 : vector<4x34xf32>
    %105 = vector.extract_strided_slice %69 {offsets = [0, 4], sizes = [4, 34], strides = [1, 1]} : vector<4x39xf32> to vector<4x34xf32>
    %cst_28 = arith.constant -0.0576573759 : f32
    %106 = vector.broadcast %cst_28 : f32 to vector<4x34xf32>
    %107 = arith.mulf %106, %105 : vector<4x34xf32>
    %108 = arith.addf %104, %107 : vector<4x34xf32>
    %109 = vector.extract_strided_slice %54 {offsets = [0, 5], sizes = [4, 34], strides = [1, 1]} : vector<4x39xf32> to vector<4x34xf32>
    %cst_29 = arith.constant 0.00202896656 : f32
    %110 = vector.broadcast %cst_29 : f32 to vector<4x34xf32>
    %111 = arith.mulf %110, %109 : vector<4x34xf32>
    %112 = arith.addf %108, %111 : vector<4x34xf32>
    %113 = vector.extract_strided_slice %69 {offsets = [0, 5], sizes = [4, 34], strides = [1, 1]} : vector<4x39xf32> to vector<4x34xf32>
    %cst_30 = arith.constant 0.00938946381 : f32
    %114 = vector.broadcast %cst_30 : f32 to vector<4x34xf32>
    %115 = arith.mulf %114, %113 : vector<4x34xf32>
    %116 = arith.addf %112, %115 : vector<4x34xf32>
    %117 = tpu.iota {dimensions = array<i32: 1>} : vector<4x34xi32>
    %118 = vector.broadcast %6 : i32 to vector<4x34xi32>
    %119 = arith.addi %117, %118 : vector<4x34xi32>
    %c16_i32_31 = arith.constant 16 : i32
    %120 = vector.broadcast %c16_i32_31 : i32 to vector<4x34xi32>
    %121 = arith.cmpi slt, %119, %120 : vector<4x34xi32>
    %cst_32 = arith.constant 0.000000e+00 : f32
    %122 = vector.broadcast %cst_32 : f32 to vector<4x34xf32>
    %123 = arith.select %121, %116, %122 : vector<4x34xi1>, vector<4x34xf32>
    %c0_33 = arith.constant 0 : index
    %c0_34 = arith.constant 0 : index
    %124 = vector.load %arg3[%c0_33, %c0_34] : memref<4x12xbf16, #tpu.memory_space<vmem>>, vector<4x12xbf16>
    %c0_35 = arith.constant 0 : index
    %c0_36 = arith.constant 0 : index
    %125 = vector.load %arg4[%c0_35, %c0_36] : memref<4x1xf32, #tpu.memory_space<vmem>>, vector<4x1xf32>
    %126 = vector.extract_strided_slice %124 {offsets = [0, 0], sizes = [4, 4], strides = [1, 1]} : vector<4x12xbf16> to vector<4x4xbf16>
    %127 = vector.extract_strided_slice %123 {offsets = [0, 0], sizes = [4, 28], strides = [1, 1]} : vector<4x34xf32> to vector<4x28xf32>
    %128 = arith.truncf %127 : vector<4x28xf32> to vector<4x28xbf16>
    %cst_37 = arith.constant dense<0.000000e+00> : vector<4x28xf32>
    %129 = tpu.matmul %126, %128, %cst_37 {dimension_numbers = #tpu.dot_dimension_numbers<[1], [0], [0], [1], [0, 0, 1, 1], [], []>} : vector<4x4xbf16>, vector<4x28xbf16>, vector<4x28xf32> -> vector<4x28xf32>
    %130 = vector.extract_strided_slice %124 {offsets = [0, 4], sizes = [4, 4], strides = [1, 1]} : vector<4x12xbf16> to vector<4x4xbf16>
    %131 = vector.extract_strided_slice %123 {offsets = [0, 3], sizes = [4, 28], strides = [1, 1]} : vector<4x34xf32> to vector<4x28xf32>
    %132 = arith.truncf %131 : vector<4x28xf32> to vector<4x28xbf16>
    %cst_38 = arith.constant dense<0.000000e+00> : vector<4x28xf32>
    %133 = tpu.matmul %130, %132, %cst_38 {dimension_numbers = #tpu.dot_dimension_numbers<[1], [0], [0], [1], [0, 0, 1, 1], [], []>} : vector<4x4xbf16>, vector<4x28xbf16>, vector<4x28xf32> -> vector<4x28xf32>
    %134 = arith.addf %129, %133 : vector<4x28xf32>
    %135 = vector.extract_strided_slice %124 {offsets = [0, 8], sizes = [4, 4], strides = [1, 1]} : vector<4x12xbf16> to vector<4x4xbf16>
    %136 = vector.extract_strided_slice %123 {offsets = [0, 6], sizes = [4, 28], strides = [1, 1]} : vector<4x34xf32> to vector<4x28xf32>
    %137 = arith.truncf %136 : vector<4x28xf32> to vector<4x28xbf16>
    %cst_39 = arith.constant dense<0.000000e+00> : vector<4x28xf32>
    %138 = tpu.matmul %135, %137, %cst_39 {dimension_numbers = #tpu.dot_dimension_numbers<[1], [0], [0], [1], [0, 0, 1, 1], [], []>} : vector<4x4xbf16>, vector<4x28xbf16>, vector<4x28xf32> -> vector<4x28xf32>
    %139 = arith.addf %134, %138 : vector<4x28xf32>
    %140 = vector.broadcast %125 : vector<4x1xf32> to vector<4x28xf32>
    %141 = arith.addf %139, %140 : vector<4x28xf32>
    %c11_i32_40 = arith.constant 11 : i32
    %142 = arith.subi %0, %c11_i32_40 : i32
    %143 = tpu.iota {dimensions = array<i32: 1>} : vector<4x28xi32>
    %144 = vector.broadcast %142 : i32 to vector<4x28xi32>
    %145 = arith.addi %143, %144 : vector<4x28xi32>
    %c0_i32_41 = arith.constant 0 : i32
    %146 = vector.broadcast %c0_i32_41 : i32 to vector<4x28xi32>
    %147 = arith.cmpi sge, %145, %146 : vector<4x28xi32>
    %cst_42 = arith.constant 0.000000e+00 : f32
    %148 = vector.broadcast %cst_42 : f32 to vector<4x28xf32>
    %149 = arith.select %147, %141, %148 : vector<4x28xi1>, vector<4x28xf32>
    %c0_43 = arith.constant 0 : index
    %c0_44 = arith.constant 0 : index
    %150 = vector.load %arg9[%c0_43, %c0_44] : memref<4x1xf32, #tpu.memory_space<vmem>>, vector<4x1xf32>
    %c0_45 = arith.constant 0 : index
    %c0_46 = arith.constant 0 : index
    %151 = vector.load %arg10[%c0_45, %c0_46] : memref<4x1xf32, #tpu.memory_space<vmem>>, vector<4x1xf32>
    %c1_i32 = arith.constant 1 : i32
    %152 = arith.subi %0, %c1_i32 : i32
    %153 = vector.extract_strided_slice %149 {offsets = [0, 5], sizes = [4, 23], strides = [1, 1]} : vector<4x28xf32> to vector<4x23xf32>
    %cst_47 = arith.constant 0.0187789276 : f32
    %154 = vector.broadcast %cst_47 : f32 to vector<4x23xf32>
    %155 = arith.mulf %154, %153 : vector<4x23xf32>
    %156 = vector.extract_strided_slice %149 {offsets = [0, 5], sizes = [4, 23], strides = [1, 1]} : vector<4x28xf32> to vector<4x23xf32>
    %cst_48 = arith.constant 0.00405793311 : f32
    %157 = vector.broadcast %cst_48 : f32 to vector<4x23xf32>
    %158 = arith.mulf %157, %156 : vector<4x23xf32>
    %159 = vector.extract_strided_slice %149 {offsets = [0, 4], sizes = [4, 23], strides = [1, 1]} : vector<4x28xf32> to vector<4x23xf32>
    %cst_49 = arith.constant -0.115314752 : f32
    %160 = vector.broadcast %cst_49 : f32 to vector<4x23xf32>
    %161 = arith.mulf %160, %159 : vector<4x23xf32>
    %162 = arith.addf %155, %161 : vector<4x23xf32>
    %cst_50 = arith.constant -0.0510869287 : f32
    %163 = vector.broadcast %cst_50 : f32 to vector<4x23xf32>
    %164 = arith.mulf %163, %159 : vector<4x23xf32>
    %165 = arith.addf %158, %164 : vector<4x23xf32>
    %166 = vector.extract_strided_slice %149 {offsets = [0, 3], sizes = [4, 23], strides = [1, 1]} : vector<4x28xf32> to vector<4x23xf32>
    %cst_51 = arith.constant 0.886419594 : f32
    %167 = vector.broadcast %cst_51 : f32 to vector<4x23xf32>
    %168 = arith.mulf %167, %166 : vector<4x23xf32>
    %169 = arith.addf %162, %168 : vector<4x23xf32>
    %cst_52 = arith.constant 0.257145226 : f32
    %170 = vector.broadcast %cst_52 : f32 to vector<4x23xf32>
    %171 = arith.mulf %170, %166 : vector<4x23xf32>
    %172 = arith.addf %165, %171 : vector<4x23xf32>
    %173 = vector.extract_strided_slice %149 {offsets = [0, 2], sizes = [4, 23], strides = [1, 1]} : vector<4x28xf32> to vector<4x23xf32>
    %cst_53 = arith.constant 0.257145226 : f32
    %174 = vector.broadcast %cst_53 : f32 to vector<4x23xf32>
    %175 = arith.mulf %174, %173 : vector<4x23xf32>
    %176 = arith.addf %169, %175 : vector<4x23xf32>
    %cst_54 = arith.constant 0.886419594 : f32
    %177 = vector.broadcast %cst_54 : f32 to vector<4x23xf32>
    %178 = arith.mulf %177, %173 : vector<4x23xf32>
    %179 = arith.addf %172, %178 : vector<4x23xf32>
    %180 = vector.extract_strided_slice %149 {offsets = [0, 1], sizes = [4, 23], strides = [1, 1]} : vector<4x28xf32> to vector<4x23xf32>
    %cst_55 = arith.constant -0.0510869287 : f32
    %181 = vector.broadcast %cst_55 : f32 to vector<4x23xf32>
    %182 = arith.mulf %181, %180 : vector<4x23xf32>
    %183 = arith.addf %176, %182 : vector<4x23xf32>
    %cst_56 = arith.constant -0.115314752 : f32
    %184 = vector.broadcast %cst_56 : f32 to vector<4x23xf32>
    %185 = arith.mulf %184, %180 : vector<4x23xf32>
    %186 = arith.addf %179, %185 : vector<4x23xf32>
    %187 = vector.extract_strided_slice %149 {offsets = [0, 0], sizes = [4, 23], strides = [1, 1]} : vector<4x28xf32> to vector<4x23xf32>
    %cst_57 = arith.constant 0.00405793311 : f32
    %188 = vector.broadcast %cst_57 : f32 to vector<4x23xf32>
    %189 = arith.mulf %188, %187 : vector<4x23xf32>
    %190 = arith.addf %183, %189 : vector<4x23xf32>
    %cst_58 = arith.constant 0.0187789276 : f32
    %191 = vector.broadcast %cst_58 : f32 to vector<4x23xf32>
    %192 = arith.mulf %191, %187 : vector<4x23xf32>
    %193 = arith.addf %186, %192 : vector<4x23xf32>
    %194 = vector.broadcast %150 : vector<4x1xf32> to vector<4x23xf32>
    %195 = arith.mulf %190, %194 : vector<4x23xf32>
    %196 = math.sin %195 : vector<4x23xf32>
    %197 = arith.mulf %196, %196 : vector<4x23xf32>
    %198 = vector.broadcast %151 : vector<4x1xf32> to vector<4x23xf32>
    %199 = arith.mulf %198, %197 : vector<4x23xf32>
    %200 = arith.addf %190, %199 : vector<4x23xf32>
    %201 = vector.broadcast %150 : vector<4x1xf32> to vector<4x23xf32>
    %202 = arith.mulf %193, %201 : vector<4x23xf32>
    %203 = math.sin %202 : vector<4x23xf32>
    %204 = arith.mulf %203, %203 : vector<4x23xf32>
    %205 = vector.broadcast %151 : vector<4x1xf32> to vector<4x23xf32>
    %206 = arith.mulf %205, %204 : vector<4x23xf32>
    %207 = arith.addf %193, %206 : vector<4x23xf32>
    %c6_i32_59 = arith.constant 6 : i32
    %208 = arith.subi %152, %c6_i32_59 : i32
    %209 = tpu.iota {dimensions = array<i32: 1>} : vector<4x23xi32>
    %210 = vector.broadcast %208 : i32 to vector<4x23xi32>
    %211 = arith.addi %209, %210 : vector<4x23xi32>
    %c0_i32_60 = arith.constant 0 : i32
    %212 = vector.broadcast %c0_i32_60 : i32 to vector<4x23xi32>
    %213 = arith.cmpi sge, %211, %212 : vector<4x23xi32>
    %cst_61 = arith.constant 0.000000e+00 : f32
    %214 = vector.broadcast %cst_61 : f32 to vector<4x23xf32>
    %215 = arith.select %213, %207, %214 : vector<4x23xi1>, vector<4x23xf32>
    %216 = vector.extract_strided_slice %200 {offsets = [0, 0], sizes = [4, 18], strides = [1, 1]} : vector<4x23xf32> to vector<4x18xf32>
    %cst_62 = arith.constant 0.00938946381 : f32
    %217 = vector.broadcast %cst_62 : f32 to vector<4x18xf32>
    %218 = arith.mulf %217, %216 : vector<4x18xf32>
    %219 = vector.extract_strided_slice %215 {offsets = [0, 0], sizes = [4, 18], strides = [1, 1]} : vector<4x23xf32> to vector<4x18xf32>
    %cst_63 = arith.constant 0.00202896656 : f32
    %220 = vector.broadcast %cst_63 : f32 to vector<4x18xf32>
    %221 = arith.mulf %220, %219 : vector<4x18xf32>
    %222 = arith.addf %218, %221 : vector<4x18xf32>
    %223 = vector.extract_strided_slice %200 {offsets = [0, 1], sizes = [4, 18], strides = [1, 1]} : vector<4x23xf32> to vector<4x18xf32>
    %cst_64 = arith.constant -0.0576573759 : f32
    %224 = vector.broadcast %cst_64 : f32 to vector<4x18xf32>
    %225 = arith.mulf %224, %223 : vector<4x18xf32>
    %226 = arith.addf %222, %225 : vector<4x18xf32>
    %227 = vector.extract_strided_slice %215 {offsets = [0, 1], sizes = [4, 18], strides = [1, 1]} : vector<4x23xf32> to vector<4x18xf32>
    %cst_65 = arith.constant -0.0255434643 : f32
    %228 = vector.broadcast %cst_65 : f32 to vector<4x18xf32>
    %229 = arith.mulf %228, %227 : vector<4x18xf32>
    %230 = arith.addf %226, %229 : vector<4x18xf32>
    %231 = vector.extract_strided_slice %200 {offsets = [0, 2], sizes = [4, 18], strides = [1, 1]} : vector<4x23xf32> to vector<4x18xf32>
    %cst_66 = arith.constant 0.443209797 : f32
    %232 = vector.broadcast %cst_66 : f32 to vector<4x18xf32>
    %233 = arith.mulf %232, %231 : vector<4x18xf32>
    %234 = arith.addf %230, %233 : vector<4x18xf32>
    %235 = vector.extract_strided_slice %215 {offsets = [0, 2], sizes = [4, 18], strides = [1, 1]} : vector<4x23xf32> to vector<4x18xf32>
    %cst_67 = arith.constant 0.128572613 : f32
    %236 = vector.broadcast %cst_67 : f32 to vector<4x18xf32>
    %237 = arith.mulf %236, %235 : vector<4x18xf32>
    %238 = arith.addf %234, %237 : vector<4x18xf32>
    %239 = vector.extract_strided_slice %200 {offsets = [0, 3], sizes = [4, 18], strides = [1, 1]} : vector<4x23xf32> to vector<4x18xf32>
    %cst_68 = arith.constant 0.128572613 : f32
    %240 = vector.broadcast %cst_68 : f32 to vector<4x18xf32>
    %241 = arith.mulf %240, %239 : vector<4x18xf32>
    %242 = arith.addf %238, %241 : vector<4x18xf32>
    %243 = vector.extract_strided_slice %215 {offsets = [0, 3], sizes = [4, 18], strides = [1, 1]} : vector<4x23xf32> to vector<4x18xf32>
    %cst_69 = arith.constant 0.443209797 : f32
    %244 = vector.broadcast %cst_69 : f32 to vector<4x18xf32>
    %245 = arith.mulf %244, %243 : vector<4x18xf32>
    %246 = arith.addf %242, %245 : vector<4x18xf32>
    %247 = vector.extract_strided_slice %200 {offsets = [0, 4], sizes = [4, 18], strides = [1, 1]} : vector<4x23xf32> to vector<4x18xf32>
    %cst_70 = arith.constant -0.0255434643 : f32
    %248 = vector.broadcast %cst_70 : f32 to vector<4x18xf32>
    %249 = arith.mulf %248, %247 : vector<4x18xf32>
    %250 = arith.addf %246, %249 : vector<4x18xf32>
    %251 = vector.extract_strided_slice %215 {offsets = [0, 4], sizes = [4, 18], strides = [1, 1]} : vector<4x23xf32> to vector<4x18xf32>
    %cst_71 = arith.constant -0.0576573759 : f32
    %252 = vector.broadcast %cst_71 : f32 to vector<4x18xf32>
    %253 = arith.mulf %252, %251 : vector<4x18xf32>
    %254 = arith.addf %250, %253 : vector<4x18xf32>
    %255 = vector.extract_strided_slice %200 {offsets = [0, 5], sizes = [4, 18], strides = [1, 1]} : vector<4x23xf32> to vector<4x18xf32>
    %cst_72 = arith.constant 0.00202896656 : f32
    %256 = vector.broadcast %cst_72 : f32 to vector<4x18xf32>
    %257 = arith.mulf %256, %255 : vector<4x18xf32>
    %258 = arith.addf %254, %257 : vector<4x18xf32>
    %259 = vector.extract_strided_slice %215 {offsets = [0, 5], sizes = [4, 18], strides = [1, 1]} : vector<4x23xf32> to vector<4x18xf32>
    %cst_73 = arith.constant 0.00938946381 : f32
    %260 = vector.broadcast %cst_73 : f32 to vector<4x18xf32>
    %261 = arith.mulf %260, %259 : vector<4x18xf32>
    %262 = arith.addf %258, %261 : vector<4x18xf32>
    %263 = tpu.iota {dimensions = array<i32: 1>} : vector<4x18xi32>
    %264 = vector.broadcast %152 : i32 to vector<4x18xi32>
    %265 = arith.addi %263, %264 : vector<4x18xi32>
    %c16_i32_74 = arith.constant 16 : i32
    %266 = vector.broadcast %c16_i32_74 : i32 to vector<4x18xi32>
    %267 = arith.cmpi slt, %265, %266 : vector<4x18xi32>
    %cst_75 = arith.constant 0.000000e+00 : f32
    %268 = vector.broadcast %cst_75 : f32 to vector<4x18xf32>
    %269 = arith.select %267, %262, %268 : vector<4x18xi1>, vector<4x18xf32>
    %c0_76 = arith.constant 0 : index
    %c0_77 = arith.constant 0 : index
    %270 = vector.load %arg7[%c0_76, %c0_77] : memref<4x12xbf16, #tpu.memory_space<vmem>>, vector<4x12xbf16>
    %c0_78 = arith.constant 0 : index
    %c0_79 = arith.constant 0 : index
    %271 = vector.load %arg8[%c0_78, %c0_79] : memref<4x1xf32, #tpu.memory_space<vmem>>, vector<4x1xf32>
    %272 = vector.extract_strided_slice %270 {offsets = [0, 0], sizes = [4, 4], strides = [1, 1]} : vector<4x12xbf16> to vector<4x4xbf16>
    %273 = vector.extract_strided_slice %269 {offsets = [0, 0], sizes = [4, 16], strides = [1, 1]} : vector<4x18xf32> to vector<4x16xf32>
    %274 = arith.truncf %273 : vector<4x16xf32> to vector<4x16xbf16>
    %cst_80 = arith.constant dense<0.000000e+00> : vector<4x16xf32>
    %275 = tpu.matmul %272, %274, %cst_80 {dimension_numbers = #tpu.dot_dimension_numbers<[1], [0], [0], [1], [0, 0, 1, 1], [], []>} : vector<4x4xbf16>, vector<4x16xbf16>, vector<4x16xf32> -> vector<4x16xf32>
    %276 = vector.extract_strided_slice %270 {offsets = [0, 4], sizes = [4, 4], strides = [1, 1]} : vector<4x12xbf16> to vector<4x4xbf16>
    %277 = vector.extract_strided_slice %269 {offsets = [0, 1], sizes = [4, 16], strides = [1, 1]} : vector<4x18xf32> to vector<4x16xf32>
    %278 = arith.truncf %277 : vector<4x16xf32> to vector<4x16xbf16>
    %cst_81 = arith.constant dense<0.000000e+00> : vector<4x16xf32>
    %279 = tpu.matmul %276, %278, %cst_81 {dimension_numbers = #tpu.dot_dimension_numbers<[1], [0], [0], [1], [0, 0, 1, 1], [], []>} : vector<4x4xbf16>, vector<4x16xbf16>, vector<4x16xf32> -> vector<4x16xf32>
    %280 = arith.addf %275, %279 : vector<4x16xf32>
    %281 = vector.extract_strided_slice %270 {offsets = [0, 8], sizes = [4, 4], strides = [1, 1]} : vector<4x12xbf16> to vector<4x4xbf16>
    %282 = vector.extract_strided_slice %269 {offsets = [0, 2], sizes = [4, 16], strides = [1, 1]} : vector<4x18xf32> to vector<4x16xf32>
    %283 = arith.truncf %282 : vector<4x16xf32> to vector<4x16xbf16>
    %cst_82 = arith.constant dense<0.000000e+00> : vector<4x16xf32>
    %284 = tpu.matmul %281, %283, %cst_82 {dimension_numbers = #tpu.dot_dimension_numbers<[1], [0], [0], [1], [0, 0, 1, 1], [], []>} : vector<4x4xbf16>, vector<4x16xbf16>, vector<4x16xf32> -> vector<4x16xf32>
    %285 = arith.addf %280, %284 : vector<4x16xf32>
    %286 = vector.broadcast %271 : vector<4x1xf32> to vector<4x16xf32>
    %287 = arith.addf %285, %286 : vector<4x16xf32>
    %288 = vector.extract_strided_slice %2 {offsets = [0, 24], sizes = [4, 16], strides = [1, 1]} : vector<4x44xf32> to vector<4x16xf32>
    %289 = arith.addf %287, %288 : vector<4x16xf32>
    %c0_83 = arith.constant 0 : index
    %c0_84 = arith.constant 0 : index
    %c0_85 = arith.constant 0 : index
    %290 = vector.load %arg11[%c0_83, %c0_84, %c0_85] : memref<1x4x16xf32, #tpu.memory_space<vmem>>, vector<1x4x16xf32>
    %291 = vector.shape_cast %290 : vector<1x4x16xf32> to vector<4x16xf32>
    %292 = vector.shape_cast %289 : vector<4x16xf32> to vector<1x4x16xf32>
    tpu.vector_store %arg11[%c0_83, %c0_84, %c0_85], %292 {strides = array<i32>} : memref<1x4x16xf32, #tpu.memory_space<vmem>>, vector<1x4x16xf32>,
    return
  }
  func.func @transform_0(%arg0: i32, %arg1: i32) -> (i32, i32, i32, i32) {
    %c0_i32 = arith.constant 0 : i32
    %c0_i32_0 = arith.constant 0 : i32
    %c0_i32_1 = arith.constant 0 : i32
    return %arg0, %arg1, %c0_i32, %c0_i32_0 : i32, i32, i32, i32
  }
  func.func @transform_1(%arg0: i32, %arg1: i32) -> (i32, i32) {
    %c0_i32 = arith.constant 0 : i32
    %c0_i32_0 = arith.constant 0 : i32
    %c0_i32_1 = arith.constant 0 : i32
    return %c0_i32, %c0_i32_0 : i32, i32
  }
  func.func @transform_2(%arg0: i32, %arg1: i32) -> (i32, i32) {
    %c0_i32 = arith.constant 0 : i32
    %c0_i32_0 = arith.constant 0 : i32
    %c0_i32_1 = arith.constant 0 : i32
    return %c0_i32, %c0_i32_0 : i32, i32
  }
  func.func @transform_3(%arg0: i32, %arg1: i32) -> (i32, i32) {
    %c0_i32 = arith.constant 0 : i32
    %c0_i32_0 = arith.constant 0 : i32
    %c0_i32_1 = arith.constant 0 : i32
    return %c0_i32, %c0_i32_0 : i32, i32
  }
  func.func @transform_4(%arg0: i32, %arg1: i32) -> (i32, i32) {
    %c0_i32 = arith.constant 0 : i32
    %c0_i32_0 = arith.constant 0 : i32
    %c0_i32_1 = arith.constant 0 : i32
    return %c0_i32, %c0_i32_0 : i32, i32
  }
  func.func @transform_5(%arg0: i32, %arg1: i32) -> (i32, i32) {
    %c0_i32 = arith.constant 0 : i32
    %c0_i32_0 = arith.constant 0 : i32
    %c0_i32_1 = arith.constant 0 : i32
    return %c0_i32, %c0_i32_0 : i32, i32
  }
  func.func @transform_6(%arg0: i32, %arg1: i32) -> (i32, i32) {
    %c0_i32 = arith.constant 0 : i32
    %c0_i32_0 = arith.constant 0 : i32
    %c0_i32_1 = arith.constant 0 : i32
    return %c0_i32, %c0_i32_0 : i32, i32
  }
  func.func @transform_7(%arg0: i32, %arg1: i32) -> (i32, i32) {
    %c0_i32 = arith.constant 0 : i32
    %c0_i32_0 = arith.constant 0 : i32
    %c0_i32_1 = arith.constant 0 : i32
    return %c0_i32, %c0_i32_0 : i32, i32
  }
  func.func @transform_8(%arg0: i32, %arg1: i32) -> (i32, i32) {
    %c0_i32 = arith.constant 0 : i32
    %c0_i32_0 = arith.constant 0 : i32
    %c0_i32_1 = arith.constant 0 : i32
    return %c0_i32, %c0_i32_0 : i32, i32
  }
  func.func @transform_9(%arg0: i32, %arg1: i32) -> (i32, i32, i32) {
    %c0_i32 = arith.constant 0 : i32
    %c0_i32_0 = arith.constant 0 : i32
    return %arg0, %c0_i32, %arg1 : i32, i32, i32
  }
}

</mosaic_0001>

<llo_original>
// kernel: _lambda_.5
$region0: #{_lambda_.5}
  #allocation0 [shape = 'u32[]', space=smem, size = 0x4, offset = 0x4, fixed_abs, tag = 'smem constant byte address 0x4 - core index']
  #allocation1 [shape = 'u32[144,128]{1,0:T(1,128)}', space=vmem, size = 0x12000, scoped, tag = 'internal scratch']
  %s0 = inlined_call_operand.vmem [shape: f32[2,1,4,48], index: 0, kind: input, shape index: {}]
  %s1 = inlined_call_operand.vmem [shape: bf16[4,12], index: 1, kind: input, shape index: {}]
  %s2 = inlined_call_operand.vmem [shape: f32[4,1], index: 2, kind: input, shape index: {}]
  %s3 = inlined_call_operand.vmem [shape: f32[4,1], index: 3, kind: input, shape index: {}, may-alias: {3,4,7,8}]
  %s4 = inlined_call_operand.vmem [shape: f32[4,1], index: 4, kind: input, shape index: {}, may-alias: {3,4,7,8}]
  %s5 = inlined_call_operand.vmem [shape: bf16[4,12], index: 5, kind: input, shape index: {}]
  %s6 = inlined_call_operand.vmem [shape: f32[4,1], index: 6, kind: input, shape index: {}]
  %s7 = inlined_call_operand.vmem [shape: f32[4,1], index: 7, kind: input, shape index: {}, may-alias: {3,4,7,8}]
  %s8 = inlined_call_operand.vmem [shape: f32[4,1], index: 8, kind: input, shape index: {}, may-alias: {3,4,7,8}]
  %s9 = inlined_call_operand.hbm [shape: f32[2,4,16], index: 9, kind: output, shape index: {}]
  %s10 = sld [smem:[#allocation0]]
  $region69: #{_lambda_.5} parent=0
    _
  %s12 = ssub.s32 1, %s10
  %s13 = scalar_select 0, %s12, %s10
  $region1: #{_lambda_.5} parent=0
    #allocation2 [shape = 'u8[4096]{0}', space=vmem, size = 0x1000, scoped, tag = 'output window, operand 0']
    #allocation3 [shape = 's32[2]{0}', space=sflag, size = 0x8, scoped, tag = 'scoped memory for _lambda_.5']
    %14 = vsyncpa [#allocation3], 0
    %s15 = scalar_lea.sflag [#allocation3], 1
    %16 = vsyncpa %s15, 0
    loop: start=0, step=1, limit=4
    $region2: #{_lambda_.5} parent=1 // loop_pre_header
      _
    $region3: #{_lambda_.5} parent=1 // loop_header
      %s18 = sphi 0, %s22
      %p19 = scmp.ge.s32.totalorder %s18, 4
      %s25 = sphi 0, %s37
      %s26 = sphi 0, %s33
      %s27 = sphi 0, %s25
      %s28 = sphi 0, %s26
      %s29 = sphi 0, %s27
      %s30 = sphi 0, %s28
      %s42 = sphi 0, %s44
      %s45 = sphi 0, %s42
      %s46 = sphi 0, %s45
      %s62 = sphi 0, %s46
      %s66 = sphi 0, %s66
      %s68 = sphi 0, %s66
      %s69 = sphi 0, %s68
      %s83 = sphi 0, %s69
      %s87 = sphi 0, %s87
      %s89 = sphi 0, %s87
      %s90 = sphi 0, %s89
      %s104 = sphi 0, %s90
      %s108 = sphi 0, %s108
      %s110 = sphi 0, %s108
      %s111 = sphi 0, %s110
      %s125 = sphi 0, %s111
      %s129 = sphi 0, %s129
      %s131 = sphi 0, %s129
      %s132 = sphi 0, %s131
      %s146 = sphi 0, %s132
      %s150 = sphi 0, %s150
      %s152 = sphi 0, %s150
      %s153 = sphi 0, %s152
      %s167 = sphi 0, %s153
      %s171 = sphi 0, %s171
      %s173 = sphi 0, %s171
      %s174 = sphi 0, %s173
      %s188 = sphi 0, %s174
      %s192 = sphi 0, %s192
      %s194 = sphi 0, %s192
      %s195 = sphi 0, %s194
      %s209 = sphi 0, %s195
      %s213 = sphi 0, %s213
      %s215 = sphi 0, %s213
      %s216 = sphi 0, %s215
      %s230 = sphi 0, %s216
      %s238 = sphi 0, %s240
      %s241 = sphi 0, %s238
      %s242 = sphi 0, %s241
      %s258 = sphi 0, %s242
    $region4: #{_lambda_.5} parent=1 // loop_header_branch
      %21 = sbr.rel (%p19) target = $region8
    $region5: #{_lambda_.5} parent=1 // loop_body
      %s23 = ssub.s32 %s18, 1
      %s24 = ssub.s32 %s18, 2
      %s31 = sadd.s32 1, %s26
      %p32 = scmp.ge.s32.totalorder %s31, 1
      %s33 = scalar_select %p32, 0, %s31
      %s34 = sadd.s32 1, %s25
      %s35 = scalar_select %p32, %s34, %s25
      %p36 = scmp.ge.s32.totalorder %s35, 2
      %s37 = scalar_select %p36, 0, %s35
      %s38 = ssub.s32 %s25, %s37
      %s39 = ssub.s32 %s26, %s33
      %s40 = sor.u32 %s38, %s39
      %p41 = scmp.eq.s32.totalorder %s40, 0
      %s43 = sadd.s32 %s42, 1
      %s44 = scalar_select %p41, %s42, %s43
      %p47 = pneg %p41
      %p48 = scmp.eq.s32.totalorder %s18, 1
      %p49 = por %p47, %p48
      %p50 = scmp.ne.s32.totalorder %s42, %s45
      %p51 = scmp.eq.s32.totalorder %s18, 0
      %p52 = por %p50, %p51
      %p53 = scmp.ne.s32.totalorder %s42, %s45
      %p54 = scmp.eq.s32.totalorder %s23, 1
      %p55 = por %p53, %p54
      %p56 = scmp.ne.s32.totalorder %s45, %s46
      %p57 = scmp.eq.s32.totalorder %s23, 0
      %p58 = por %p56, %p57
      %p59 = scmp.ne.s32.totalorder %s45, %s46
      %p60 = scmp.eq.s32.totalorder %s24, 1
      %p61 = por %p59, %p60
      %p63 = scmp.ne.s32.totalorder %s46, %s62
      %p64 = scmp.eq.s32.totalorder %s24, 0
      %p65 = por %p63, %p64
      %s67 = sadd.s32 %s66, 1
      %p70 = scmp.eq.s32.totalorder %s18, 1
      %p71 = scmp.ne.s32.totalorder %s66, %s68
      %p72 = scmp.eq.s32.totalorder %s18, 0
      %p73 = por %p71, %p72
      %p74 = scmp.ne.s32.totalorder %s66, %s68
      %p75 = scmp.eq.s32.totalorder %s23, 1
      %p76 = por %p74, %p75
      %p77 = scmp.ne.s32.totalorder %s68, %s69
      %p78 = scmp.eq.s32.totalorder %s23, 0
      %p79 = por %p77, %p78
      %p80 = scmp.ne.s32.totalorder %s68, %s69
      %p81 = scmp.eq.s32.totalorder %s24, 1
      %p82 = por %p80, %p81
      %p84 = scmp.ne.s32.totalorder %s69, %s83
      %p85 = scmp.eq.s32.totalorder %s24, 0
      %p86 = por %p84, %p85
      %s88 = sadd.s32 %s87, 1
      %p91 = scmp.eq.s32.totalorder %s18, 1
      %p92 = scmp.ne.s32.totalorder %s87, %s89
      %p93 = scmp.eq.s32.totalorder %s18, 0
      %p94 = por %p92, %p93
      %p95 = scmp.ne.s32.totalorder %s87, %s89
      %p96 = scmp.eq.s32.totalorder %s23, 1
      %p97 = por %p95, %p96
      %p98 = scmp.ne.s32.totalorder %s89, %s90
      %p99 = scmp.eq.s32.totalorder %s23, 0
      %p100 = por %p98, %p99
      %p101 = scmp.ne.s32.totalorder %s89, %s90
      %p102 = scmp.eq.s32.totalorder %s24, 1
      %p103 = por %p101, %p102
      %p105 = scmp.ne.s32.totalorder %s90, %s104
      %p106 = scmp.eq.s32.totalorder %s24, 0
      %p107 = por %p105, %p106
      %s109 = sadd.s32 %s108, 1
      %p112 = scmp.eq.s32.totalorder %s18, 1
      %p113 = scmp.ne.s32.totalorder %s108, %s110
      %p114 = scmp.eq.s32.totalorder %s18, 0
      %p115 = por %p113, %p114
      %p116 = scmp.ne.s32.totalorder %s108, %s110
      %p117 = scmp.eq.s32.totalorder %s23, 1
      %p118 = por %p116, %p117
      %p119 = scmp.ne.s32.totalorder %s110, %s111
      %p120 = scmp.eq.s32.totalorder %s23, 0
      %p121 = por %p119, %p120
      %p122 = scmp.ne.s32.totalorder %s110, %s111
      %p123 = scmp.eq.s32.totalorder %s24, 1
      %p124 = por %p122, %p123
      %p126 = scmp.ne.s32.totalorder %s111, %s125
      %p127 = scmp.eq.s32.totalorder %s24, 0
      %p128 = por %p126, %p127
      %s130 = sadd.s32 %s129, 1
      %p133 = scmp.eq.s32.totalorder %s18, 1
      %p134 = scmp.ne.s32.totalorder %s129, %s131
      %p135 = scmp.eq.s32.totalorder %s18, 0
      %p136 = por %p134, %p135
      %p137 = scmp.ne.s32.totalorder %s129, %s131
      %p138 = scmp.eq.s32.totalorder %s23, 1
      %p139 = por %p137, %p138
      %p140 = scmp.ne.s32.totalorder %s131, %s132
      %p141 = scmp.eq.s32.totalorder %s23, 0
      %p142 = por %p140, %p141
      %p143 = scmp.ne.s32.totalorder %s131, %s132
      %p144 = scmp.eq.s32.totalorder %s24, 1
      %p145 = por %p143, %p144
      %p147 = scmp.ne.s32.totalorder %s132, %s146
      %p148 = scmp.eq.s32.totalorder %s24, 0
      %p149 = por %p147, %p148
      %s151 = sadd.s32 %s150, 1
      %p154 = scmp.eq.s32.totalorder %s18, 1
      %p155 = scmp.ne.s32.totalorder %s150, %s152
      %p156 = scmp.eq.s32.totalorder %s18, 0
      %p157 = por %p155, %p156
      %p158 = scmp.ne.s32.totalorder %s150, %s152
      %p159 = scmp.eq.s32.totalorder %s23, 1
      %p160 = por %p158, %p159
      %p161 = scmp.ne.s32.totalorder %s152, %s153
      %p162 = scmp.eq.s32.totalorder %s23, 0
      %p163 = por %p161, %p162
      %p164 = scmp.ne.s32.totalorder %s152, %s153
      %p165 = scmp.eq.s32.totalorder %s24, 1
      %p166 = por %p164, %p165
      %p168 = scmp.ne.s32.totalorder %s153, %s167
      %p169 = scmp.eq.s32.totalorder %s24, 0
      %p170 = por %p168, %p169
      %s172 = sadd.s32 %s171, 1
      %p175 = scmp.eq.s32.totalorder %s18, 1
      %p176 = scmp.ne.s32.totalorder %s171, %s173
      %p177 = scmp.eq.s32.totalorder %s18, 0
      %p178 = por %p176, %p177
      %p179 = scmp.ne.s32.totalorder %s171, %s173
      %p180 = scmp.eq.s32.totalorder %s23, 1
      %p181 = por %p179, %p180
      %p182 = scmp.ne.s32.totalorder %s173, %s174
      %p183 = scmp.eq.s32.totalorder %s23, 0
      %p184 = por %p182, %p183
      %p185 = scmp.ne.s32.totalorder %s173, %s174
      %p186 = scmp.eq.s32.totalorder %s24, 1
      %p187 = por %p185, %p186
      %p189 = scmp.ne.s32.totalorder %s174, %s188
      %p190 = scmp.eq.s32.totalorder %s24, 0
      %p191 = por %p189, %p190
      %s193 = sadd.s32 %s192, 1
      %p196 = scmp.eq.s32.totalorder %s18, 1
      %p197 = scmp.ne.s32.totalorder %s192, %s194
      %p198 = scmp.eq.s32.totalorder %s18, 0
      %p199 = por %p197, %p198
      %p200 = scmp.ne.s32.totalorder %s192, %s194
      %p201 = scmp.eq.s32.totalorder %s23, 1
      %p202 = por %p200, %p201
      %p203 = scmp.ne.s32.totalorder %s194, %s195
      %p204 = scmp.eq.s32.totalorder %s23, 0
      %p205 = por %p203, %p204
      %p206 = scmp.ne.s32.totalorder %s194, %s195
      %p207 = scmp.eq.s32.totalorder %s24, 1
      %p208 = por %p206, %p207
      %p210 = scmp.ne.s32.totalorder %s195, %s209
      %p211 = scmp.eq.s32.totalorder %s24, 0
      %p212 = por %p210, %p211
      %s214 = sadd.s32 %s213, 1
      %p217 = scmp.eq.s32.totalorder %s18, 1
      %p218 = scmp.ne.s32.totalorder %s213, %s215
      %p219 = scmp.eq.s32.totalorder %s18, 0
      %p220 = por %p218, %p219
      %p221 = scmp.ne.s32.totalorder %s213, %s215
      %p222 = scmp.eq.s32.totalorder %s23, 1
      %p223 = por %p221, %p222
      %p224 = scmp.ne.s32.totalorder %s215, %s216
      %p225 = scmp.eq.s32.totalorder %s23, 0
      %p226 = por %p224, %p225
      %p227 = scmp.ne.s32.totalorder %s215, %s216
      %p228 = scmp.eq.s32.totalorder %s24, 1
      %p229 = por %p227, %p228
      %p231 = scmp.ne.s32.totalorder %s216, %s230
      %p232 = scmp.eq.s32.totalorder %s24, 0
      %p233 = por %p231, %p232
      %s234 = ssub.s32 %s25, %s37
      %s235 = ssub.s32 %s26, %s33
      %s236 = sor.u32 %s234, %s235
      %p237 = scmp.eq.s32.totalorder %s236, 0
      %s239 = sadd.s32 %s238, 1
      %s240 = scalar_select %p237, %s238, %s239
      %p243 = pneg %p237
      %p244 = scmp.eq.s32.totalorder %s18, 1
      %p245 = por %p243, %p244
      %p246 = scmp.ne.s32.totalorder %s238, %s241
      %p247 = scmp.eq.s32.totalorder %s18, 0
      %p248 = por %p246, %p247
      %p249 = scmp.ne.s32.totalorder %s238, %s241
      %p250 = scmp.eq.s32.totalorder %s23, 1
      %p251 = por %p249, %p250
      %p252 = scmp.ne.s32.totalorder %s241, %s242
      %p253 = scmp.eq.s32.totalorder %s23, 0
      %p254 = por %p252, %p253
      %p255 = scmp.ne.s32.totalorder %s241, %s242
      %p256 = scmp.eq.s32.totalorder %s24, 1
      %p257 = por %p255, %p256
      %p259 = scmp.ne.s32.totalorder %s242, %s258
      %p260 = scmp.eq.s32.totalorder %s24, 0
      %p261 = por %p259, %p260
      %p262 = scmp.le.s32.totalorder 1, %s18
      %p263 = scmp.lt.s32.totalorder %s18, 3
      %p264 = pnand %p262, %p263
      %p265 = pneg %p264
      // Predicated region
      $region9: #{_lambda_.5} parent=5 // pred_check
        _
      $region10: #{_lambda_.5} parent=5 // pred_check_branch
        %267 = sbr.rel (%p264) target = $region12
      $region11: #{_lambda_.5} parent=5 // pred_region
        %s268 = ssub.s32 %s18, 1
        // Predicated region
        $region13: #{_lambda_.5} parent=11 // pred_check
          %p269 = pneg %p79
        $region14: #{_lambda_.5} parent=11 // pred_check_branch
          %271 = sbr.rel (%p269) target = $region16
        $region15: #{_lambda_.5} parent=11 // pred_region
          _
        $region16: #{_lambda_.5} parent=11 // pred_fallthru
          _
        // Predicated region
        $region17: #{_lambda_.5} parent=11 // pred_check
          %p272 = pneg %p100
        $region18: #{_lambda_.5} parent=11 // pred_check_branch
          %274 = sbr.rel (%p272) target = $region20
        $region19: #{_lambda_.5} parent=11 // pred_region
          _
        $region20: #{_lambda_.5} parent=11 // pred_fallthru
          _
        // Predicated region
        $region21: #{_lambda_.5} parent=11 // pred_check
          %p275 = pneg %p121
        $region22: #{_lambda_.5} parent=11 // pred_check_branch
          %277 = sbr.rel (%p275) target = $region24
        $region23: #{_lambda_.5} parent=11 // pred_region
          _
        $region24: #{_lambda_.5} parent=11 // pred_fallthru
          _
        // Predicated region
        $region25: #{_lambda_.5} parent=11 // pred_check
          %p278 = pneg %p142
        $region26: #{_lambda_.5} parent=11 // pred_check_branch
          %280 = sbr.rel (%p278) target = $region28
        $region27: #{_lambda_.5} parent=11 // pred_region
          _
        $region28: #{_lambda_.5} parent=11 // pred_fallthru
          _
        // Predicated region
        $region29: #{_lambda_.5} parent=11 // pred_check
          %p281 = pneg %p163
        $region30: #{_lambda_.5} parent=11 // pred_check_branch
          %283 = sbr.rel (%p281) target = $region32
        $region31: #{_lambda_.5} parent=11 // pred_region
          _
        $region32: #{_lambda_.5} parent=11 // pred_fallthru
          _
        // Predicated region
        $region33: #{_lambda_.5} parent=11 // pred_check
          %p284 = pneg %p184
        $region34: #{_lambda_.5} parent=11 // pred_check_branch
          %286 = sbr.rel (%p284) target = $region36
        $region35: #{_lambda_.5} parent=11 // pred_region
          _
        $region36: #{_lambda_.5} parent=11 // pred_fallthru
          _
        // Predicated region
        $region37: #{_lambda_.5} parent=11 // pred_check
          %p287 = pneg %p205
        $region38: #{_lambda_.5} parent=11 // pred_check_branch
          %289 = sbr.rel (%p287) target = $region40
        $region39: #{_lambda_.5} parent=11 // pred_region
          _
        $region40: #{_lambda_.5} parent=11 // pred_fallthru
          _
        // Predicated region
        $region41: #{_lambda_.5} parent=11 // pred_check
          %p290 = pneg %p226
        $region42: #{_lambda_.5} parent=11 // pred_check_branch
          %292 = sbr.rel (%p290) target = $region44
        $region43: #{_lambda_.5} parent=11 // pred_region
          _
        $region44: #{_lambda_.5} parent=11 // pred_fallthru
          _
      $region12: #{_lambda_.5} parent=5 // pred_fallthru
        _
      %p293 = scmp.lt.s32.totalorder %s18, 2
      // Predicated region
      $region45: #{_lambda_.5} parent=5 // pred_check
        %p294 = pneg %p293
      $region46: #{_lambda_.5} parent=5 // pred_check_branch
        %296 = sbr.rel (%p294) target = $region48
      $region47: #{_lambda_.5} parent=5 // pred_region
        // Predicated region
        $region49: #{_lambda_.5} parent=47 // pred_check
          %p297 = pneg %p52
        $region50: #{_lambda_.5} parent=47 // pred_check_branch
          %299 = sbr.rel (%p297) target = $region52
        $region51: #{_lambda_.5} parent=47 // pred_region
          %p300 = scmp.lt.s32.totalorder %s25, 1
          %s301 = scalar_select %p300, %s25, 1
          %p302 = scmp.lt.s32.totalorder %s26, 0
          %s303 = scalar_select %p302, %s26, 0
          %s304 = sadd.s32 %s303, %s301
          %s305 = smul.addr %s304, 4
          %s306 = scalar_lea.vmem %s0, %s305
        $region52: #{_lambda_.5} parent=47 // pred_fallthru
          _
      $region48: #{_lambda_.5} parent=5 // pred_fallthru
        _
      %p307 = scmp.le.s32.totalorder 1, %s18
      %p308 = scmp.lt.s32.totalorder %s18, 3
      %p309 = pnand %p307, %p308
      %p310 = pneg %p309
      // Predicated region
      $region53: #{_lambda_.5} parent=5 // pred_check
        _
      $region54: #{_lambda_.5} parent=5 // pred_check_branch
        %312 = sbr.rel (%p309) target = $region56
      $region55: #{_lambda_.5} parent=5 // pred_region
        %s313 = ssub.s32 %s18, 1
        %p314 = scmp.lt.s32.totalorder %s27, 1
        %s315 = scalar_select %p314, %s27, 1
        %p316 = scmp.lt.s32.totalorder %s28, 0
        %s317 = scalar_select %p316, %s28, 0
        %s318 = sadd.s32 %s317, %s315
        %s319 = smul.addr %s318, 4
        %s320 = scalar_lea.vmem %s0, %s319
        %p321 = pneg %p58
        %p322 = pneg %p55
        %p323 = pneg %p79
        %p324 = pneg %p76
        %p325 = pneg %p100
        %p326 = pneg %p97
        %p327 = pneg %p121
        %p328 = pneg %p118
        %p329 = pneg %p142
        %p330 = pneg %p139
        %p331 = pneg %p163
        %p332 = pneg %p160
        %p333 = pneg %p184
        %p334 = pneg %p181
        %p335 = pneg %p205
        %p336 = pneg %p202
        %p337 = pneg %p226
        %p338 = pneg %p223
        %p339 = pneg %p254
        %p340 = pneg %p251
        %s341 = sand.u32 %s241, 1
        %s342 = scalar_lea.sflag [#allocation3], %s341
        %s343 = sand.u32 %s241, 1
        %s344 = smul.addr %s343, 4
        %s345 = scalar_lea.vmem [#allocation2], %s344
        %p346 = scmp.lt.s32.totalorder %s27, 1
        %s347 = scalar_select %p346, %s27, 1
        %p348 = scmp.lt.s32.totalorder %s28, 0
        %s349 = scalar_select %p348, %s28, 0
        %s350 = sadd.s32 %s349, %s347
        %s351 = smul.addr %s350, 4
        %s352 = scalar_lea.vmem %s0, %s351
        %s354 = smul.u32 %s28, 16
        %v355 = vld [vmem:[%s352] sm:$0xf]
        %v356 = vld [vmem:[%s3] sm:$0xf]
        %v357 = vld [vmem:[%s4] sm:$0xf]
        %s358 = ssub.s32 %s354, 16
        %v359 = vmul.f32 %v355, 0.018778928
        %v360 = vmul.f32 %v355, 0.004057933
        %v361 = vmul.f32 %v355, -0.11531475
        %363 = vrot.lane.b32.xlu0 %v361, 1
        %v364 = vpop.permute.xlu0 %363
        %v366 = vadd.f32 %v359, %v364
        %v367 = vmul.f32 %v355, -0.05108693
        %369 = vrot.lane.b32.xlu0 %v367, 1
        %v370 = vpop.permute.xlu0 %369
        %v372 = vadd.f32 %v360, %v370
        %v373 = vmul.f32 %v355, 0.8864196
        %375 = vrot.lane.b32.xlu0 %v373, 2
        %v376 = vpop.permute.xlu0 %375
        %v378 = vadd.f32 %v366, %v376
        %v379 = vmul.f32 %v355, 0.25714523
        %381 = vrot.lane.b32.xlu0 %v379, 2
        %v382 = vpop.permute.xlu0 %381
        %v384 = vadd.f32 %v372, %v382
        %385 = vrot.lane.b32.xlu0 %v379, 3
        %v386 = vpop.permute.xlu0 %385
        %v388 = vadd.f32 %v378, %v386
        %389 = vrot.lane.b32.xlu0 %v373, 3
        %v390 = vpop.permute.xlu0 %389
        %v392 = vadd.f32 %v384, %v390
        %393 = vrot.lane.b32.xlu0 %v367, 4
        %v394 = vpop.permute.xlu0 %393
        %v396 = vadd.f32 %v388, %v394
        %397 = vrot.lane.b32.xlu0 %v361, 4
        %v398 = vpop.permute.xlu0 %397
        %v400 = vadd.f32 %v392, %v398
        %402 = vrot.lane.b32.xlu0 %v360, 5
        %v403 = vpop.permute.xlu0 %402
        %v405 = vadd.f32 %v396, %v403
        %407 = vrot.lane.b32.xlu0 %v359, 5
        %v408 = vpop.permute.xlu0 %407
        %v410 = vadd.f32 %v400, %v408
        %412 = vset.pattern.permute.xlu0 0
        %413 = vperm.xlu0 %412, %v356
        %v414 = vpop.permute.xlu0 %413
        %v416 = vmul.f32 %v405, %v414
        %v417 = vand.u32 2147483647, %v416
        %vm418 = vcmp.le.f32.partialorder %v417, 0.7853982
        %vm419 = vcmp.lt.s32.totalorder %v416, 0
        %v420 = vand.u32 %v416, 2139095040
        %v421 = vshrl.u32 %v420, 23
        %v422 = vsub.s32 %v421, 127
        %v423 = vand.u32 2147483647, %v416
        %v424 = vand.u32 %v423, 8388607
        %v425 = vor.u32 %v424, 8388608
        %v426 = vsub.s32 0, %v425
        %v427 = vadd.s32 %v422, 1
        %vm428 = vcmp.gt.s32.totalorder %v427, 0
        %v429 = vsel %vm428, %v427, 0
        %v430 = vshrl.u32 %v429, 5
        %v431 = vand.u32 %v429, 31
        %v432 = vsub.s32 32, %v431
        %v433 = vshrl.u32 683565275, %v432
        %v434 = vshll.u32 683565275, %v431
        %v435 = vshrl.u32 2475754826, %v432
        %v436 = vor.u32 %v434, %v435
        %v437 = vshll.u32 2475754826, %v431
        %v438 = vshrl.u32 2131351028, %v432
        %v439 = vor.u32 %v437, %v438
        %v440 = vshll.u32 2131351028, %v431
        %v441 = vshrl.u32 2102212464, %v432
        %v442 = vor.u32 %v440, %v441
        %v443 = vshll.u32 2102212464, %v431
        %v444 = vshrl.u32 920167782, %v432
        %v445 = vor.u32 %v443, %v444
        %v446 = vshll.u32 920167782, %v431
        %v447 = vshrl.u32 1326507024, %v432
        %v448 = vor.u32 %v446, %v447
        %vm449 = vcmp.lt.s32.totalorder %v430, 1
        %vm450 = vcmp.lt.s32.totalorder %v430, 2
        %vm451 = vcmp.lt.s32.totalorder %v430, 3
        %vm452 = vcmp.lt.s32.totalorder %v430, 4
        %v453 = vsel %vm449, %v433, %v436
        %v454 = vsel %vm452, %v442, 2102212464
        %v455 = vsel %vm451, %v439, %v454
        %v456 = vsel %vm450, %v453, %v455
        %v457 = vsel %vm449, %v436, %v439
        %v458 = vsel %vm452, %v445, 920167782
        %v459 = vsel %vm451, %v442, %v458
        %v460 = vsel %vm450, %v457, %v459
        %v461 = vsel %vm449, %v439, %v442
        %v462 = vsel %vm452, %v448, 1326507024
        %v463 = vsel %vm451, %v445, %v462
        %v464 = vsel %vm450, %v461, %v463
        %v465 = vshll.u32 %v425, 8
        %v466 = vmul.u32.u64.compose %v465, %v464
        %v467 = vextract.low.u32 %v466
        %v468 = vextract.high.u32 %v466
        %v469 = vmul.u32.u64.compose %v465, %v460
        %v470 = vextract.low.u32 %v469
        %v471 = vextract.high.u32 %v469
        %v472 = vmul.u32 %v465, %v456
        %v473 = vadd.s32 %v468, %v470
        %vm474 = vc.u32 %v468, %v470
        %v475 = vadd.s32 %v471, 1
        %v476 = vsel %vm474, %v475, %v471
        %v477 = vadd.s32 %v472, %v476
        %v478 = vadd.s32 %v477, 536870912
        %v479 = vshrl.u32 %v478, 30
        %v480 = vshll.u32 %v479, 30
        %v481 = vsub.s32 %v477, %v480
        %vm482 = vcmp.lt.s32.totalorder %v481, 0
        %v483 = vsub.s32 0, %v481
        %v484 = vsel %vm482, %v483, %v481
        %v485 = vclz %v484
        %v486 = vsub.s32 %v485, 2
        %vm487 = vcmp.gt.s32.totalorder 0, %v486
        %v488 = vsel %vm487, 0, %v486
        %v489 = vsub.s32 32, %v488
        %v490 = vshll.u32 %v481, %v488
        %v491 = vshrl.u32 %v473, %v489
        %v492 = vor.u32 %v490, %v491
        %v493 = vsub.s32 4294967266, %v488
        %v494 = vadd.s32 %v493, 127
        %v495 = vshll.u32 %v494, 23
        %v496 = vor.u32 4788187, %v495
        %v497 = vand.u32 2147483647, %v496
        %v499 = vcvt.s32.f32 %v492
        %v500 = vmul.f32 %v499, %v497
        %v501 = vxor.u32 %v500, 2147483648
        %v502 = vsel %vm419, %v501, %v500
        %v503 = vsub.s32 4, %v479
        %v504 = vsel %vm419, %v503, %v479
        %v505 = vsel %vm418, %v416, %v502
        %v506 = vsel %vm418, 0, %v504
        %v507 = vcosq.f32.pop %v505
        %v508 = vsinq.f32.pop %v505
        %vm509 = vweird.f32 %v416
        %v510 = vadd.s32 %v506, 3
        %v511 = vand.u32 %v510, 3
        %vm512 = vcmp.lt.s32.totalorder %v511, 2
        %vm513 = vcmp.eq.s32.totalorder %v511, 0
        %v514 = vxor.u32 %v508, 2147483648
        %v515 = vsel %vm513, %v507, %v514
        %vm516 = vcmp.eq.s32.totalorder %v511, 2
        %v517 = vxor.u32 %v507, 2147483648
        %v518 = vsel %vm516, %v517, %v508
        %v519 = vsel %vm512, %v515, %v518
        %v520 = vsel %vm509, nan, %v519
        %v521 = vmul.f32 %v520, %v520
        %523 = vset.pattern.permute.xlu0 0
        %524 = vperm.xlu0 %523, %v357
        %v525 = vpop.permute.xlu0 %524
        %v527 = vmul.f32 %v525, %v521
        %v528 = vadd.f32 %v405, %v527
        %v529 = vmul.f32 %v410, %v414
        %v530 = vand.u32 2147483647, %v529
        %vm531 = vcmp.le.f32.partialorder %v530, 0.7853982
        %vm532 = vcmp.lt.s32.totalorder %v529, 0
        %v533 = vand.u32 %v529, 2139095040
        %v534 = vshrl.u32 %v533, 23
        %v535 = vsub.s32 %v534, 127
        %v536 = vand.u32 2147483647, %v529
        %v537 = vand.u32 %v536, 8388607
        %v538 = vor.u32 %v537, 8388608
        %v539 = vsub.s32 0, %v538
        %v540 = vadd.s32 %v535, 1
        %vm541 = vcmp.gt.s32.totalorder %v540, 0
        %v542 = vsel %vm541, %v540, 0
        %v543 = vshrl.u32 %v542, 5
        %v544 = vand.u32 %v542, 31
        %v545 = vsub.s32 32, %v544
        %v546 = vshrl.u32 683565275, %v545
        %v547 = vshll.u32 683565275, %v544
        %v548 = vshrl.u32 2475754826, %v545
        %v549 = vor.u32 %v547, %v548
        %v550 = vshll.u32 2475754826, %v544
        %v551 = vshrl.u32 2131351028, %v545
        %v552 = vor.u32 %v550, %v551
        %v553 = vshll.u32 2131351028, %v544
        %v554 = vshrl.u32 2102212464, %v545
        %v555 = vor.u32 %v553, %v554
        %v556 = vshll.u32 2102212464, %v544
        %v557 = vshrl.u32 920167782, %v545
        %v558 = vor.u32 %v556, %v557
        %v559 = vshll.u32 920167782, %v544
        %v560 = vshrl.u32 1326507024, %v545
        %v561 = vor.u32 %v559, %v560
        %vm562 = vcmp.lt.s32.totalorder %v543, 1
        %vm563 = vcmp.lt.s32.totalorder %v543, 2
        %vm564 = vcmp.lt.s32.totalorder %v543, 3
        %vm565 = vcmp.lt.s32.totalorder %v543, 4
        %v566 = vsel %vm562, %v546, %v549
        %v567 = vsel %vm565, %v555, 2102212464
        %v568 = vsel %vm564, %v552, %v567
        %v569 = vsel %vm563, %v566, %v568
        %v570 = vsel %vm562, %v549, %v552
        %v571 = vsel %vm565, %v558, 920167782
        %v572 = vsel %vm564, %v555, %v571
        %v573 = vsel %vm563, %v570, %v572
        %v574 = vsel %vm562, %v552, %v555
        %v575 = vsel %vm565, %v561, 1326507024
        %v576 = vsel %vm564, %v558, %v575
        %v577 = vsel %vm563, %v574, %v576
        %v578 = vshll.u32 %v538, 8
        %v579 = vmul.u32.u64.compose %v578, %v577
        %v580 = vextract.low.u32 %v579
        %v581 = vextract.high.u32 %v579
        %v582 = vmul.u32.u64.compose %v578, %v573
        %v583 = vextract.low.u32 %v582
        %v584 = vextract.high.u32 %v582
        %v585 = vmul.u32 %v578, %v569
        %v586 = vadd.s32 %v581, %v583
        %vm587 = vc.u32 %v581, %v583
        %v588 = vadd.s32 %v584, 1
        %v589 = vsel %vm587, %v588, %v584
        %v590 = vadd.s32 %v585, %v589
        %v591 = vadd.s32 %v590, 536870912
        %v592 = vshrl.u32 %v591, 30
        %v593 = vshll.u32 %v592, 30
        %v594 = vsub.s32 %v590, %v593
        %vm595 = vcmp.lt.s32.totalorder %v594, 0
        %v596 = vsub.s32 0, %v594
        %v597 = vsel %vm595, %v596, %v594
        %v598 = vclz %v597
        %v599 = vsub.s32 %v598, 2
        %vm600 = vcmp.gt.s32.totalorder 0, %v599
        %v601 = vsel %vm600, 0, %v599
        %v602 = vsub.s32 32, %v601
        %v603 = vshll.u32 %v594, %v601
        %v604 = vshrl.u32 %v586, %v602
        %v605 = vor.u32 %v603, %v604
        %v606 = vsub.s32 4294967266, %v601
        %v607 = vadd.s32 %v606, 127
        %v608 = vshll.u32 %v607, 23
        %v609 = vor.u32 4788187, %v608
        %v610 = vand.u32 2147483647, %v609
        %v612 = vcvt.s32.f32 %v605
        %v613 = vmul.f32 %v612, %v610
        %v614 = vxor.u32 %v613, 2147483648
        %v615 = vsel %vm532, %v614, %v613
        %v616 = vsub.s32 4, %v592
        %v617 = vsel %vm532, %v616, %v592
        %v618 = vsel %vm531, %v529, %v615
        %v619 = vsel %vm531, 0, %v617
        %v620 = vcosq.f32.pop %v618
        %v621 = vsinq.f32.pop %v618
        %vm622 = vweird.f32 %v529
        %v623 = vadd.s32 %v619, 3
        %v624 = vand.u32 %v623, 3
        %vm625 = vcmp.lt.s32.totalorder %v624, 2
        %vm626 = vcmp.eq.s32.totalorder %v624, 0
        %v627 = vxor.u32 %v621, 2147483648
        %v628 = vsel %vm626, %v620, %v627
        %vm629 = vcmp.eq.s32.totalorder %v624, 2
        %v630 = vxor.u32 %v620, 2147483648
        %v631 = vsel %vm629, %v630, %v621
        %v632 = vsel %vm625, %v628, %v631
        %v633 = vsel %vm622, nan, %v632
        %v634 = vmul.f32 %v633, %v633
        %v635 = vmul.f32 %v525, %v634
        %v636 = vadd.f32 %v410, %v635
        %s637 = ssub.s32 %s354, 22
        %v638 = vlaneseq
        %v639 = vand.u32 %v638, 127
        %v640 = vstv %s637
        %v641 = vadd.s32 %v639, %v640
        %vm642 = vcmp.ge.s32.totalorder %v641, 0
        %644 = vrot.lane.b32.xlu0 %v636, 123
        %v645 = vpop.permute.xlu0 %644
        %v647 = vsel %vm642, %v645, 0.0
        %v648 = vmul.f32 %v528, 0.009389464
        %v649 = vmul.f32 %v647, 0.0020289666
        %651 = vrot.lane.b32.xlu0 %v649, 5
        %v652 = vpop.permute.xlu0 %651
        %v654 = vadd.f32 %v648, %v652
        %v655 = vmul.f32 %v528, -0.057657376
        %657 = vrot.lane.b32.xlu0 %v655, 127
        %v658 = vpop.permute.xlu0 %657
        %v660 = vadd.f32 %v654, %v658
        %v661 = vmul.f32 %v647, -0.025543464
        %663 = vrot.lane.b32.xlu0 %v661, 4
        %v664 = vpop.permute.xlu0 %663
        %v666 = vadd.f32 %v660, %v664
        %v667 = vmul.f32 %v528, 0.4432098
        %669 = vrot.lane.b32.xlu0 %v667, 126
        %v670 = vpop.permute.xlu0 %669
        %v672 = vadd.f32 %v666, %v670
        %v673 = vmul.f32 %v647, 0.12857261
        %675 = vrot.lane.b32.xlu0 %v673, 3
        %v676 = vpop.permute.xlu0 %675
        %v678 = vadd.f32 %v672, %v676
        %v679 = vmul.f32 %v528, 0.12857261
        %681 = vrot.lane.b32.xlu0 %v679, 125
        %v682 = vpop.permute.xlu0 %681
        %v684 = vadd.f32 %v678, %v682
        %v685 = vmul.f32 %v647, 0.4432098
        %687 = vrot.lane.b32.xlu0 %v685, 2
        %v688 = vpop.permute.xlu0 %687
        %v690 = vadd.f32 %v684, %v688
        %v691 = vmul.f32 %v528, -0.025543464
        %693 = vrot.lane.b32.xlu0 %v691, 124
        %v694 = vpop.permute.xlu0 %693
        %v696 = vadd.f32 %v690, %v694
        %v697 = vmul.f32 %v647, -0.057657376
        %699 = vrot.lane.b32.xlu0 %v697, 1
        %v700 = vpop.permute.xlu0 %699
        %v702 = vadd.f32 %v696, %v700
        %v703 = vmul.f32 %v528, 0.0020289666
        %705 = vrot.lane.b32.xlu0 %v703, 123
        %v706 = vpop.permute.xlu0 %705
        %v708 = vadd.f32 %v702, %v706
        %v709 = vmul.f32 %v647, 0.009389464
        %v710 = vadd.f32 %v708, %v709
        %v711 = vstv %s358
        %v712 = vadd.s32 %v639, %v711
        %vm713 = vcmp.lt.s32.totalorder %v712, 16
        %715 = vrot.lane.b32.xlu0 %v710, 123
        %v716 = vpop.permute.xlu0 %715
        %v718 = vsel %vm713, %v716, 0.0
        %v719 = vld [vmem:[%s1] sm:$0x3]
        %v720 = vld [vmem:[%s2] sm:$0xf]
        %v721 = vpack.c.bf16 %v718, %v718
        %v724 = vunpack.c.l.s4 1983009808
        %v725 = vunpack.c.0.s8 %v724
        %v726 = vlaneseq
        %v727 = vshrl.u32 %v726, 7
        %v728 = vsub.s32 %v725, %v727
        %v729 = vrot.slane %v719, %v728
        %730 = vrot.lane.b32.xlu0 %v729, 124
        %v731 = vpop.permute.xlu0 %730
        %733 = vrot.lane.b32.xlu0 %v721, 123
        %v734 = vpop.permute.xlu0 %733
        %vm735 = vcmask 31744
        %v737 = vsel %vm735, %v731, 0
        %vm739 = vcmask 1041408
        %v741 = vsel %vm739, %v734, 0
        %743 = vmatprep.subr.bf16.mxu0 0
        %744 = vmatpush1.bf16.msra.mxu0 %v741
        %745 = vmatprep.subr.bf16.mxu0 0
        %746 = vmatpush1.bf16.msra.mxu0 0
        %747 = vmatprep.subr.bf16.mxu0 0
        %748 = vmatpush1.bf16.msra.mxu0 0
        %749 = vmatprep.subr.bf16.mxu0 0
        %750 = vmatpush1.bf16.msra.mxu0 0
        %751 = vmatprep.subr.bf16.mxu0 0
        %752 = vmatpush1.bf16.msra.mxu0 0
        %753 = vmatprep.subr.bf16.mxu0 0
        %754 = vmatpush1.bf16.msra.mxu0 0
        %755 = vmatprep.subr.bf16.mxu0 0
        %756 = vmatpush1.bf16.msra.mxu0 0
        %757 = vmatprep.subr.bf16.mxu0 0
        %758 = vmatpush1.bf16.msra.mxu0 0
        %759 = vmatprep.subr.bf16.mxu0 0
        %760 = vmatpush1.bf16.msra.mxu0 0
        %761 = vmatprep.subr.bf16.mxu0 0
        %762 = vmatpush1.bf16.msra.mxu0 0
        %763 = vmatprep.subr.bf16.mxu0 0
        %764 = vmatpush1.bf16.msra.mxu0 0
        %765 = vmatprep.subr.bf16.mxu0 0
        %766 = vmatpush1.bf16.msra.mxu0 0
        %767 = vmatprep.subr.bf16.mxu0 0
        %768 = vmatpush1.bf16.msra.mxu0 0
        %769 = vmatprep.subr.bf16.mxu0 0
        %770 = vmatpush1.bf16.msra.mxu0 0
        %771 = vmatprep.subr.bf16.mxu0 0
        %772 = vmatpush1.bf16.msra.mxu0 0
        %773 = vmatprep.subr.bf16.mxu0 0
        %774 = vmatpush1.bf16.msra.mxu0 0
        %775 = vmatprep.mubr.bf16.mxu0 0
        %776 = vmatmul.mubr.bf16.gmra.mrb[0].mxu0 %v737
        %v777 = vpop.f32.mrb[0].mxu0
        %v778 = vadd.f32 0.0, %v777
        %v779 = vpop.f32.mrb[0].mxu0
        %v780 = vpop.f32.mrb[0].mxu0
        %v781 = vpop.f32.mrb[0].mxu0
        %782 = vdwg.mxu0
        %v784 = vsel %vm735, %v719, 0
        %v787 = vsel %vm739, %v721, 0
        %789 = vmatprep.subr.bf16.mxu0 0
        %790 = vmatpush1.bf16.msra.mxu0 %v787
        %791 = vmatprep.subr.bf16.mxu0 0
        %792 = vmatpush1.bf16.msra.mxu0 0
        %793 = vmatprep.subr.bf16.mxu0 0
        %794 = vmatpush1.bf16.msra.mxu0 0
        %795 = vmatprep.subr.bf16.mxu0 0
        %796 = vmatpush1.bf16.msra.mxu0 0
        %797 = vmatprep.subr.bf16.mxu0 0
        %798 = vmatpush1.bf16.msra.mxu0 0
        %799 = vmatprep.subr.bf16.mxu0 0
        %800 = vmatpush1.bf16.msra.mxu0 0
        %801 = vmatprep.subr.bf16.mxu0 0
        %802 = vmatpush1.bf16.msra.mxu0 0
        %803 = vmatprep.subr.bf16.mxu0 0
        %804 = vmatpush1.bf16.msra.mxu0 0
        %805 = vmatprep.subr.bf16.mxu0 0
        %806 = vmatpush1.bf16.msra.mxu0 0
        %807 = vmatprep.subr.bf16.mxu0 0
        %808 = vmatpush1.bf16.msra.mxu0 0
        %809 = vmatprep.subr.bf16.mxu0 0
        %810 = vmatpush1.bf16.msra.mxu0 0
        %811 = vmatprep.subr.bf16.mxu0 0
        %812 = vmatpush1.bf16.msra.mxu0 0
        %813 = vmatprep.subr.bf16.mxu0 0
        %814 = vmatpush1.bf16.msra.mxu0 0
        %815 = vmatprep.subr.bf16.mxu0 0
        %816 = vmatpush1.bf16.msra.mxu0 0
        %817 = vmatprep.subr.bf16.mxu0 0
        %818 = vmatpush1.bf16.msra.mxu0 0
        %819 = vmatprep.subr.bf16.mxu0 0
        %820 = vmatpush1.bf16.msra.mxu0 0
        %821 = vmatprep.mubr.bf16.mxu0 0
        %822 = vmatmul.mubr.bf16.gmra.mrb[0].mxu0 %v784
        %v823 = vpop.f32.mrb[0].mxu0
        %v824 = vadd.f32 %v778, %v823
        %v825 = vpop.f32.mrb[0].mxu0
        %v826 = vpop.f32.mrb[0].mxu0
        %v827 = vpop.f32.mrb[0].mxu0
        %828 = vdwg.mxu0
        %829 = vrot.lane.b32.xlu0 %v729, 120
        %v830 = vpop.permute.xlu0 %829
        %831 = vrot.lane.b32.xlu0 %v721, 118
        %v832 = vpop.permute.xlu0 %831
        %v834 = vsel %vm735, %v830, 0
        %v837 = vsel %vm739, %v832, 0
        %839 = vmatprep.subr.bf16.mxu0 0
        %840 = vmatpush1.bf16.msra.mxu0 %v837
        %841 = vmatprep.subr.bf16.mxu0 0
        %842 = vmatpush1.bf16.msra.mxu0 0
        %843 = vmatprep.subr.bf16.mxu0 0
        %844 = vmatpush1.bf16.msra.mxu0 0
        %845 = vmatprep.subr.bf16.mxu0 0
        %846 = vmatpush1.bf16.msra.mxu0 0
        %847 = vmatprep.subr.bf16.mxu0 0
        %848 = vmatpush1.bf16.msra.mxu0 0
        %849 = vmatprep.subr.bf16.mxu0 0
        %850 = vmatpush1.bf16.msra.mxu0 0
        %851 = vmatprep.subr.bf16.mxu0 0
        %852 = vmatpush1.bf16.msra.mxu0 0
        %853 = vmatprep.subr.bf16.mxu0 0
        %854 = vmatpush1.bf16.msra.mxu0 0
        %855 = vmatprep.subr.bf16.mxu0 0
        %856 = vmatpush1.bf16.msra.mxu0 0
        %857 = vmatprep.subr.bf16.mxu0 0
        %858 = vmatpush1.bf16.msra.mxu0 0
        %859 = vmatprep.subr.bf16.mxu0 0
        %860 = vmatpush1.bf16.msra.mxu0 0
        %861 = vmatprep.subr.bf16.mxu0 0
        %862 = vmatpush1.bf16.msra.mxu0 0
        %863 = vmatprep.subr.bf16.mxu0 0
        %864 = vmatpush1.bf16.msra.mxu0 0
        %865 = vmatprep.subr.bf16.mxu0 0
        %866 = vmatpush1.bf16.msra.mxu0 0
        %867 = vmatprep.subr.bf16.mxu0 0
        %868 = vmatpush1.bf16.msra.mxu0 0
        %869 = vmatprep.subr.bf16.mxu0 0
        %870 = vmatpush1.bf16.msra.mxu0 0
        %871 = vmatprep.mubr.bf16.mxu0 0
        %872 = vmatmul.mubr.bf16.gmra.mrb[0].mxu0 %v834
        %v873 = vpop.f32.mrb[0].mxu0
        %v874 = vadd.f32 0.0, %v873
        %v875 = vpop.f32.mrb[0].mxu0
        %v876 = vpop.f32.mrb[0].mxu0
        %v877 = vpop.f32.mrb[0].mxu0
        %878 = vdwg.mxu0
        %v879 = vadd.f32 %v824, %v874
        %881 = vset.pattern.permute.xlu0 0
        %882 = vperm.xlu0 %881, %v720
        %v883 = vpop.permute.xlu0 %882
        %v885 = vadd.f32 %v879, %v883
        %s886 = ssub.s32 %s354, 11
        %v887 = vstv %s886
        %v888 = vadd.s32 %v639, %v887
        %vm889 = vcmp.ge.s32.totalorder %v888, 0
        %v890 = vsel %vm889, %v885, 0.0
        %v891 = vld [vmem:[%s7] sm:$0xf]
        %v892 = vld [vmem:[%s8] sm:$0xf]
        %s893 = ssub.s32 %s354, 1
        %v894 = vmul.f32 %v890, 0.018778928
        %v895 = vmul.f32 %v890, 0.004057933
        %v896 = vmul.f32 %v890, -0.11531475
        %898 = vrot.lane.b32.xlu0 %v896, 1
        %v899 = vpop.permute.xlu0 %898
        %v901 = vadd.f32 %v894, %v899
        %v902 = vmul.f32 %v890, -0.05108693
        %904 = vrot.lane.b32.xlu0 %v902, 1
        %v905 = vpop.permute.xlu0 %904
        %v907 = vadd.f32 %v895, %v905
        %v908 = vmul.f32 %v890, 0.8864196
        %910 = vrot.lane.b32.xlu0 %v908, 2
        %v911 = vpop.permute.xlu0 %910
        %v913 = vadd.f32 %v901, %v911
        %v914 = vmul.f32 %v890, 0.25714523
        %916 = vrot.lane.b32.xlu0 %v914, 2
        %v917 = vpop.permute.xlu0 %916
        %v919 = vadd.f32 %v907, %v917
        %920 = vrot.lane.b32.xlu0 %v914, 3
        %v921 = vpop.permute.xlu0 %920
        %v923 = vadd.f32 %v913, %v921
        %924 = vrot.lane.b32.xlu0 %v908, 3
        %v925 = vpop.permute.xlu0 %924
        %v927 = vadd.f32 %v919, %v925
        %928 = vrot.lane.b32.xlu0 %v902, 4
        %v929 = vpop.permute.xlu0 %928
        %v931 = vadd.f32 %v923, %v929
        %932 = vrot.lane.b32.xlu0 %v896, 4
        %v933 = vpop.permute.xlu0 %932
        %v935 = vadd.f32 %v927, %v933
        %937 = vrot.lane.b32.xlu0 %v895, 5
        %v938 = vpop.permute.xlu0 %937
        %v940 = vadd.f32 %v931, %v938
        %942 = vrot.lane.b32.xlu0 %v894, 5
        %v943 = vpop.permute.xlu0 %942
        %v945 = vadd.f32 %v935, %v943
        %947 = vset.pattern.permute.xlu0 0
        %948 = vperm.xlu0 %947, %v891
        %v949 = vpop.permute.xlu0 %948
        %v951 = vmul.f32 %v940, %v949
        %v952 = vand.u32 2147483647, %v951
        %vm953 = vcmp.le.f32.partialorder %v952, 0.7853982
        %vm954 = vcmp.lt.s32.totalorder %v951, 0
        %v955 = vand.u32 %v951, 2139095040
        %v956 = vshrl.u32 %v955, 23
        %v957 = vsub.s32 %v956, 127
        %v958 = vand.u32 2147483647, %v951
        %v959 = vand.u32 %v958, 8388607
        %v960 = vor.u32 %v959, 8388608
        %v961 = vsub.s32 0, %v960
        %v962 = vadd.s32 %v957, 1
        %vm963 = vcmp.gt.s32.totalorder %v962, 0
        %v964 = vsel %vm963, %v962, 0
        %v965 = vshrl.u32 %v964, 5
        %v966 = vand.u32 %v964, 31
        %v967 = vsub.s32 32, %v966
        %v968 = vshrl.u32 683565275, %v967
        %v969 = vshll.u32 683565275, %v966
        %v970 = vshrl.u32 2475754826, %v967
        %v971 = vor.u32 %v969, %v970
        %v972 = vshll.u32 2475754826, %v966
        %v973 = vshrl.u32 2131351028, %v967
        %v974 = vor.u32 %v972, %v973
        %v975 = vshll.u32 2131351028, %v966
        %v976 = vshrl.u32 2102212464, %v967
        %v977 = vor.u32 %v975, %v976
        %v978 = vshll.u32 2102212464, %v966
        %v979 = vshrl.u32 920167782, %v967
        %v980 = vor.u32 %v978, %v979
        %v981 = vshll.u32 920167782, %v966
        %v982 = vshrl.u32 1326507024, %v967
        %v983 = vor.u32 %v981, %v982
        %vm984 = vcmp.lt.s32.totalorder %v965, 1
        %vm985 = vcmp.lt.s32.totalorder %v965, 2
        %vm986 = vcmp.lt.s32.totalorder %v965, 3
        %vm987 = vcmp.lt.s32.totalorder %v965, 4
        %v988 = vsel %vm984, %v968, %v971
        %v989 = vsel %vm987, %v977, 2102212464
        %v990 = vsel %vm986, %v974, %v989
        %v991 = vsel %vm985, %v988, %v990
        %v992 = vsel %vm984, %v971, %v974
        %v993 = vsel %vm987, %v980, 920167782
        %v994 = vsel %vm986, %v977, %v993
        %v995 = vsel %vm985, %v992, %v994
        %v996 = vsel %vm984, %v974, %v977
        %v997 = vsel %vm987, %v983, 1326507024
        %v998 = vsel %vm986, %v980, %v997
        %v999 = vsel %vm985, %v996, %v998
        %v1000 = vshll.u32 %v960, 8
        %v1001 = vmul.u32.u64.compose %v1000, %v999
        %v1002 = vextract.low.u32 %v1001
        %v1003 = vextract.high.u32 %v1001
        %v1004 = vmul.u32.u64.compose %v1000, %v995
        %v1005 = vextract.low.u32 %v1004
        %v1006 = vextract.high.u32 %v1004
        %v1007 = vmul.u32 %v1000, %v991
        %v1008 = vadd.s32 %v1003, %v1005
        %vm1009 = vc.u32 %v1003, %v1005
        %v1010 = vadd.s32 %v1006, 1
        %v1011 = vsel %vm1009, %v1010, %v1006
        %v1012 = vadd.s32 %v1007, %v1011
        %v1013 = vadd.s32 %v1012, 536870912
        %v1014 = vshrl.u32 %v1013, 30
        %v1015 = vshll.u32 %v1014, 30
        %v1016 = vsub.s32 %v1012, %v1015
        %vm1017 = vcmp.lt.s32.totalorder %v1016, 0
        %v1018 = vsub.s32 0, %v1016
        %v1019 = vsel %vm1017, %v1018, %v1016
        %v1020 = vclz %v1019
        %v1021 = vsub.s32 %v1020, 2
        %vm1022 = vcmp.gt.s32.totalorder 0, %v1021
        %v1023 = vsel %vm1022, 0, %v1021
        %v1024 = vsub.s32 32, %v1023
        %v1025 = vshll.u32 %v1016, %v1023
        %v1026 = vshrl.u32 %v1008, %v1024
        %v1027 = vor.u32 %v1025, %v1026
        %v1028 = vsub.s32 4294967266, %v1023
        %v1029 = vadd.s32 %v1028, 127
        %v1030 = vshll.u32 %v1029, 23
        %v1031 = vor.u32 4788187, %v1030
        %v1032 = vand.u32 2147483647, %v1031
        %v1034 = vcvt.s32.f32 %v1027
        %v1035 = vmul.f32 %v1034, %v1032
        %v1036 = vxor.u32 %v1035, 2147483648
        %v1037 = vsel %vm954, %v1036, %v1035
        %v1038 = vsub.s32 4, %v1014
        %v1039 = vsel %vm954, %v1038, %v1014
        %v1040 = vsel %vm953, %v951, %v1037
        %v1041 = vsel %vm953, 0, %v1039
        %v1042 = vcosq.f32.pop %v1040
        %v1043 = vsinq.f32.pop %v1040
        %vm1044 = vweird.f32 %v951
        %v1045 = vadd.s32 %v1041, 3
        %v1046 = vand.u32 %v1045, 3
        %vm1047 = vcmp.lt.s32.totalorder %v1046, 2
        %vm1048 = vcmp.eq.s32.totalorder %v1046, 0
        %v1049 = vxor.u32 %v1043, 2147483648
        %v1050 = vsel %vm1048, %v1042, %v1049
        %vm1051 = vcmp.eq.s32.totalorder %v1046, 2
        %v1052 = vxor.u32 %v1042, 2147483648
        %v1053 = vsel %vm1051, %v1052, %v1043
        %v1054 = vsel %vm1047, %v1050, %v1053
        %v1055 = vsel %vm1044, nan, %v1054
        %v1056 = vmul.f32 %v1055, %v1055
        %1058 = vset.pattern.permute.xlu0 0
        %1059 = vperm.xlu0 %1058, %v892
        %v1060 = vpop.permute.xlu0 %1059
        %v1062 = vmul.f32 %v1060, %v1056
        %v1063 = vadd.f32 %v940, %v1062
        %v1064 = vmul.f32 %v945, %v949
        %v1065 = vand.u32 2147483647, %v1064
        %vm1066 = vcmp.le.f32.partialorder %v1065, 0.7853982
        %vm1067 = vcmp.lt.s32.totalorder %v1064, 0
        %v1068 = vand.u32 %v1064, 2139095040
        %v1069 = vshrl.u32 %v1068, 23
        %v1070 = vsub.s32 %v1069, 127
        %v1071 = vand.u32 2147483647, %v1064
        %v1072 = vand.u32 %v1071, 8388607
        %v1073 = vor.u32 %v1072, 8388608
        %v1074 = vsub.s32 0, %v1073
        %v1075 = vadd.s32 %v1070, 1
        %vm1076 = vcmp.gt.s32.totalorder %v1075, 0
        %v1077 = vsel %vm1076, %v1075, 0
        %v1078 = vshrl.u32 %v1077, 5
        %v1079 = vand.u32 %v1077, 31
        %v1080 = vsub.s32 32, %v1079
        %v1081 = vshrl.u32 683565275, %v1080
        %v1082 = vshll.u32 683565275, %v1079
        %v1083 = vshrl.u32 2475754826, %v1080
        %v1084 = vor.u32 %v1082, %v1083
        %v1085 = vshll.u32 2475754826, %v1079
        %v1086 = vshrl.u32 2131351028, %v1080
        %v1087 = vor.u32 %v1085, %v1086
        %v1088 = vshll.u32 2131351028, %v1079
        %v1089 = vshrl.u32 2102212464, %v1080
        %v1090 = vor.u32 %v1088, %v1089
        %v1091 = vshll.u32 2102212464, %v1079
        %v1092 = vshrl.u32 920167782, %v1080
        %v1093 = vor.u32 %v1091, %v1092
        %v1094 = vshll.u32 920167782, %v1079
        %v1095 = vshrl.u32 1326507024, %v1080
        %v1096 = vor.u32 %v1094, %v1095
        %vm1097 = vcmp.lt.s32.totalorder %v1078, 1
        %vm1098 = vcmp.lt.s32.totalorder %v1078, 2
        %vm1099 = vcmp.lt.s32.totalorder %v1078, 3
        %vm1100 = vcmp.lt.s32.totalorder %v1078, 4
        %v1101 = vsel %vm1097, %v1081, %v1084
        %v1102 = vsel %vm1100, %v1090, 2102212464
        %v1103 = vsel %vm1099, %v1087, %v1102
        %v1104 = vsel %vm1098, %v1101, %v1103
        %v1105 = vsel %vm1097, %v1084, %v1087
        %v1106 = vsel %vm1100, %v1093, 920167782
        %v1107 = vsel %vm1099, %v1090, %v1106
        %v1108 = vsel %vm1098, %v1105, %v1107
        %v1109 = vsel %vm1097, %v1087, %v1090
        %v1110 = vsel %vm1100, %v1096, 1326507024
        %v1111 = vsel %vm1099, %v1093, %v1110
        %v1112 = vsel %vm1098, %v1109, %v1111
        %v1113 = vshll.u32 %v1073, 8
        %v1114 = vmul.u32.u64.compose %v1113, %v1112
        %v1115 = vextract.low.u32 %v1114
        %v1116 = vextract.high.u32 %v1114
        %v1117 = vmul.u32.u64.compose %v1113, %v1108
        %v1118 = vextract.low.u32 %v1117
        %v1119 = vextract.high.u32 %v1117
        %v1120 = vmul.u32 %v1113, %v1104
        %v1121 = vadd.s32 %v1116, %v1118
        %vm1122 = vc.u32 %v1116, %v1118
        %v1123 = vadd.s32 %v1119, 1
        %v1124 = vsel %vm1122, %v1123, %v1119
        %v1125 = vadd.s32 %v1120, %v1124
        %v1126 = vadd.s32 %v1125, 536870912
        %v1127 = vshrl.u32 %v1126, 30
        %v1128 = vshll.u32 %v1127, 30
        %v1129 = vsub.s32 %v1125, %v1128
        %vm1130 = vcmp.lt.s32.totalorder %v1129, 0
        %v1131 = vsub.s32 0, %v1129
        %v1132 = vsel %vm1130, %v1131, %v1129
        %v1133 = vclz %v1132
        %v1134 = vsub.s32 %v1133, 2
        %vm1135 = vcmp.gt.s32.totalorder 0, %v1134
        %v1136 = vsel %vm1135, 0, %v1134
        %v1137 = vsub.s32 32, %v1136
        %v1138 = vshll.u32 %v1129, %v1136
        %v1139 = vshrl.u32 %v1121, %v1137
        %v1140 = vor.u32 %v1138, %v1139
        %v1141 = vsub.s32 4294967266, %v1136
        %v1142 = vadd.s32 %v1141, 127
        %v1143 = vshll.u32 %v1142, 23
        %v1144 = vor.u32 4788187, %v1143
        %v1145 = vand.u32 2147483647, %v1144
        %v1147 = vcvt.s32.f32 %v1140
        %v1148 = vmul.f32 %v1147, %v1145
        %v1149 = vxor.u32 %v1148, 2147483648
        %v1150 = vsel %vm1067, %v1149, %v1148
        %v1151 = vsub.s32 4, %v1127
        %v1152 = vsel %vm1067, %v1151, %v1127
        %v1153 = vsel %vm1066, %v1064, %v1150
        %v1154 = vsel %vm1066, 0, %v1152
        %v1155 = vcosq.f32.pop %v1153
        %v1156 = vsinq.f32.pop %v1153
        %vm1157 = vweird.f32 %v1064
        %v1158 = vadd.s32 %v1154, 3
        %v1159 = vand.u32 %v1158, 3
        %vm1160 = vcmp.lt.s32.totalorder %v1159, 2
        %vm1161 = vcmp.eq.s32.totalorder %v1159, 0
        %v1162 = vxor.u32 %v1156, 2147483648
        %v1163 = vsel %vm1161, %v1155, %v1162
        %vm1164 = vcmp.eq.s32.totalorder %v1159, 2
        %v1165 = vxor.u32 %v1155, 2147483648
        %v1166 = vsel %vm1164, %v1165, %v1156
        %v1167 = vsel %vm1160, %v1163, %v1166
        %v1168 = vsel %vm1157, nan, %v1167
        %v1169 = vmul.f32 %v1168, %v1168
        %v1170 = vmul.f32 %v1060, %v1169
        %v1171 = vadd.f32 %v945, %v1170
        %s1172 = ssub.s32 %s354, 7
        %v1173 = vstv %s1172
        %v1174 = vadd.s32 %v639, %v1173
        %vm1175 = vcmp.ge.s32.totalorder %v1174, 0
        %1177 = vrot.lane.b32.xlu0 %v1171, 123
        %v1178 = vpop.permute.xlu0 %1177
        %v1180 = vsel %vm1175, %v1178, 0.0
        %v1181 = vmul.f32 %v1063, 0.009389464
        %v1182 = vmul.f32 %v1180, 0.0020289666
        %1184 = vrot.lane.b32.xlu0 %v1182, 5
        %v1185 = vpop.permute.xlu0 %1184
        %v1187 = vadd.f32 %v1181, %v1185
        %v1188 = vmul.f32 %v1063, -0.057657376
        %1190 = vrot.lane.b32.xlu0 %v1188, 127
        %v1191 = vpop.permute.xlu0 %1190
        %v1193 = vadd.f32 %v1187, %v1191
        %v1194 = vmul.f32 %v1180, -0.025543464
        %1196 = vrot.lane.b32.xlu0 %v1194, 4
        %v1197 = vpop.permute.xlu0 %1196
        %v1199 = vadd.f32 %v1193, %v1197
        %v1200 = vmul.f32 %v1063, 0.4432098
        %1202 = vrot.lane.b32.xlu0 %v1200, 126
        %v1203 = vpop.permute.xlu0 %1202
        %v1205 = vadd.f32 %v1199, %v1203
        %v1206 = vmul.f32 %v1180, 0.12857261
        %1208 = vrot.lane.b32.xlu0 %v1206, 3
        %v1209 = vpop.permute.xlu0 %1208
        %v1211 = vadd.f32 %v1205, %v1209
        %v1212 = vmul.f32 %v1063, 0.12857261
        %1214 = vrot.lane.b32.xlu0 %v1212, 125
        %v1215 = vpop.permute.xlu0 %1214
        %v1217 = vadd.f32 %v1211, %v1215
        %v1218 = vmul.f32 %v1180, 0.4432098
        %1220 = vrot.lane.b32.xlu0 %v1218, 2
        %v1221 = vpop.permute.xlu0 %1220
        %v1223 = vadd.f32 %v1217, %v1221
        %v1224 = vmul.f32 %v1063, -0.025543464
        %1226 = vrot.lane.b32.xlu0 %v1224, 124
        %v1227 = vpop.permute.xlu0 %1226
        %v1229 = vadd.f32 %v1223, %v1227
        %v1230 = vmul.f32 %v1180, -0.057657376
        %1232 = vrot.lane.b32.xlu0 %v1230, 1
        %v1233 = vpop.permute.xlu0 %1232
        %v1235 = vadd.f32 %v1229, %v1233
        %v1236 = vmul.f32 %v1063, 0.0020289666
        %1238 = vrot.lane.b32.xlu0 %v1236, 123
        %v1239 = vpop.permute.xlu0 %1238
        %v1241 = vadd.f32 %v1235, %v1239
        %v1242 = vmul.f32 %v1180, 0.009389464
        %v1243 = vadd.f32 %v1241, %v1242
        %v1244 = vstv %s893
        %v1245 = vadd.s32 %v639, %v1244
        %vm1246 = vcmp.lt.s32.totalorder %v1245, 16
        %1248 = vrot.lane.b32.xlu0 %v1243, 123
        %v1249 = vpop.permute.xlu0 %1248
        %v1251 = vsel %vm1246, %v1249, 0.0
        %v1252 = vld [vmem:[%s5] sm:$0x3]
        %v1253 = vld [vmem:[%s6] sm:$0xf]
        %v1254 = vpack.c.bf16 %v1251, %v1251
        %v1257 = vunpack.c.l.s4 1983009808
        %v1258 = vunpack.c.0.s8 %v1257
        %v1259 = vlaneseq
        %v1260 = vshrl.u32 %v1259, 7
        %v1261 = vsub.s32 %v1258, %v1260
        %v1262 = vrot.slane %v1252, %v1261
        %1263 = vrot.lane.b32.xlu0 %v1262, 124
        %v1264 = vpop.permute.xlu0 %1263
        %1266 = vrot.lane.b32.xlu0 %v1254, 127
        %v1267 = vpop.permute.xlu0 %1266
        %v1269 = vsel %vm735, %v1264, 0
        %v1272 = vsel %vm739, %v1267, 0
        %1274 = vmatprep.subr.bf16.mxu0 0
        %1275 = vmatpush1.bf16.msra.mxu0 %v1272
        %1276 = vmatprep.subr.bf16.mxu0 0
        %1277 = vmatpush1.bf16.msra.mxu0 0
        %1278 = vmatprep.subr.bf16.mxu0 0
        %1279 = vmatpush1.bf16.msra.mxu0 0
        %1280 = vmatprep.subr.bf16.mxu0 0
        %1281 = vmatpush1.bf16.msra.mxu0 0
        %1282 = vmatprep.subr.bf16.mxu0 0
        %1283 = vmatpush1.bf16.msra.mxu0 0
        %1284 = vmatprep.subr.bf16.mxu0 0
        %1285 = vmatpush1.bf16.msra.mxu0 0
        %1286 = vmatprep.subr.bf16.mxu0 0
        %1287 = vmatpush1.bf16.msra.mxu0 0
        %1288 = vmatprep.subr.bf16.mxu0 0
        %1289 = vmatpush1.bf16.msra.mxu0 0
        %1290 = vmatprep.subr.bf16.mxu0 0
        %1291 = vmatpush1.bf16.msra.mxu0 0
        %1292 = vmatprep.subr.bf16.mxu0 0
        %1293 = vmatpush1.bf16.msra.mxu0 0
        %1294 = vmatprep.subr.bf16.mxu0 0
        %1295 = vmatpush1.bf16.msra.mxu0 0
        %1296 = vmatprep.subr.bf16.mxu0 0
        %1297 = vmatpush1.bf16.msra.mxu0 0
        %1298 = vmatprep.subr.bf16.mxu0 0
        %1299 = vmatpush1.bf16.msra.mxu0 0
        %1300 = vmatprep.subr.bf16.mxu0 0
        %1301 = vmatpush1.bf16.msra.mxu0 0
        %1302 = vmatprep.subr.bf16.mxu0 0
        %1303 = vmatpush1.bf16.msra.mxu0 0
        %1304 = vmatprep.subr.bf16.mxu0 0
        %1305 = vmatpush1.bf16.msra.mxu0 0
        %1306 = vmatprep.mubr.bf16.mxu0 0
        %1307 = vmatmul.mubr.bf16.gmra.mrb[0].mxu0 %v1269
        %v1308 = vpop.f32.mrb[0].mxu0
        %v1309 = vadd.f32 0.0, %v1308
        %v1310 = vpop.f32.mrb[0].mxu0
        %v1311 = vpop.f32.mrb[0].mxu0
        %v1312 = vpop.f32.mrb[0].mxu0
        %1313 = vdwg.mxu0
        %v1315 = vsel %vm735, %v1252, 0
        %v1318 = vsel %vm739, %v1254, 0
        %1320 = vmatprep.subr.bf16.mxu0 0
        %1321 = vmatpush1.bf16.msra.mxu0 %v1318
        %1322 = vmatprep.subr.bf16.mxu0 0
        %1323 = vmatpush1.bf16.msra.mxu0 0
        %1324 = vmatprep.subr.bf16.mxu0 0
        %1325 = vmatpush1.bf16.msra.mxu0 0
        %1326 = vmatprep.subr.bf16.mxu0 0
        %1327 = vmatpush1.bf16.msra.mxu0 0
        %1328 = vmatprep.subr.bf16.mxu0 0
        %1329 = vmatpush1.bf16.msra.mxu0 0
        %1330 = vmatprep.subr.bf16.mxu0 0
        %1331 = vmatpush1.bf16.msra.mxu0 0
        %1332 = vmatprep.subr.bf16.mxu0 0
        %1333 = vmatpush1.bf16.msra.mxu0 0
        %1334 = vmatprep.subr.bf16.mxu0 0
        %1335 = vmatpush1.bf16.msra.mxu0 0
        %1336 = vmatprep.subr.bf16.mxu0 0
        %1337 = vmatpush1.bf16.msra.mxu0 0
        %1338 = vmatprep.subr.bf16.mxu0 0
        %1339 = vmatpush1.bf16.msra.mxu0 0
        %1340 = vmatprep.subr.bf16.mxu0 0
        %1341 = vmatpush1.bf16.msra.mxu0 0
        %1342 = vmatprep.subr.bf16.mxu0 0
        %1343 = vmatpush1.bf16.msra.mxu0 0
        %1344 = vmatprep.subr.bf16.mxu0 0
        %1345 = vmatpush1.bf16.msra.mxu0 0
        %1346 = vmatprep.subr.bf16.mxu0 0
        %1347 = vmatpush1.bf16.msra.mxu0 0
        %1348 = vmatprep.subr.bf16.mxu0 0
        %1349 = vmatpush1.bf16.msra.mxu0 0
        %1350 = vmatprep.subr.bf16.mxu0 0
        %1351 = vmatpush1.bf16.msra.mxu0 0
        %1352 = vmatprep.mubr.bf16.mxu0 0
        %1353 = vmatmul.mubr.bf16.gmra.mrb[0].mxu0 %v1315
        %v1354 = vpop.f32.mrb[0].mxu0
        %v1355 = vadd.f32 %v1309, %v1354
        %v1356 = vpop.f32.mrb[0].mxu0
        %v1357 = vpop.f32.mrb[0].mxu0
        %v1358 = vpop.f32.mrb[0].mxu0
        %1359 = vdwg.mxu0
        %1360 = vrot.lane.b32.xlu0 %v1262, 120
        %v1361 = vpop.permute.xlu0 %1360
        %1362 = vrot.lane.b32.xlu0 %v1254, 126
        %v1363 = vpop.permute.xlu0 %1362
        %v1365 = vsel %vm735, %v1361, 0
        %v1368 = vsel %vm739, %v1363, 0
        %1370 = vmatprep.subr.bf16.mxu0 0
        %1371 = vmatpush1.bf16.msra.mxu0 %v1368
        %1372 = vmatprep.subr.bf16.mxu0 0
        %1373 = vmatpush1.bf16.msra.mxu0 0
        %1374 = vmatprep.subr.bf16.mxu0 0
        %1375 = vmatpush1.bf16.msra.mxu0 0
        %1376 = vmatprep.subr.bf16.mxu0 0
        %1377 = vmatpush1.bf16.msra.mxu0 0
        %1378 = vmatprep.subr.bf16.mxu0 0
        %1379 = vmatpush1.bf16.msra.mxu0 0
        %1380 = vmatprep.subr.bf16.mxu0 0
        %1381 = vmatpush1.bf16.msra.mxu0 0
        %1382 = vmatprep.subr.bf16.mxu0 0
        %1383 = vmatpush1.bf16.msra.mxu0 0
        %1384 = vmatprep.subr.bf16.mxu0 0
        %1385 = vmatpush1.bf16.msra.mxu0 0
        %1386 = vmatprep.subr.bf16.mxu0 0
        %1387 = vmatpush1.bf16.msra.mxu0 0
        %1388 = vmatprep.subr.bf16.mxu0 0
        %1389 = vmatpush1.bf16.msra.mxu0 0
        %1390 = vmatprep.subr.bf16.mxu0 0
        %1391 = vmatpush1.bf16.msra.mxu0 0
        %1392 = vmatprep.subr.bf16.mxu0 0
        %1393 = vmatpush1.bf16.msra.mxu0 0
        %1394 = vmatprep.subr.bf16.mxu0 0
        %1395 = vmatpush1.bf16.msra.mxu0 0
        %1396 = vmatprep.subr.bf16.mxu0 0
        %1397 = vmatpush1.bf16.msra.mxu0 0
        %1398 = vmatprep.subr.bf16.mxu0 0
        %1399 = vmatpush1.bf16.msra.mxu0 0
        %1400 = vmatprep.subr.bf16.mxu0 0
        %1401 = vmatpush1.bf16.msra.mxu0 0
        %1402 = vmatprep.mubr.bf16.mxu0 0
        %1403 = vmatmul.mubr.bf16.gmra.mrb[0].mxu0 %v1365
        %v1404 = vpop.f32.mrb[0].mxu0
        %v1405 = vadd.f32 0.0, %v1404
        %v1406 = vpop.f32.mrb[0].mxu0
        %v1407 = vpop.f32.mrb[0].mxu0
        %v1408 = vpop.f32.mrb[0].mxu0
        %1409 = vdwg.mxu0
        %v1410 = vadd.f32 %v1355, %v1405
        %1412 = vset.pattern.permute.xlu0 0
        %1413 = vperm.xlu0 %1412, %v1253
        %v1414 = vpop.permute.xlu0 %1413
        %v1416 = vadd.f32 %v1410, %v1414
        %1418 = vrot.lane.b32.xlu0 %v355, 102
        %v1419 = vpop.permute.xlu0 %1418
        %v1421 = vadd.f32 %v1416, %v1419
        %vm1422 = vcmask 125952
        %1423 = vst.msk [vmem:[%s345] sm:$0xf] %vm1422, %v1421
        %s1424 = sand.u32 %s241, 1
        %s1425 = scalar_lea.sflag [#allocation3], %s1424
        %s1426 = sand.u32 %s241, 1
        %s1427 = smul.addr %s1426, 4
        %s1428 = scalar_lea.vmem [#allocation2], %s1427
        // Predicated region
        $region57: #{_lambda_.5} parent=55 // pred_check
          %p1429 = pneg %p251
        $region58: #{_lambda_.5} parent=55 // pred_check_branch
          %1431 = sbr.rel (%p1429) target = $region60
        $region59: #{_lambda_.5} parent=55 // pred_region
          %s1433 = ssub.s32 64, 64
          %1434 = vsyncadd %s1425, %s1433
          %s1435 = sadd.s32 %s28, %s27
          %s1436 = smul.addr %s1435, 64
          %s1437 = scalar_lea.hbm %s9, %s1436
          %s1439 = sshll.u32 %s1428, 4
          %s1440 = int_to_ptr.vmem [resolvable:$true] %s1439
          %1442 = dma.vmem_to_hbm [thread:$0]  %s1440, 64, %s1437, %s1425
        $region60: #{_lambda_.5} parent=55 // pred_fallthru
          _
      $region56: #{_lambda_.5} parent=5 // pred_fallthru
        _
      %p1443 = scmp.le.s32.totalorder 2, %s18
      // Predicated region
      $region61: #{_lambda_.5} parent=5 // pred_check
        %p1444 = pneg %p1443
      $region62: #{_lambda_.5} parent=5 // pred_check_branch
        %1446 = sbr.rel (%p1444) target = $region64
      $region63: #{_lambda_.5} parent=5 // pred_region
        %s1447 = ssub.s32 %s18, 2
        // Predicated region
        $region65: #{_lambda_.5} parent=63 // pred_check
          %p1448 = pneg %p257
        $region66: #{_lambda_.5} parent=63 // pred_check_branch
          %1450 = sbr.rel (%p1448) target = $region68
        $region67: #{_lambda_.5} parent=63 // pred_region
          %s1451 = sand.u32 %s242, 1
          %s1452 = scalar_lea.sflag [#allocation3], %s1451
          %s1453 = sand.u32 %s242, 1
          %s1454 = smul.addr %s1453, 4
          %s1455 = scalar_lea.vmem [#allocation2], %s1454
          %1456 = dma.done %s1452, 64
        $region68: #{_lambda_.5} parent=63 // pred_fallthru
          _
      $region64: #{_lambda_.5} parent=5 // pred_fallthru
        _
    $region6: #{_lambda_.5} parent=1 // loop_footer
      %s22 = sadd.s32 1, %s18
    $region7: #{_lambda_.5} parent=1 // loop_footer_branch
      %17 = sbr.rel target = $region3
    $region8: #{_lambda_.5} parent=1 // loop_exit
      _
    %1457 = vsyncpa [#allocation3], 1
    %s1458 = scalar_lea.sflag [#allocation3], 1
    %1459 = vsyncpa %s1458, 1

// kernel: _lambda_.4
$region0: #{_lambda_.4}
  #allocation0 [shape = 'u32[]', space=smem, size = 0x4, offset = 0x4, fixed_abs, tag = 'smem constant byte address 0x4 - core index']
  #allocation1 [shape = 'u32[144,128]{1,0:T(1,128)}', space=vmem, size = 0x12000, scoped, tag = 'internal scratch']
  %s0 = inlined_call_operand.vmem [shape: f32[2,1,4,44], index: 0, kind: input, shape index: {}]
  %s1 = inlined_call_operand.vmem [shape: bf16[4,12], index: 1, kind: input, shape index: {}]
  %s2 = inlined_call_operand.vmem [shape: f32[4,1], index: 2, kind: input, shape index: {}]
  %s3 = inlined_call_operand.vmem [shape: f32[4,1], index: 3, kind: input, shape index: {}, may-alias: {3,4,7,8}]
  %s4 = inlined_call_operand.vmem [shape: f32[4,1], index: 4, kind: input, shape index: {}, may-alias: {3,4,7,8}]
  %s5 = inlined_call_operand.vmem [shape: bf16[4,12], index: 5, kind: input, shape index: {}]
  %s6 = inlined_call_operand.vmem [shape: f32[4,1], index: 6, kind: input, shape index: {}]
  %s7 = inlined_call_operand.vmem [shape: f32[4,1], index: 7, kind: input, shape index: {}, may-alias: {3,4,7,8}]
  %s8 = inlined_call_operand.vmem [shape: f32[4,1], index: 8, kind: input, shape index: {}, may-alias: {3,4,7,8}]
  %s9 = inlined_call_operand.vmem [shape: f32[2,4,16], index: 9, kind: output, shape index: {}]
  %s10 = sld [smem:[#allocation0]]
  $region69: #{_lambda_.4} parent=0
    _
  %s12 = ssub.s32 1, %s10
  %s13 = scalar_select 0, %s12, %s10
  loop: start=0, step=1, limit=4
  $region2: #{_lambda_.4} parent=0 // loop_pre_header
    _
  $region3: #{_lambda_.4} parent=0 // loop_header
    %s15 = sphi 0, %s19
    %p16 = scmp.ge.s32.totalorder %s15, 4
    %s22 = sphi 0, %s34
    %s23 = sphi 0, %s30
    %s24 = sphi 0, %s22
    %s25 = sphi 0, %s23
    %s26 = sphi 0, %s24
    %s27 = sphi 0, %s25
    %s39 = sphi 0, %s41
    %s42 = sphi 0, %s39
    %s43 = sphi 0, %s42
    %s59 = sphi 0, %s43
    %s63 = sphi 0, %s63
    %s65 = sphi 0, %s63
    %s66 = sphi 0, %s65
    %s80 = sphi 0, %s66
    %s84 = sphi 0, %s84
    %s86 = sphi 0, %s84
    %s87 = sphi 0, %s86
    %s101 = sphi 0, %s87
    %s105 = sphi 0, %s105
    %s107 = sphi 0, %s105
    %s108 = sphi 0, %s107
    %s122 = sphi 0, %s108
    %s126 = sphi 0, %s126
    %s128 = sphi 0, %s126
    %s129 = sphi 0, %s128
    %s143 = sphi 0, %s129
    %s147 = sphi 0, %s147
    %s149 = sphi 0, %s147
    %s150 = sphi 0, %s149
    %s164 = sphi 0, %s150
    %s168 = sphi 0, %s168
    %s170 = sphi 0, %s168
    %s171 = sphi 0, %s170
    %s185 = sphi 0, %s171
    %s189 = sphi 0, %s189
    %s191 = sphi 0, %s189
    %s192 = sphi 0, %s191
    %s206 = sphi 0, %s192
    %s210 = sphi 0, %s210
    %s212 = sphi 0, %s210
    %s213 = sphi 0, %s212
    %s227 = sphi 0, %s213
    %s235 = sphi 0, %s237
    %s238 = sphi 0, %s235
    %s239 = sphi 0, %s238
    %s255 = sphi 0, %s239
  $region4: #{_lambda_.4} parent=0 // loop_header_branch
    %18 = sbr.rel (%p16) target = $region8
  $region5: #{_lambda_.4} parent=0 // loop_body
    %s20 = ssub.s32 %s15, 1
    %s21 = ssub.s32 %s15, 2
    %s28 = sadd.s32 1, %s23
    %p29 = scmp.ge.s32.totalorder %s28, 1
    %s30 = scalar_select %p29, 0, %s28
    %s31 = sadd.s32 1, %s22
    %s32 = scalar_select %p29, %s31, %s22
    %p33 = scmp.ge.s32.totalorder %s32, 2
    %s34 = scalar_select %p33, 0, %s32
    %s35 = ssub.s32 %s22, %s34
    %s36 = ssub.s32 %s23, %s30
    %s37 = sor.u32 %s35, %s36
    %p38 = scmp.eq.s32.totalorder %s37, 0
    %s40 = sadd.s32 %s39, 1
    %s41 = scalar_select %p38, %s39, %s40
    %p44 = pneg %p38
    %p45 = scmp.eq.s32.totalorder %s15, 1
    %p46 = por %p44, %p45
    %p47 = scmp.ne.s32.totalorder %s39, %s42
    %p48 = scmp.eq.s32.totalorder %s15, 0
    %p49 = por %p47, %p48
    %p50 = scmp.ne.s32.totalorder %s39, %s42
    %p51 = scmp.eq.s32.totalorder %s20, 1
    %p52 = por %p50, %p51
    %p53 = scmp.ne.s32.totalorder %s42, %s43
    %p54 = scmp.eq.s32.totalorder %s20, 0
    %p55 = por %p53, %p54
    %p56 = scmp.ne.s32.totalorder %s42, %s43
    %p57 = scmp.eq.s32.totalorder %s21, 1
    %p58 = por %p56, %p57
    %p60 = scmp.ne.s32.totalorder %s43, %s59
    %p61 = scmp.eq.s32.totalorder %s21, 0
    %p62 = por %p60, %p61
    %s64 = sadd.s32 %s63, 1
    %p67 = scmp.eq.s32.totalorder %s15, 1
    %p68 = scmp.ne.s32.totalorder %s63, %s65
    %p69 = scmp.eq.s32.totalorder %s15, 0
    %p70 = por %p68, %p69
    %p71 = scmp.ne.s32.totalorder %s63, %s65
    %p72 = scmp.eq.s32.totalorder %s20, 1
    %p73 = por %p71, %p72
    %p74 = scmp.ne.s32.totalorder %s65, %s66
    %p75 = scmp.eq.s32.totalorder %s20, 0
    %p76 = por %p74, %p75
    %p77 = scmp.ne.s32.totalorder %s65, %s66
    %p78 = scmp.eq.s32.totalorder %s21, 1
    %p79 = por %p77, %p78
    %p81 = scmp.ne.s32.totalorder %s66, %s80
    %p82 = scmp.eq.s32.totalorder %s21, 0
    %p83 = por %p81, %p82
    %s85 = sadd.s32 %s84, 1
    %p88 = scmp.eq.s32.totalorder %s15, 1
    %p89 = scmp.ne.s32.totalorder %s84, %s86
    %p90 = scmp.eq.s32.totalorder %s15, 0
    %p91 = por %p89, %p90
    %p92 = scmp.ne.s32.totalorder %s84, %s86
    %p93 = scmp.eq.s32.totalorder %s20, 1
    %p94 = por %p92, %p93
    %p95 = scmp.ne.s32.totalorder %s86, %s87
    %p96 = scmp.eq.s32.totalorder %s20, 0
    %p97 = por %p95, %p96
    %p98 = scmp.ne.s32.totalorder %s86, %s87
    %p99 = scmp.eq.s32.totalorder %s21, 1
    %p100 = por %p98, %p99
    %p102 = scmp.ne.s32.totalorder %s87, %s101
    %p103 = scmp.eq.s32.totalorder %s21, 0
    %p104 = por %p102, %p103
    %s106 = sadd.s32 %s105, 1
    %p109 = scmp.eq.s32.totalorder %s15, 1
    %p110 = scmp.ne.s32.totalorder %s105, %s107
    %p111 = scmp.eq.s32.totalorder %s15, 0
    %p112 = por %p110, %p111
    %p113 = scmp.ne.s32.totalorder %s105, %s107
    %p114 = scmp.eq.s32.totalorder %s20, 1
    %p115 = por %p113, %p114
    %p116 = scmp.ne.s32.totalorder %s107, %s108
    %p117 = scmp.eq.s32.totalorder %s20, 0
    %p118 = por %p116, %p117
    %p119 = scmp.ne.s32.totalorder %s107, %s108
    %p120 = scmp.eq.s32.totalorder %s21, 1
    %p121 = por %p119, %p120
    %p123 = scmp.ne.s32.totalorder %s108, %s122
    %p124 = scmp.eq.s32.totalorder %s21, 0
    %p125 = por %p123, %p124
    %s127 = sadd.s32 %s126, 1
    %p130 = scmp.eq.s32.totalorder %s15, 1
    %p131 = scmp.ne.s32.totalorder %s126, %s128
    %p132 = scmp.eq.s32.totalorder %s15, 0
    %p133 = por %p131, %p132
    %p134 = scmp.ne.s32.totalorder %s126, %s128
    %p135 = scmp.eq.s32.totalorder %s20, 1
    %p136 = por %p134, %p135
    %p137 = scmp.ne.s32.totalorder %s128, %s129
    %p138 = scmp.eq.s32.totalorder %s20, 0
    %p139 = por %p137, %p138
    %p140 = scmp.ne.s32.totalorder %s128, %s129
    %p141 = scmp.eq.s32.totalorder %s21, 1
    %p142 = por %p140, %p141
    %p144 = scmp.ne.s32.totalorder %s129, %s143
    %p145 = scmp.eq.s32.totalorder %s21, 0
    %p146 = por %p144, %p145
    %s148 = sadd.s32 %s147, 1
    %p151 = scmp.eq.s32.totalorder %s15, 1
    %p152 = scmp.ne.s32.totalorder %s147, %s149
    %p153 = scmp.eq.s32.totalorder %s15, 0
    %p154 = por %p152, %p153
    %p155 = scmp.ne.s32.totalorder %s147, %s149
    %p156 = scmp.eq.s32.totalorder %s20, 1
    %p157 = por %p155, %p156
    %p158 = scmp.ne.s32.totalorder %s149, %s150
    %p159 = scmp.eq.s32.totalorder %s20, 0
    %p160 = por %p158, %p159
    %p161 = scmp.ne.s32.totalorder %s149, %s150
    %p162 = scmp.eq.s32.totalorder %s21, 1
    %p163 = por %p161, %p162
    %p165 = scmp.ne.s32.totalorder %s150, %s164
    %p166 = scmp.eq.s32.totalorder %s21, 0
    %p167 = por %p165, %p166
    %s169 = sadd.s32 %s168, 1
    %p172 = scmp.eq.s32.totalorder %s15, 1
    %p173 = scmp.ne.s32.totalorder %s168, %s170
    %p174 = scmp.eq.s32.totalorder %s15, 0
    %p175 = por %p173, %p174
    %p176 = scmp.ne.s32.totalorder %s168, %s170
    %p177 = scmp.eq.s32.totalorder %s20, 1
    %p178 = por %p176, %p177
    %p179 = scmp.ne.s32.totalorder %s170, %s171
    %p180 = scmp.eq.s32.totalorder %s20, 0
    %p181 = por %p179, %p180
    %p182 = scmp.ne.s32.totalorder %s170, %s171
    %p183 = scmp.eq.s32.totalorder %s21, 1
    %p184 = por %p182, %p183
    %p186 = scmp.ne.s32.totalorder %s171, %s185
    %p187 = scmp.eq.s32.totalorder %s21, 0
    %p188 = por %p186, %p187
    %s190 = sadd.s32 %s189, 1
    %p193 = scmp.eq.s32.totalorder %s15, 1
    %p194 = scmp.ne.s32.totalorder %s189, %s191
    %p195 = scmp.eq.s32.totalorder %s15, 0
    %p196 = por %p194, %p195
    %p197 = scmp.ne.s32.totalorder %s189, %s191
    %p198 = scmp.eq.s32.totalorder %s20, 1
    %p199 = por %p197, %p198
    %p200 = scmp.ne.s32.totalorder %s191, %s192
    %p201 = scmp.eq.s32.totalorder %s20, 0
    %p202 = por %p200, %p201
    %p203 = scmp.ne.s32.totalorder %s191, %s192
    %p204 = scmp.eq.s32.totalorder %s21, 1
    %p205 = por %p203, %p204
    %p207 = scmp.ne.s32.totalorder %s192, %s206
    %p208 = scmp.eq.s32.totalorder %s21, 0
    %p209 = por %p207, %p208
    %s211 = sadd.s32 %s210, 1
    %p214 = scmp.eq.s32.totalorder %s15, 1
    %p215 = scmp.ne.s32.totalorder %s210, %s212
    %p216 = scmp.eq.s32.totalorder %s15, 0
    %p217 = por %p215, %p216
    %p218 = scmp.ne.s32.totalorder %s210, %s212
    %p219 = scmp.eq.s32.totalorder %s20, 1
    %p220 = por %p218, %p219
    %p221 = scmp.ne.s32.totalorder %s212, %s213
    %p222 = scmp.eq.s32.totalorder %s20, 0
    %p223 = por %p221, %p222
    %p224 = scmp.ne.s32.totalorder %s212, %s213
    %p225 = scmp.eq.s32.totalorder %s21, 1
    %p226 = por %p224, %p225
    %p228 = scmp.ne.s32.totalorder %s213, %s227
    %p229 = scmp.eq.s32.totalorder %s21, 0
    %p230 = por %p228, %p229
    %s231 = ssub.s32 %s22, %s34
    %s232 = ssub.s32 %s23, %s30
    %s233 = sor.u32 %s231, %s232
    %p234 = scmp.eq.s32.totalorder %s233, 0
    %s236 = sadd.s32 %s235, 1
    %s237 = scalar_select %p234, %s235, %s236
    %p240 = pneg %p234
    %p241 = scmp.eq.s32.totalorder %s15, 1
    %p242 = por %p240, %p241
    %p243 = scmp.ne.s32.totalorder %s235, %s238
    %p244 = scmp.eq.s32.totalorder %s15, 0
    %p245 = por %p243, %p244
    %p246 = scmp.ne.s32.totalorder %s235, %s238
    %p247 = scmp.eq.s32.totalorder %s20, 1
    %p248 = por %p246, %p247
    %p249 = scmp.ne.s32.totalorder %s238, %s239
    %p250 = scmp.eq.s32.totalorder %s20, 0
    %p251 = por %p249, %p250
    %p252 = scmp.ne.s32.totalorder %s238, %s239
    %p253 = scmp.eq.s32.totalorder %s21, 1
    %p254 = por %p252, %p253
    %p256 = scmp.ne.s32.totalorder %s239, %s255
    %p257 = scmp.eq.s32.totalorder %s21, 0
    %p258 = por %p256, %p257
    %p259 = scmp.le.s32.totalorder 1, %s15
    %p260 = scmp.lt.s32.totalorder %s15, 3
    %p261 = pnand %p259, %p260
    %p262 = pneg %p261
    // Predicated region
    $region9: #{_lambda_.4} parent=5 // pred_check
      _
    $region10: #{_lambda_.4} parent=5 // pred_check_branch
      %264 = sbr.rel (%p261) target = $region12
    $region11: #{_lambda_.4} parent=5 // pred_region
      %s265 = ssub.s32 %s15, 1
      // Predicated region
      $region13: #{_lambda_.4} parent=11 // pred_check
        %p266 = pneg %p76
      $region14: #{_lambda_.4} parent=11 // pred_check_branch
        %268 = sbr.rel (%p266) target = $region16
      $region15: #{_lambda_.4} parent=11 // pred_region
        _
      $region16: #{_lambda_.4} parent=11 // pred_fallthru
        _
      // Predicated region
      $region17: #{_lambda_.4} parent=11 // pred_check
        %p269 = pneg %p97
      $region18: #{_lambda_.4} parent=11 // pred_check_branch
        %271 = sbr.rel (%p269) target = $region20
      $region19: #{_lambda_.4} parent=11 // pred_region
        _
      $region20: #{_lambda_.4} parent=11 // pred_fallthru
        _
      // Predicated region
      $region21: #{_lambda_.4} parent=11 // pred_check
        %p272 = pneg %p118
      $region22: #{_lambda_.4} parent=11 // pred_check_branch
        %274 = sbr.rel (%p272) target = $region24
      $region23: #{_lambda_.4} parent=11 // pred_region
        _
      $region24: #{_lambda_.4} parent=11 // pred_fallthru
        _
      // Predicated region
      $region25: #{_lambda_.4} parent=11 // pred_check
        %p275 = pneg %p139
      $region26: #{_lambda_.4} parent=11 // pred_check_branch
        %277 = sbr.rel (%p275) target = $region28
      $region27: #{_lambda_.4} parent=11 // pred_region
        _
      $region28: #{_lambda_.4} parent=11 // pred_fallthru
        _
      // Predicated region
      $region29: #{_lambda_.4} parent=11 // pred_check
        %p278 = pneg %p160
      $region30: #{_lambda_.4} parent=11 // pred_check_branch
        %280 = sbr.rel (%p278) target = $region32
      $region31: #{_lambda_.4} parent=11 // pred_region
        _
      $region32: #{_lambda_.4} parent=11 // pred_fallthru
        _
      // Predicated region
      $region33: #{_lambda_.4} parent=11 // pred_check
        %p281 = pneg %p181
      $region34: #{_lambda_.4} parent=11 // pred_check_branch
        %283 = sbr.rel (%p281) target = $region36
      $region35: #{_lambda_.4} parent=11 // pred_region
        _
      $region36: #{_lambda_.4} parent=11 // pred_fallthru
        _
      // Predicated region
      $region37: #{_lambda_.4} parent=11 // pred_check
        %p284 = pneg %p202
      $region38: #{_lambda_.4} parent=11 // pred_check_branch
        %286 = sbr.rel (%p284) target = $region40
      $region39: #{_lambda_.4} parent=11 // pred_region
        _
      $region40: #{_lambda_.4} parent=11 // pred_fallthru
        _
      // Predicated region
      $region41: #{_lambda_.4} parent=11 // pred_check
        %p287 = pneg %p223
      $region42: #{_lambda_.4} parent=11 // pred_check_branch
        %289 = sbr.rel (%p287) target = $region44
      $region43: #{_lambda_.4} parent=11 // pred_region
        _
      $region44: #{_lambda_.4} parent=11 // pred_fallthru
        _
    $region12: #{_lambda_.4} parent=5 // pred_fallthru
      _
    %p290 = scmp.lt.s32.totalorder %s15, 2
    // Predicated region
    $region45: #{_lambda_.4} parent=5 // pred_check
      %p291 = pneg %p290
    $region46: #{_lambda_.4} parent=5 // pred_check_branch
      %293 = sbr.rel (%p291) target = $region48
    $region47: #{_lambda_.4} parent=5 // pred_region
      // Predicated region
      $region49: #{_lambda_.4} parent=47 // pred_check
        %p294 = pneg %p49
      $region50: #{_lambda_.4} parent=47 // pred_check_branch
        %296 = sbr.rel (%p294) target = $region52
      $region51: #{_lambda_.4} parent=47 // pred_region
        %p297 = scmp.lt.s32.totalorder %s22, 1
        %s298 = scalar_select %p297, %s22, 1
        %p299 = scmp.lt.s32.totalorder %s23, 0
        %s300 = scalar_select %p299, %s23, 0
        %s301 = sadd.s32 %s300, %s298
        %s302 = smul.addr %s301, 4
        %s303 = scalar_lea.vmem %s0, %s302
      $region52: #{_lambda_.4} parent=47 // pred_fallthru
        _
    $region48: #{_lambda_.4} parent=5 // pred_fallthru
      _
    %p304 = scmp.le.s32.totalorder 1, %s15
    %p305 = scmp.lt.s32.totalorder %s15, 3
    %p306 = pnand %p304, %p305
    %p307 = pneg %p306
    // Predicated region
    $region53: #{_lambda_.4} parent=5 // pred_check
      _
    $region54: #{_lambda_.4} parent=5 // pred_check_branch
      %309 = sbr.rel (%p306) target = $region56
    $region55: #{_lambda_.4} parent=5 // pred_region
      %s310 = ssub.s32 %s15, 1
      %p311 = scmp.lt.s32.totalorder %s24, 1
      %s312 = scalar_select %p311, %s24, 1
      %p313 = scmp.lt.s32.totalorder %s25, 0
      %s314 = scalar_select %p313, %s25, 0
      %s315 = sadd.s32 %s314, %s312
      %s316 = smul.addr %s315, 4
      %s317 = scalar_lea.vmem %s0, %s316
      %p318 = pneg %p55
      %p319 = pneg %p52
      %p320 = pneg %p76
      %p321 = pneg %p73
      %p322 = pneg %p97
      %p323 = pneg %p94
      %p324 = pneg %p118
      %p325 = pneg %p115
      %p326 = pneg %p139
      %p327 = pneg %p136
      %p328 = pneg %p160
      %p329 = pneg %p157
      %p330 = pneg %p181
      %p331 = pneg %p178
      %p332 = pneg %p202
      %p333 = pneg %p199
      %p334 = pneg %p223
      %p335 = pneg %p220
      %p336 = pneg %p251
      %p337 = pneg %p248
      %p338 = scmp.lt.s32.totalorder %s24, 1
      %s339 = scalar_select %p338, %s24, 1
      %p340 = scmp.lt.s32.totalorder %s25, 0
      %s341 = scalar_select %p340, %s25, 0
      %s342 = sadd.s32 %s341, %s339
      %s343 = smul.addr %s342, 4
      %s344 = scalar_lea.vmem %s9, %s343
      %p345 = scmp.lt.s32.totalorder %s24, 1
      %s346 = scalar_select %p345, %s24, 1
      %p347 = scmp.lt.s32.totalorder %s25, 0
      %s348 = scalar_select %p347, %s25, 0
      %s349 = sadd.s32 %s348, %s346
      %s350 = smul.addr %s349, 4
      %s351 = scalar_lea.vmem %s0, %s350
      %p352 = scmp.lt.s32.totalorder %s24, 1
      %s353 = scalar_select %p352, %s24, 1
      %p354 = scmp.lt.s32.totalorder %s25, 0
      %s355 = scalar_select %p354, %s25, 0
      %s356 = sadd.s32 %s355, %s353
      %s357 = smul.addr %s356, 4
      %s358 = scalar_lea.vmem %s9, %s357
      %s360 = smul.u32 %s25, 16
      %v361 = vld [vmem:[%s351] sm:$0xf]
      %v362 = vld [vmem:[%s3] sm:$0xf]
      %v363 = vld [vmem:[%s4] sm:$0xf]
      %s364 = ssub.s32 %s360, 14
      %v365 = vmul.f32 %v361, 0.018778928
      %v366 = vmul.f32 %v361, 0.004057933
      %v367 = vmul.f32 %v361, -0.11531475
      %369 = vrot.lane.b32.xlu0 %v367, 1
      %v370 = vpop.permute.xlu0 %369
      %v372 = vadd.f32 %v365, %v370
      %v373 = vmul.f32 %v361, -0.05108693
      %375 = vrot.lane.b32.xlu0 %v373, 1
      %v376 = vpop.permute.xlu0 %375
      %v378 = vadd.f32 %v366, %v376
      %v379 = vmul.f32 %v361, 0.8864196
      %381 = vrot.lane.b32.xlu0 %v379, 2
      %v382 = vpop.permute.xlu0 %381
      %v384 = vadd.f32 %v372, %v382
      %v385 = vmul.f32 %v361, 0.25714523
      %387 = vrot.lane.b32.xlu0 %v385, 2
      %v388 = vpop.permute.xlu0 %387
      %v390 = vadd.f32 %v378, %v388
      %391 = vrot.lane.b32.xlu0 %v385, 3
      %v392 = vpop.permute.xlu0 %391
      %v394 = vadd.f32 %v384, %v392
      %395 = vrot.lane.b32.xlu0 %v379, 3
      %v396 = vpop.permute.xlu0 %395
      %v398 = vadd.f32 %v390, %v396
      %399 = vrot.lane.b32.xlu0 %v373, 4
      %v400 = vpop.permute.xlu0 %399
      %v402 = vadd.f32 %v394, %v400
      %403 = vrot.lane.b32.xlu0 %v367, 4
      %v404 = vpop.permute.xlu0 %403
      %v406 = vadd.f32 %v398, %v404
      %408 = vrot.lane.b32.xlu0 %v366, 5
      %v409 = vpop.permute.xlu0 %408
      %v411 = vadd.f32 %v402, %v409
      %413 = vrot.lane.b32.xlu0 %v365, 5
      %v414 = vpop.permute.xlu0 %413
      %v416 = vadd.f32 %v406, %v414
      %418 = vset.pattern.permute.xlu0 0
      %419 = vperm.xlu0 %418, %v362
      %v420 = vpop.permute.xlu0 %419
      %v422 = vmul.f32 %v411, %v420
      %v423 = vand.u32 2147483647, %v422
      %vm424 = vcmp.le.f32.partialorder %v423, 0.7853982
      %vm425 = vcmp.lt.s32.totalorder %v422, 0
      %v426 = vand.u32 %v422, 2139095040
      %v427 = vshrl.u32 %v426, 23
      %v428 = vsub.s32 %v427, 127
      %v429 = vand.u32 2147483647, %v422
      %v430 = vand.u32 %v429, 8388607
      %v431 = vor.u32 %v430, 8388608
      %v432 = vsub.s32 0, %v431
      %v433 = vadd.s32 %v428, 1
      %vm434 = vcmp.gt.s32.totalorder %v433, 0
      %v435 = vsel %vm434, %v433, 0
      %v436 = vshrl.u32 %v435, 5
      %v437 = vand.u32 %v435, 31
      %v438 = vsub.s32 32, %v437
      %v439 = vshrl.u32 683565275, %v438
      %v440 = vshll.u32 683565275, %v437
      %v441 = vshrl.u32 2475754826, %v438
      %v442 = vor.u32 %v440, %v441
      %v443 = vshll.u32 2475754826, %v437
      %v444 = vshrl.u32 2131351028, %v438
      %v445 = vor.u32 %v443, %v444
      %v446 = vshll.u32 2131351028, %v437
      %v447 = vshrl.u32 2102212464, %v438
      %v448 = vor.u32 %v446, %v447
      %v449 = vshll.u32 2102212464, %v437
      %v450 = vshrl.u32 920167782, %v438
      %v451 = vor.u32 %v449, %v450
      %v452 = vshll.u32 920167782, %v437
      %v453 = vshrl.u32 1326507024, %v438
      %v454 = vor.u32 %v452, %v453
      %vm455 = vcmp.lt.s32.totalorder %v436, 1
      %vm456 = vcmp.lt.s32.totalorder %v436, 2
      %vm457 = vcmp.lt.s32.totalorder %v436, 3
      %vm458 = vcmp.lt.s32.totalorder %v436, 4
      %v459 = vsel %vm455, %v439, %v442
      %v460 = vsel %vm458, %v448, 2102212464
      %v461 = vsel %vm457, %v445, %v460
      %v462 = vsel %vm456, %v459, %v461
      %v463 = vsel %vm455, %v442, %v445
      %v464 = vsel %vm458, %v451, 920167782
      %v465 = vsel %vm457, %v448, %v464
      %v466 = vsel %vm456, %v463, %v465
      %v467 = vsel %vm455, %v445, %v448
      %v468 = vsel %vm458, %v454, 1326507024
      %v469 = vsel %vm457, %v451, %v468
      %v470 = vsel %vm456, %v467, %v469
      %v471 = vshll.u32 %v431, 8
      %v472 = vmul.u32.u64.compose %v471, %v470
      %v473 = vextract.low.u32 %v472
      %v474 = vextract.high.u32 %v472
      %v475 = vmul.u32.u64.compose %v471, %v466
      %v476 = vextract.low.u32 %v475
      %v477 = vextract.high.u32 %v475
      %v478 = vmul.u32 %v471, %v462
      %v479 = vadd.s32 %v474, %v476
      %vm480 = vc.u32 %v474, %v476
      %v481 = vadd.s32 %v477, 1
      %v482 = vsel %vm480, %v481, %v477
      %v483 = vadd.s32 %v478, %v482
      %v484 = vadd.s32 %v483, 536870912
      %v485 = vshrl.u32 %v484, 30
      %v486 = vshll.u32 %v485, 30
      %v487 = vsub.s32 %v483, %v486
      %vm488 = vcmp.lt.s32.totalorder %v487, 0
      %v489 = vsub.s32 0, %v487
      %v490 = vsel %vm488, %v489, %v487
      %v491 = vclz %v490
      %v492 = vsub.s32 %v491, 2
      %vm493 = vcmp.gt.s32.totalorder 0, %v492
      %v494 = vsel %vm493, 0, %v492
      %v495 = vsub.s32 32, %v494
      %v496 = vshll.u32 %v487, %v494
      %v497 = vshrl.u32 %v479, %v495
      %v498 = vor.u32 %v496, %v497
      %v499 = vsub.s32 4294967266, %v494
      %v500 = vadd.s32 %v499, 127
      %v501 = vshll.u32 %v500, 23
      %v502 = vor.u32 4788187, %v501
      %v503 = vand.u32 2147483647, %v502
      %v505 = vcvt.s32.f32 %v498
      %v506 = vmul.f32 %v505, %v503
      %v507 = vxor.u32 %v506, 2147483648
      %v508 = vsel %vm425, %v507, %v506
      %v509 = vsub.s32 4, %v485
      %v510 = vsel %vm425, %v509, %v485
      %v511 = vsel %vm424, %v422, %v508
      %v512 = vsel %vm424, 0, %v510
      %v513 = vcosq.f32.pop %v511
      %v514 = vsinq.f32.pop %v511
      %vm515 = vweird.f32 %v422
      %v516 = vadd.s32 %v512, 3
      %v517 = vand.u32 %v516, 3
      %vm518 = vcmp.lt.s32.totalorder %v517, 2
      %vm519 = vcmp.eq.s32.totalorder %v517, 0
      %v520 = vxor.u32 %v514, 2147483648
      %v521 = vsel %vm519, %v513, %v520
      %vm522 = vcmp.eq.s32.totalorder %v517, 2
      %v523 = vxor.u32 %v513, 2147483648
      %v524 = vsel %vm522, %v523, %v514
      %v525 = vsel %vm518, %v521, %v524
      %v526 = vsel %vm515, nan, %v525
      %v527 = vmul.f32 %v526, %v526
      %529 = vset.pattern.permute.xlu0 0
      %530 = vperm.xlu0 %529, %v363
      %v531 = vpop.permute.xlu0 %530
      %v533 = vmul.f32 %v531, %v527
      %v534 = vadd.f32 %v411, %v533
      %v535 = vmul.f32 %v416, %v420
      %v536 = vand.u32 2147483647, %v535
      %vm537 = vcmp.le.f32.partialorder %v536, 0.7853982
      %vm538 = vcmp.lt.s32.totalorder %v535, 0
      %v539 = vand.u32 %v535, 2139095040
      %v540 = vshrl.u32 %v539, 23
      %v541 = vsub.s32 %v540, 127
      %v542 = vand.u32 2147483647, %v535
      %v543 = vand.u32 %v542, 8388607
      %v544 = vor.u32 %v543, 8388608
      %v545 = vsub.s32 0, %v544
      %v546 = vadd.s32 %v541, 1
      %vm547 = vcmp.gt.s32.totalorder %v546, 0
      %v548 = vsel %vm547, %v546, 0
      %v549 = vshrl.u32 %v548, 5
      %v550 = vand.u32 %v548, 31
      %v551 = vsub.s32 32, %v550
      %v552 = vshrl.u32 683565275, %v551
      %v553 = vshll.u32 683565275, %v550
      %v554 = vshrl.u32 2475754826, %v551
      %v555 = vor.u32 %v553, %v554
      %v556 = vshll.u32 2475754826, %v550
      %v557 = vshrl.u32 2131351028, %v551
      %v558 = vor.u32 %v556, %v557
      %v559 = vshll.u32 2131351028, %v550
      %v560 = vshrl.u32 2102212464, %v551
      %v561 = vor.u32 %v559, %v560
      %v562 = vshll.u32 2102212464, %v550
      %v563 = vshrl.u32 920167782, %v551
      %v564 = vor.u32 %v562, %v563
      %v565 = vshll.u32 920167782, %v550
      %v566 = vshrl.u32 1326507024, %v551
      %v567 = vor.u32 %v565, %v566
      %vm568 = vcmp.lt.s32.totalorder %v549, 1
      %vm569 = vcmp.lt.s32.totalorder %v549, 2
      %vm570 = vcmp.lt.s32.totalorder %v549, 3
      %vm571 = vcmp.lt.s32.totalorder %v549, 4
      %v572 = vsel %vm568, %v552, %v555
      %v573 = vsel %vm571, %v561, 2102212464
      %v574 = vsel %vm570, %v558, %v573
      %v575 = vsel %vm569, %v572, %v574
      %v576 = vsel %vm568, %v555, %v558
      %v577 = vsel %vm571, %v564, 920167782
      %v578 = vsel %vm570, %v561, %v577
      %v579 = vsel %vm569, %v576, %v578
      %v580 = vsel %vm568, %v558, %v561
      %v581 = vsel %vm571, %v567, 1326507024
      %v582 = vsel %vm570, %v564, %v581
      %v583 = vsel %vm569, %v580, %v582
      %v584 = vshll.u32 %v544, 8
      %v585 = vmul.u32.u64.compose %v584, %v583
      %v586 = vextract.low.u32 %v585
      %v587 = vextract.high.u32 %v585
      %v588 = vmul.u32.u64.compose %v584, %v579
      %v589 = vextract.low.u32 %v588
      %v590 = vextract.high.u32 %v588
      %v591 = vmul.u32 %v584, %v575
      %v592 = vadd.s32 %v587, %v589
      %vm593 = vc.u32 %v587, %v589
      %v594 = vadd.s32 %v590, 1
      %v595 = vsel %vm593, %v594, %v590
      %v596 = vadd.s32 %v591, %v595
      %v597 = vadd.s32 %v596, 536870912
      %v598 = vshrl.u32 %v597, 30
      %v599 = vshll.u32 %v598, 30
      %v600 = vsub.s32 %v596, %v599
      %vm601 = vcmp.lt.s32.totalorder %v600, 0
      %v602 = vsub.s32 0, %v600
      %v603 = vsel %vm601, %v602, %v600
      %v604 = vclz %v603
      %v605 = vsub.s32 %v604, 2
      %vm606 = vcmp.gt.s32.totalorder 0, %v605
      %v607 = vsel %vm606, 0, %v605
      %v608 = vsub.s32 32, %v607
      %v609 = vshll.u32 %v600, %v607
      %v610 = vshrl.u32 %v592, %v608
      %v611 = vor.u32 %v609, %v610
      %v612 = vsub.s32 4294967266, %v607
      %v613 = vadd.s32 %v612, 127
      %v614 = vshll.u32 %v613, 23
      %v615 = vor.u32 4788187, %v614
      %v616 = vand.u32 2147483647, %v615
      %v618 = vcvt.s32.f32 %v611
      %v619 = vmul.f32 %v618, %v616
      %v620 = vxor.u32 %v619, 2147483648
      %v621 = vsel %vm538, %v620, %v619
      %v622 = vsub.s32 4, %v598
      %v623 = vsel %vm538, %v622, %v598
      %v624 = vsel %vm537, %v535, %v621
      %v625 = vsel %vm537, 0, %v623
      %v626 = vcosq.f32.pop %v624
      %v627 = vsinq.f32.pop %v624
      %vm628 = vweird.f32 %v535
      %v629 = vadd.s32 %v625, 3
      %v630 = vand.u32 %v629, 3
      %vm631 = vcmp.lt.s32.totalorder %v630, 2
      %vm632 = vcmp.eq.s32.totalorder %v630, 0
      %v633 = vxor.u32 %v627, 2147483648
      %v634 = vsel %vm632, %v626, %v633
      %vm635 = vcmp.eq.s32.totalorder %v630, 2
      %v636 = vxor.u32 %v626, 2147483648
      %v637 = vsel %vm635, %v636, %v627
      %v638 = vsel %vm631, %v634, %v637
      %v639 = vsel %vm628, nan, %v638
      %v640 = vmul.f32 %v639, %v639
      %v641 = vmul.f32 %v531, %v640
      %v642 = vadd.f32 %v416, %v641
      %s643 = ssub.s32 %s360, 20
      %v644 = vlaneseq
      %v645 = vand.u32 %v644, 127
      %v646 = vstv %s643
      %v647 = vadd.s32 %v645, %v646
      %vm648 = vcmp.ge.s32.totalorder %v647, 0
      %650 = vrot.lane.b32.xlu0 %v642, 123
      %v651 = vpop.permute.xlu0 %650
      %v653 = vsel %vm648, %v651, 0.0
      %v654 = vmul.f32 %v534, 0.009389464
      %v655 = vmul.f32 %v653, 0.0020289666
      %657 = vrot.lane.b32.xlu0 %v655, 5
      %v658 = vpop.permute.xlu0 %657
      %v660 = vadd.f32 %v654, %v658
      %v661 = vmul.f32 %v534, -0.057657376
      %663 = vrot.lane.b32.xlu0 %v661, 127
      %v664 = vpop.permute.xlu0 %663
      %v666 = vadd.f32 %v660, %v664
      %v667 = vmul.f32 %v653, -0.025543464
      %669 = vrot.lane.b32.xlu0 %v667, 4
      %v670 = vpop.permute.xlu0 %669
      %v672 = vadd.f32 %v666, %v670
      %v673 = vmul.f32 %v534, 0.4432098
      %675 = vrot.lane.b32.xlu0 %v673, 126
      %v676 = vpop.permute.xlu0 %675
      %v678 = vadd.f32 %v672, %v676
      %v679 = vmul.f32 %v653, 0.12857261
      %681 = vrot.lane.b32.xlu0 %v679, 3
      %v682 = vpop.permute.xlu0 %681
      %v684 = vadd.f32 %v678, %v682
      %v685 = vmul.f32 %v534, 0.12857261
      %687 = vrot.lane.b32.xlu0 %v685, 125
      %v688 = vpop.permute.xlu0 %687
      %v690 = vadd.f32 %v684, %v688
      %v691 = vmul.f32 %v653, 0.4432098
      %693 = vrot.lane.b32.xlu0 %v691, 2
      %v694 = vpop.permute.xlu0 %693
      %v696 = vadd.f32 %v690, %v694
      %v697 = vmul.f32 %v534, -0.025543464
      %699 = vrot.lane.b32.xlu0 %v697, 124
      %v700 = vpop.permute.xlu0 %699
      %v702 = vadd.f32 %v696, %v700
      %v703 = vmul.f32 %v653, -0.057657376
      %705 = vrot.lane.b32.xlu0 %v703, 1
      %v706 = vpop.permute.xlu0 %705
      %v708 = vadd.f32 %v702, %v706
      %v709 = vmul.f32 %v534, 0.0020289666
      %711 = vrot.lane.b32.xlu0 %v709, 123
      %v712 = vpop.permute.xlu0 %711
      %v714 = vadd.f32 %v708, %v712
      %v715 = vmul.f32 %v653, 0.009389464
      %v716 = vadd.f32 %v714, %v715
      %v717 = vstv %s364
      %v718 = vadd.s32 %v645, %v717
      %vm719 = vcmp.lt.s32.totalorder %v718, 16
      %721 = vrot.lane.b32.xlu0 %v716, 123
      %v722 = vpop.permute.xlu0 %721
      %v724 = vsel %vm719, %v722, 0.0
      %v725 = vld [vmem:[%s1] sm:$0x3]
      %v726 = vld [vmem:[%s2] sm:$0xf]
      %v727 = vpack.c.bf16 %v724, %v724
      %v730 = vunpack.c.l.s4 1983009808
      %v731 = vunpack.c.0.s8 %v730
      %v732 = vlaneseq
      %v733 = vshrl.u32 %v732, 7
      %v734 = vsub.s32 %v731, %v733
      %v735 = vrot.slane %v725, %v734
      %736 = vrot.lane.b32.xlu0 %v735, 124
      %v737 = vpop.permute.xlu0 %736
      %739 = vrot.lane.b32.xlu0 %v727, 125
      %v740 = vpop.permute.xlu0 %739
      %vm741 = vcmask 31744
      %v743 = vsel %vm741, %v737, 0
      %vm745 = vcmask 1041408
      %v747 = vsel %vm745, %v740, 0
      %749 = vmatprep.subr.bf16.mxu0 0
      %750 = vmatpush1.bf16.msra.mxu0 %v747
      %751 = vmatprep.subr.bf16.mxu0 0
      %752 = vmatpush1.bf16.msra.mxu0 0
      %753 = vmatprep.subr.bf16.mxu0 0
      %754 = vmatpush1.bf16.msra.mxu0 0
      %755 = vmatprep.subr.bf16.mxu0 0
      %756 = vmatpush1.bf16.msra.mxu0 0
      %757 = vmatprep.subr.bf16.mxu0 0
      %758 = vmatpush1.bf16.msra.mxu0 0
      %759 = vmatprep.subr.bf16.mxu0 0
      %760 = vmatpush1.bf16.msra.mxu0 0
      %761 = vmatprep.subr.bf16.mxu0 0
      %762 = vmatpush1.bf16.msra.mxu0 0
      %763 = vmatprep.subr.bf16.mxu0 0
      %764 = vmatpush1.bf16.msra.mxu0 0
      %765 = vmatprep.subr.bf16.mxu0 0
      %766 = vmatpush1.bf16.msra.mxu0 0
      %767 = vmatprep.subr.bf16.mxu0 0
      %768 = vmatpush1.bf16.msra.mxu0 0
      %769 = vmatprep.subr.bf16.mxu0 0
      %770 = vmatpush1.bf16.msra.mxu0 0
      %771 = vmatprep.subr.bf16.mxu0 0
      %772 = vmatpush1.bf16.msra.mxu0 0
      %773 = vmatprep.subr.bf16.mxu0 0
      %774 = vmatpush1.bf16.msra.mxu0 0
      %775 = vmatprep.subr.bf16.mxu0 0
      %776 = vmatpush1.bf16.msra.mxu0 0
      %777 = vmatprep.subr.bf16.mxu0 0
      %778 = vmatpush1.bf16.msra.mxu0 0
      %779 = vmatprep.subr.bf16.mxu0 0
      %780 = vmatpush1.bf16.msra.mxu0 0
      %781 = vmatprep.mubr.bf16.mxu0 0
      %782 = vmatmul.mubr.bf16.gmra.mrb[0].mxu0 %v743
      %v783 = vpop.f32.mrb[0].mxu0
      %v784 = vadd.f32 0.0, %v783
      %v785 = vpop.f32.mrb[0].mxu0
      %v786 = vpop.f32.mrb[0].mxu0
      %v787 = vpop.f32.mrb[0].mxu0
      %788 = vdwg.mxu0
      %v790 = vsel %vm741, %v725, 0
      %v793 = vsel %vm745, %v727, 0
      %795 = vmatprep.subr.bf16.mxu0 0
      %796 = vmatpush1.bf16.msra.mxu0 %v793
      %797 = vmatprep.subr.bf16.mxu0 0
      %798 = vmatpush1.bf16.msra.mxu0 0
      %799 = vmatprep.subr.bf16.mxu0 0
      %800 = vmatpush1.bf16.msra.mxu0 0
      %801 = vmatprep.subr.bf16.mxu0 0
      %802 = vmatpush1.bf16.msra.mxu0 0
      %803 = vmatprep.subr.bf16.mxu0 0
      %804 = vmatpush1.bf16.msra.mxu0 0
      %805 = vmatprep.subr.bf16.mxu0 0
      %806 = vmatpush1.bf16.msra.mxu0 0
      %807 = vmatprep.subr.bf16.mxu0 0
      %808 = vmatpush1.bf16.msra.mxu0 0
      %809 = vmatprep.subr.bf16.mxu0 0
      %810 = vmatpush1.bf16.msra.mxu0 0
      %811 = vmatprep.subr.bf16.mxu0 0
      %812 = vmatpush1.bf16.msra.mxu0 0
      %813 = vmatprep.subr.bf16.mxu0 0
      %814 = vmatpush1.bf16.msra.mxu0 0
      %815 = vmatprep.subr.bf16.mxu0 0
      %816 = vmatpush1.bf16.msra.mxu0 0
      %817 = vmatprep.subr.bf16.mxu0 0
      %818 = vmatpush1.bf16.msra.mxu0 0
      %819 = vmatprep.subr.bf16.mxu0 0
      %820 = vmatpush1.bf16.msra.mxu0 0
      %821 = vmatprep.subr.bf16.mxu0 0
      %822 = vmatpush1.bf16.msra.mxu0 0
      %823 = vmatprep.subr.bf16.mxu0 0
      %824 = vmatpush1.bf16.msra.mxu0 0
      %825 = vmatprep.subr.bf16.mxu0 0
      %826 = vmatpush1.bf16.msra.mxu0 0
      %827 = vmatprep.mubr.bf16.mxu0 0
      %828 = vmatmul.mubr.bf16.gmra.mrb[0].mxu0 %v790
      %v829 = vpop.f32.mrb[0].mxu0
      %v830 = vadd.f32 %v784, %v829
      %v831 = vpop.f32.mrb[0].mxu0
      %v832 = vpop.f32.mrb[0].mxu0
      %v833 = vpop.f32.mrb[0].mxu0
      %834 = vdwg.mxu0
      %835 = vrot.lane.b32.xlu0 %v735, 120
      %v836 = vpop.permute.xlu0 %835
      %837 = vrot.lane.b32.xlu0 %v727, 122
      %v838 = vpop.permute.xlu0 %837
      %v840 = vsel %vm741, %v836, 0
      %v843 = vsel %vm745, %v838, 0
      %845 = vmatprep.subr.bf16.mxu0 0
      %846 = vmatpush1.bf16.msra.mxu0 %v843
      %847 = vmatprep.subr.bf16.mxu0 0
      %848 = vmatpush1.bf16.msra.mxu0 0
      %849 = vmatprep.subr.bf16.mxu0 0
      %850 = vmatpush1.bf16.msra.mxu0 0
      %851 = vmatprep.subr.bf16.mxu0 0
      %852 = vmatpush1.bf16.msra.mxu0 0
      %853 = vmatprep.subr.bf16.mxu0 0
      %854 = vmatpush1.bf16.msra.mxu0 0
      %855 = vmatprep.subr.bf16.mxu0 0
      %856 = vmatpush1.bf16.msra.mxu0 0
      %857 = vmatprep.subr.bf16.mxu0 0
      %858 = vmatpush1.bf16.msra.mxu0 0
      %859 = vmatprep.subr.bf16.mxu0 0
      %860 = vmatpush1.bf16.msra.mxu0 0
      %861 = vmatprep.subr.bf16.mxu0 0
      %862 = vmatpush1.bf16.msra.mxu0 0
      %863 = vmatprep.subr.bf16.mxu0 0
      %864 = vmatpush1.bf16.msra.mxu0 0
      %865 = vmatprep.subr.bf16.mxu0 0
      %866 = vmatpush1.bf16.msra.mxu0 0
      %867 = vmatprep.subr.bf16.mxu0 0
      %868 = vmatpush1.bf16.msra.mxu0 0
      %869 = vmatprep.subr.bf16.mxu0 0
      %870 = vmatpush1.bf16.msra.mxu0 0
      %871 = vmatprep.subr.bf16.mxu0 0
      %872 = vmatpush1.bf16.msra.mxu0 0
      %873 = vmatprep.subr.bf16.mxu0 0
      %874 = vmatpush1.bf16.msra.mxu0 0
      %875 = vmatprep.subr.bf16.mxu0 0
      %876 = vmatpush1.bf16.msra.mxu0 0
      %877 = vmatprep.mubr.bf16.mxu0 0
      %878 = vmatmul.mubr.bf16.gmra.mrb[0].mxu0 %v840
      %v879 = vpop.f32.mrb[0].mxu0
      %v880 = vadd.f32 0.0, %v879
      %v881 = vpop.f32.mrb[0].mxu0
      %v882 = vpop.f32.mrb[0].mxu0
      %v883 = vpop.f32.mrb[0].mxu0
      %884 = vdwg.mxu0
      %v885 = vadd.f32 %v830, %v880
      %887 = vset.pattern.permute.xlu0 0
      %888 = vperm.xlu0 %887, %v726
      %v889 = vpop.permute.xlu0 %888
      %v891 = vadd.f32 %v885, %v889
      %s892 = ssub.s32 %s360, 11
      %v893 = vstv %s892
      %v894 = vadd.s32 %v645, %v893
      %vm895 = vcmp.ge.s32.totalorder %v894, 0
      %v896 = vsel %vm895, %v891, 0.0
      %v897 = vld [vmem:[%s7] sm:$0xf]
      %v898 = vld [vmem:[%s8] sm:$0xf]
      %s899 = ssub.s32 %s360, 1
      %v900 = vmul.f32 %v896, 0.018778928
      %v901 = vmul.f32 %v896, 0.004057933
      %v902 = vmul.f32 %v896, -0.11531475
      %904 = vrot.lane.b32.xlu0 %v902, 1
      %v905 = vpop.permute.xlu0 %904
      %v907 = vadd.f32 %v900, %v905
      %v908 = vmul.f32 %v896, -0.05108693
      %910 = vrot.lane.b32.xlu0 %v908, 1
      %v911 = vpop.permute.xlu0 %910
      %v913 = vadd.f32 %v901, %v911
      %v914 = vmul.f32 %v896, 0.8864196
      %916 = vrot.lane.b32.xlu0 %v914, 2
      %v917 = vpop.permute.xlu0 %916
      %v919 = vadd.f32 %v907, %v917
      %v920 = vmul.f32 %v896, 0.25714523
      %922 = vrot.lane.b32.xlu0 %v920, 2
      %v923 = vpop.permute.xlu0 %922
      %v925 = vadd.f32 %v913, %v923
      %926 = vrot.lane.b32.xlu0 %v920, 3
      %v927 = vpop.permute.xlu0 %926
      %v929 = vadd.f32 %v919, %v927
      %930 = vrot.lane.b32.xlu0 %v914, 3
      %v931 = vpop.permute.xlu0 %930
      %v933 = vadd.f32 %v925, %v931
      %934 = vrot.lane.b32.xlu0 %v908, 4
      %v935 = vpop.permute.xlu0 %934
      %v937 = vadd.f32 %v929, %v935
      %938 = vrot.lane.b32.xlu0 %v902, 4
      %v939 = vpop.permute.xlu0 %938
      %v941 = vadd.f32 %v933, %v939
      %943 = vrot.lane.b32.xlu0 %v901, 5
      %v944 = vpop.permute.xlu0 %943
      %v946 = vadd.f32 %v937, %v944
      %948 = vrot.lane.b32.xlu0 %v900, 5
      %v949 = vpop.permute.xlu0 %948
      %v951 = vadd.f32 %v941, %v949
      %953 = vset.pattern.permute.xlu0 0
      %954 = vperm.xlu0 %953, %v897
      %v955 = vpop.permute.xlu0 %954
      %v957 = vmul.f32 %v946, %v955
      %v958 = vand.u32 2147483647, %v957
      %vm959 = vcmp.le.f32.partialorder %v958, 0.7853982
      %vm960 = vcmp.lt.s32.totalorder %v957, 0
      %v961 = vand.u32 %v957, 2139095040
      %v962 = vshrl.u32 %v961, 23
      %v963 = vsub.s32 %v962, 127
      %v964 = vand.u32 2147483647, %v957
      %v965 = vand.u32 %v964, 8388607
      %v966 = vor.u32 %v965, 8388608
      %v967 = vsub.s32 0, %v966
      %v968 = vadd.s32 %v963, 1
      %vm969 = vcmp.gt.s32.totalorder %v968, 0
      %v970 = vsel %vm969, %v968, 0
      %v971 = vshrl.u32 %v970, 5
      %v972 = vand.u32 %v970, 31
      %v973 = vsub.s32 32, %v972
      %v974 = vshrl.u32 683565275, %v973
      %v975 = vshll.u32 683565275, %v972
      %v976 = vshrl.u32 2475754826, %v973
      %v977 = vor.u32 %v975, %v976
      %v978 = vshll.u32 2475754826, %v972
      %v979 = vshrl.u32 2131351028, %v973
      %v980 = vor.u32 %v978, %v979
      %v981 = vshll.u32 2131351028, %v972
      %v982 = vshrl.u32 2102212464, %v973
      %v983 = vor.u32 %v981, %v982
      %v984 = vshll.u32 2102212464, %v972
      %v985 = vshrl.u32 920167782, %v973
      %v986 = vor.u32 %v984, %v985
      %v987 = vshll.u32 920167782, %v972
      %v988 = vshrl.u32 1326507024, %v973
      %v989 = vor.u32 %v987, %v988
      %vm990 = vcmp.lt.s32.totalorder %v971, 1
      %vm991 = vcmp.lt.s32.totalorder %v971, 2
      %vm992 = vcmp.lt.s32.totalorder %v971, 3
      %vm993 = vcmp.lt.s32.totalorder %v971, 4
      %v994 = vsel %vm990, %v974, %v977
      %v995 = vsel %vm993, %v983, 2102212464
      %v996 = vsel %vm992, %v980, %v995
      %v997 = vsel %vm991, %v994, %v996
      %v998 = vsel %vm990, %v977, %v980
      %v999 = vsel %vm993, %v986, 920167782
      %v1000 = vsel %vm992, %v983, %v999
      %v1001 = vsel %vm991, %v998, %v1000
      %v1002 = vsel %vm990, %v980, %v983
      %v1003 = vsel %vm993, %v989, 1326507024
      %v1004 = vsel %vm992, %v986, %v1003
      %v1005 = vsel %vm991, %v1002, %v1004
      %v1006 = vshll.u32 %v966, 8
      %v1007 = vmul.u32.u64.compose %v1006, %v1005
      %v1008 = vextract.low.u32 %v1007
      %v1009 = vextract.high.u32 %v1007
      %v1010 = vmul.u32.u64.compose %v1006, %v1001
      %v1011 = vextract.low.u32 %v1010
      %v1012 = vextract.high.u32 %v1010
      %v1013 = vmul.u32 %v1006, %v997
      %v1014 = vadd.s32 %v1009, %v1011
      %vm1015 = vc.u32 %v1009, %v1011
      %v1016 = vadd.s32 %v1012, 1
      %v1017 = vsel %vm1015, %v1016, %v1012
      %v1018 = vadd.s32 %v1013, %v1017
      %v1019 = vadd.s32 %v1018, 536870912
      %v1020 = vshrl.u32 %v1019, 30
      %v1021 = vshll.u32 %v1020, 30
      %v1022 = vsub.s32 %v1018, %v1021
      %vm1023 = vcmp.lt.s32.totalorder %v1022, 0
      %v1024 = vsub.s32 0, %v1022
      %v1025 = vsel %vm1023, %v1024, %v1022
      %v1026 = vclz %v1025
      %v1027 = vsub.s32 %v1026, 2
      %vm1028 = vcmp.gt.s32.totalorder 0, %v1027
      %v1029 = vsel %vm1028, 0, %v1027
      %v1030 = vsub.s32 32, %v1029
      %v1031 = vshll.u32 %v1022, %v1029
      %v1032 = vshrl.u32 %v1014, %v1030
      %v1033 = vor.u32 %v1031, %v1032
      %v1034 = vsub.s32 4294967266, %v1029
      %v1035 = vadd.s32 %v1034, 127
      %v1036 = vshll.u32 %v1035, 23
      %v1037 = vor.u32 4788187, %v1036
      %v1038 = vand.u32 2147483647, %v1037
      %v1040 = vcvt.s32.f32 %v1033
      %v1041 = vmul.f32 %v1040, %v1038
      %v1042 = vxor.u32 %v1041, 2147483648
      %v1043 = vsel %vm960, %v1042, %v1041
      %v1044 = vsub.s32 4, %v1020
      %v1045 = vsel %vm960, %v1044, %v1020
      %v1046 = vsel %vm959, %v957, %v1043
      %v1047 = vsel %vm959, 0, %v1045
      %v1048 = vcosq.f32.pop %v1046
      %v1049 = vsinq.f32.pop %v1046
      %vm1050 = vweird.f32 %v957
      %v1051 = vadd.s32 %v1047, 3
      %v1052 = vand.u32 %v1051, 3
      %vm1053 = vcmp.lt.s32.totalorder %v1052, 2
      %vm1054 = vcmp.eq.s32.totalorder %v1052, 0
      %v1055 = vxor.u32 %v1049, 2147483648
      %v1056 = vsel %vm1054, %v1048, %v1055
      %vm1057 = vcmp.eq.s32.totalorder %v1052, 2
      %v1058 = vxor.u32 %v1048, 2147483648
      %v1059 = vsel %vm1057, %v1058, %v1049
      %v1060 = vsel %vm1053, %v1056, %v1059
      %v1061 = vsel %vm1050, nan, %v1060
      %v1062 = vmul.f32 %v1061, %v1061
      %1064 = vset.pattern.permute.xlu0 0
      %1065 = vperm.xlu0 %1064, %v898
      %v1066 = vpop.permute.xlu0 %1065
      %v1068 = vmul.f32 %v1066, %v1062
      %v1069 = vadd.f32 %v946, %v1068
      %v1070 = vmul.f32 %v951, %v955
      %v1071 = vand.u32 2147483647, %v1070
      %vm1072 = vcmp.le.f32.partialorder %v1071, 0.7853982
      %vm1073 = vcmp.lt.s32.totalorder %v1070, 0
      %v1074 = vand.u32 %v1070, 2139095040
      %v1075 = vshrl.u32 %v1074, 23
      %v1076 = vsub.s32 %v1075, 127
      %v1077 = vand.u32 2147483647, %v1070
      %v1078 = vand.u32 %v1077, 8388607
      %v1079 = vor.u32 %v1078, 8388608
      %v1080 = vsub.s32 0, %v1079
      %v1081 = vadd.s32 %v1076, 1
      %vm1082 = vcmp.gt.s32.totalorder %v1081, 0
      %v1083 = vsel %vm1082, %v1081, 0
      %v1084 = vshrl.u32 %v1083, 5
      %v1085 = vand.u32 %v1083, 31
      %v1086 = vsub.s32 32, %v1085
      %v1087 = vshrl.u32 683565275, %v1086
      %v1088 = vshll.u32 683565275, %v1085
      %v1089 = vshrl.u32 2475754826, %v1086
      %v1090 = vor.u32 %v1088, %v1089
      %v1091 = vshll.u32 2475754826, %v1085
      %v1092 = vshrl.u32 2131351028, %v1086
      %v1093 = vor.u32 %v1091, %v1092
      %v1094 = vshll.u32 2131351028, %v1085
      %v1095 = vshrl.u32 2102212464, %v1086
      %v1096 = vor.u32 %v1094, %v1095
      %v1097 = vshll.u32 2102212464, %v1085
      %v1098 = vshrl.u32 920167782, %v1086
      %v1099 = vor.u32 %v1097, %v1098
      %v1100 = vshll.u32 920167782, %v1085
      %v1101 = vshrl.u32 1326507024, %v1086
      %v1102 = vor.u32 %v1100, %v1101
      %vm1103 = vcmp.lt.s32.totalorder %v1084, 1
      %vm1104 = vcmp.lt.s32.totalorder %v1084, 2
      %vm1105 = vcmp.lt.s32.totalorder %v1084, 3
      %vm1106 = vcmp.lt.s32.totalorder %v1084, 4
      %v1107 = vsel %vm1103, %v1087, %v1090
      %v1108 = vsel %vm1106, %v1096, 2102212464
      %v1109 = vsel %vm1105, %v1093, %v1108
      %v1110 = vsel %vm1104, %v1107, %v1109
      %v1111 = vsel %vm1103, %v1090, %v1093
      %v1112 = vsel %vm1106, %v1099, 920167782
      %v1113 = vsel %vm1105, %v1096, %v1112
      %v1114 = vsel %vm1104, %v1111, %v1113
      %v1115 = vsel %vm1103, %v1093, %v1096
      %v1116 = vsel %vm1106, %v1102, 1326507024
      %v1117 = vsel %vm1105, %v1099, %v1116
      %v1118 = vsel %vm1104, %v1115, %v1117
      %v1119 = vshll.u32 %v1079, 8
      %v1120 = vmul.u32.u64.compose %v1119, %v1118
      %v1121 = vextract.low.u32 %v1120
      %v1122 = vextract.high.u32 %v1120
      %v1123 = vmul.u32.u64.compose %v1119, %v1114
      %v1124 = vextract.low.u32 %v1123
      %v1125 = vextract.high.u32 %v1123
      %v1126 = vmul.u32 %v1119, %v1110
      %v1127 = vadd.s32 %v1122, %v1124
      %vm1128 = vc.u32 %v1122, %v1124
      %v1129 = vadd.s32 %v1125, 1
      %v1130 = vsel %vm1128, %v1129, %v1125
      %v1131 = vadd.s32 %v1126, %v1130
      %v1132 = vadd.s32 %v1131, 536870912
      %v1133 = vshrl.u32 %v1132, 30
      %v1134 = vshll.u32 %v1133, 30
      %v1135 = vsub.s32 %v1131, %v1134
      %vm1136 = vcmp.lt.s32.totalorder %v1135, 0
      %v1137 = vsub.s32 0, %v1135
      %v1138 = vsel %vm1136, %v1137, %v1135
      %v1139 = vclz %v1138
      %v1140 = vsub.s32 %v1139, 2
      %vm1141 = vcmp.gt.s32.totalorder 0, %v1140
      %v1142 = vsel %vm1141, 0, %v1140
      %v1143 = vsub.s32 32, %v1142
      %v1144 = vshll.u32 %v1135, %v1142
      %v1145 = vshrl.u32 %v1127, %v1143
      %v1146 = vor.u32 %v1144, %v1145
      %v1147 = vsub.s32 4294967266, %v1142
      %v1148 = vadd.s32 %v1147, 127
      %v1149 = vshll.u32 %v1148, 23
      %v1150 = vor.u32 4788187, %v1149
      %v1151 = vand.u32 2147483647, %v1150
      %v1153 = vcvt.s32.f32 %v1146
      %v1154 = vmul.f32 %v1153, %v1151
      %v1155 = vxor.u32 %v1154, 2147483648
      %v1156 = vsel %vm1073, %v1155, %v1154
      %v1157 = vsub.s32 4, %v1133
      %v1158 = vsel %vm1073, %v1157, %v1133
      %v1159 = vsel %vm1072, %v1070, %v1156
      %v1160 = vsel %vm1072, 0, %v1158
      %v1161 = vcosq.f32.pop %v1159
      %v1162 = vsinq.f32.pop %v1159
      %vm1163 = vweird.f32 %v1070
      %v1164 = vadd.s32 %v1160, 3
      %v1165 = vand.u32 %v1164, 3
      %vm1166 = vcmp.lt.s32.totalorder %v1165, 2
      %vm1167 = vcmp.eq.s32.totalorder %v1165, 0
      %v1168 = vxor.u32 %v1162, 2147483648
      %v1169 = vsel %vm1167, %v1161, %v1168
      %vm1170 = vcmp.eq.s32.totalorder %v1165, 2
      %v1171 = vxor.u32 %v1161, 2147483648
      %v1172 = vsel %vm1170, %v1171, %v1162
      %v1173 = vsel %vm1166, %v1169, %v1172
      %v1174 = vsel %vm1163, nan, %v1173
      %v1175 = vmul.f32 %v1174, %v1174
      %v1176 = vmul.f32 %v1066, %v1175
      %v1177 = vadd.f32 %v951, %v1176
      %s1178 = ssub.s32 %s360, 7
      %v1179 = vstv %s1178
      %v1180 = vadd.s32 %v645, %v1179
      %vm1181 = vcmp.ge.s32.totalorder %v1180, 0
      %1183 = vrot.lane.b32.xlu0 %v1177, 123
      %v1184 = vpop.permute.xlu0 %1183
      %v1186 = vsel %vm1181, %v1184, 0.0
      %v1187 = vmul.f32 %v1069, 0.009389464
      %v1188 = vmul.f32 %v1186, 0.0020289666
      %1190 = vrot.lane.b32.xlu0 %v1188, 5
      %v1191 = vpop.permute.xlu0 %1190
      %v1193 = vadd.f32 %v1187, %v1191
      %v1194 = vmul.f32 %v1069, -0.057657376
      %1196 = vrot.lane.b32.xlu0 %v1194, 127
      %v1197 = vpop.permute.xlu0 %1196
      %v1199 = vadd.f32 %v1193, %v1197
      %v1200 = vmul.f32 %v1186, -0.025543464
      %1202 = vrot.lane.b32.xlu0 %v1200, 4
      %v1203 = vpop.permute.xlu0 %1202
      %v1205 = vadd.f32 %v1199, %v1203
      %v1206 = vmul.f32 %v1069, 0.4432098
      %1208 = vrot.lane.b32.xlu0 %v1206, 126
      %v1209 = vpop.permute.xlu0 %1208
      %v1211 = vadd.f32 %v1205, %v1209
      %v1212 = vmul.f32 %v1186, 0.12857261
      %1214 = vrot.lane.b32.xlu0 %v1212, 3
      %v1215 = vpop.permute.xlu0 %1214
      %v1217 = vadd.f32 %v1211, %v1215
      %v1218 = vmul.f32 %v1069, 0.12857261
      %1220 = vrot.lane.b32.xlu0 %v1218, 125
      %v1221 = vpop.permute.xlu0 %1220
      %v1223 = vadd.f32 %v1217, %v1221
      %v1224 = vmul.f32 %v1186, 0.4432098
      %1226 = vrot.lane.b32.xlu0 %v1224, 2
      %v1227 = vpop.permute.xlu0 %1226
      %v1229 = vadd.f32 %v1223, %v1227
      %v1230 = vmul.f32 %v1069, -0.025543464
      %1232 = vrot.lane.b32.xlu0 %v1230, 124
      %v1233 = vpop.permute.xlu0 %1232
      %v1235 = vadd.f32 %v1229, %v1233
      %v1236 = vmul.f32 %v1186, -0.057657376
      %1238 = vrot.lane.b32.xlu0 %v1236, 1
      %v1239 = vpop.permute.xlu0 %1238
      %v1241 = vadd.f32 %v1235, %v1239
      %v1242 = vmul.f32 %v1069, 0.0020289666
      %1244 = vrot.lane.b32.xlu0 %v1242, 123
      %v1245 = vpop.permute.xlu0 %1244
      %v1247 = vadd.f32 %v1241, %v1245
      %v1248 = vmul.f32 %v1186, 0.009389464
      %v1249 = vadd.f32 %v1247, %v1248
      %v1250 = vstv %s899
      %v1251 = vadd.s32 %v645, %v1250
      %vm1252 = vcmp.lt.s32.totalorder %v1251, 16
      %1254 = vrot.lane.b32.xlu0 %v1249, 123
      %v1255 = vpop.permute.xlu0 %1254
      %v1257 = vsel %vm1252, %v1255, 0.0
      %v1258 = vld [vmem:[%s5] sm:$0x3]
      %v1259 = vld [vmem:[%s6] sm:$0xf]
      %v1260 = vpack.c.bf16 %v1257, %v1257
      %v1263 = vunpack.c.l.s4 1983009808
      %v1264 = vunpack.c.0.s8 %v1263
      %v1265 = vlaneseq
      %v1266 = vshrl.u32 %v1265, 7
      %v1267 = vsub.s32 %v1264, %v1266
      %v1268 = vrot.slane %v1258, %v1267
      %1269 = vrot.lane.b32.xlu0 %v1268, 124
      %v1270 = vpop.permute.xlu0 %1269
      %1272 = vrot.lane.b32.xlu0 %v1260, 127
      %v1273 = vpop.permute.xlu0 %1272
      %v1275 = vsel %vm741, %v1270, 0
      %v1278 = vsel %vm745, %v1273, 0
      %1280 = vmatprep.subr.bf16.mxu0 0
      %1281 = vmatpush1.bf16.msra.mxu0 %v1278
      %1282 = vmatprep.subr.bf16.mxu0 0
      %1283 = vmatpush1.bf16.msra.mxu0 0
      %1284 = vmatprep.subr.bf16.mxu0 0
      %1285 = vmatpush1.bf16.msra.mxu0 0
      %1286 = vmatprep.subr.bf16.mxu0 0
      %1287 = vmatpush1.bf16.msra.mxu0 0
      %1288 = vmatprep.subr.bf16.mxu0 0
      %1289 = vmatpush1.bf16.msra.mxu0 0
      %1290 = vmatprep.subr.bf16.mxu0 0
      %1291 = vmatpush1.bf16.msra.mxu0 0
      %1292 = vmatprep.subr.bf16.mxu0 0
      %1293 = vmatpush1.bf16.msra.mxu0 0
      %1294 = vmatprep.subr.bf16.mxu0 0
      %1295 = vmatpush1.bf16.msra.mxu0 0
      %1296 = vmatprep.subr.bf16.mxu0 0
      %1297 = vmatpush1.bf16.msra.mxu0 0
      %1298 = vmatprep.subr.bf16.mxu0 0
      %1299 = vmatpush1.bf16.msra.mxu0 0
      %1300 = vmatprep.subr.bf16.mxu0 0
      %1301 = vmatpush1.bf16.msra.mxu0 0
      %1302 = vmatprep.subr.bf16.mxu0 0
      %1303 = vmatpush1.bf16.msra.mxu0 0
      %1304 = vmatprep.subr.bf16.mxu0 0
      %1305 = vmatpush1.bf16.msra.mxu0 0
      %1306 = vmatprep.subr.bf16.mxu0 0
      %1307 = vmatpush1.bf16.msra.mxu0 0
      %1308 = vmatprep.subr.bf16.mxu0 0
      %1309 = vmatpush1.bf16.msra.mxu0 0
      %1310 = vmatprep.subr.bf16.mxu0 0
      %1311 = vmatpush1.bf16.msra.mxu0 0
      %1312 = vmatprep.mubr.bf16.mxu0 0
      %1313 = vmatmul.mubr.bf16.gmra.mrb[0].mxu0 %v1275
      %v1314 = vpop.f32.mrb[0].mxu0
      %v1315 = vadd.f32 0.0, %v1314
      %v1316 = vpop.f32.mrb[0].mxu0
      %v1317 = vpop.f32.mrb[0].mxu0
      %v1318 = vpop.f32.mrb[0].mxu0
      %1319 = vdwg.mxu0
      %v1321 = vsel %vm741, %v1258, 0
      %v1324 = vsel %vm745, %v1260, 0
      %1326 = vmatprep.subr.bf16.mxu0 0
      %1327 = vmatpush1.bf16.msra.mxu0 %v1324
      %1328 = vmatprep.subr.bf16.mxu0 0
      %1329 = vmatpush1.bf16.msra.mxu0 0
      %1330 = vmatprep.subr.bf16.mxu0 0
      %1331 = vmatpush1.bf16.msra.mxu0 0
      %1332 = vmatprep.subr.bf16.mxu0 0
      %1333 = vmatpush1.bf16.msra.mxu0 0
      %1334 = vmatprep.subr.bf16.mxu0 0
      %1335 = vmatpush1.bf16.msra.mxu0 0
      %1336 = vmatprep.subr.bf16.mxu0 0
      %1337 = vmatpush1.bf16.msra.mxu0 0
      %1338 = vmatprep.subr.bf16.mxu0 0
      %1339 = vmatpush1.bf16.msra.mxu0 0
      %1340 = vmatprep.subr.bf16.mxu0 0
      %1341 = vmatpush1.bf16.msra.mxu0 0
      %1342 = vmatprep.subr.bf16.mxu0 0
      %1343 = vmatpush1.bf16.msra.mxu0 0
      %1344 = vmatprep.subr.bf16.mxu0 0
      %1345 = vmatpush1.bf16.msra.mxu0 0
      %1346 = vmatprep.subr.bf16.mxu0 0
      %1347 = vmatpush1.bf16.msra.mxu0 0
      %1348 = vmatprep.subr.bf16.mxu0 0
      %1349 = vmatpush1.bf16.msra.mxu0 0
      %1350 = vmatprep.subr.bf16.mxu0 0
      %1351 = vmatpush1.bf16.msra.mxu0 0
      %1352 = vmatprep.subr.bf16.mxu0 0
      %1353 = vmatpush1.bf16.msra.mxu0 0
      %1354 = vmatprep.subr.bf16.mxu0 0
      %1355 = vmatpush1.bf16.msra.mxu0 0
      %1356 = vmatprep.subr.bf16.mxu0 0
      %1357 = vmatpush1.bf16.msra.mxu0 0
      %1358 = vmatprep.mubr.bf16.mxu0 0
      %1359 = vmatmul.mubr.bf16.gmra.mrb[0].mxu0 %v1321
      %v1360 = vpop.f32.mrb[0].mxu0
      %v1361 = vadd.f32 %v1315, %v1360
      %v1362 = vpop.f32.mrb[0].mxu0
      %v1363 = vpop.f32.mrb[0].mxu0
      %v1364 = vpop.f32.mrb[0].mxu0
      %1365 = vdwg.mxu0
      %1366 = vrot.lane.b32.xlu0 %v1268, 120
      %v1367 = vpop.permute.xlu0 %1366
      %1368 = vrot.lane.b32.xlu0 %v1260, 126
      %v1369 = vpop.permute.xlu0 %1368
      %v1371 = vsel %vm741, %v1367, 0
      %v1374 = vsel %vm745, %v1369, 0
      %1376 = vmatprep.subr.bf16.mxu0 0
      %1377 = vmatpush1.bf16.msra.mxu0 %v1374
      %1378 = vmatprep.subr.bf16.mxu0 0
      %1379 = vmatpush1.bf16.msra.mxu0 0
      %1380 = vmatprep.subr.bf16.mxu0 0
      %1381 = vmatpush1.bf16.msra.mxu0 0
      %1382 = vmatprep.subr.bf16.mxu0 0
      %1383 = vmatpush1.bf16.msra.mxu0 0
      %1384 = vmatprep.subr.bf16.mxu0 0
      %1385 = vmatpush1.bf16.msra.mxu0 0
      %1386 = vmatprep.subr.bf16.mxu0 0
      %1387 = vmatpush1.bf16.msra.mxu0 0
      %1388 = vmatprep.subr.bf16.mxu0 0
      %1389 = vmatpush1.bf16.msra.mxu0 0
      %1390 = vmatprep.subr.bf16.mxu0 0
      %1391 = vmatpush1.bf16.msra.mxu0 0
      %1392 = vmatprep.subr.bf16.mxu0 0
      %1393 = vmatpush1.bf16.msra.mxu0 0
      %1394 = vmatprep.subr.bf16.mxu0 0
      %1395 = vmatpush1.bf16.msra.mxu0 0
      %1396 = vmatprep.subr.bf16.mxu0 0
      %1397 = vmatpush1.bf16.msra.mxu0 0
      %1398 = vmatprep.subr.bf16.mxu0 0
      %1399 = vmatpush1.bf16.msra.mxu0 0
      %1400 = vmatprep.subr.bf16.mxu0 0
      %1401 = vmatpush1.bf16.msra.mxu0 0
      %1402 = vmatprep.subr.bf16.mxu0 0
      %1403 = vmatpush1.bf16.msra.mxu0 0
      %1404 = vmatprep.subr.bf16.mxu0 0
      %1405 = vmatpush1.bf16.msra.mxu0 0
      %1406 = vmatprep.subr.bf16.mxu0 0
      %1407 = vmatpush1.bf16.msra.mxu0 0
      %1408 = vmatprep.mubr.bf16.mxu0 0
      %1409 = vmatmul.mubr.bf16.gmra.mrb[0].mxu0 %v1371
      %v1410 = vpop.f32.mrb[0].mxu0
      %v1411 = vadd.f32 0.0, %v1410
      %v1412 = vpop.f32.mrb[0].mxu0
      %v1413 = vpop.f32.mrb[0].mxu0
      %v1414 = vpop.f32.mrb[0].mxu0
      %1415 = vdwg.mxu0
      %v1416 = vadd.f32 %v1361, %v1411
      %1418 = vset.pattern.permute.xlu0 0
      %1419 = vperm.xlu0 %1418, %v1259
      %v1420 = vpop.permute.xlu0 %1419
      %v1422 = vadd.f32 %v1416, %v1420
      %1424 = vrot.lane.b32.xlu0 %v361, 104
      %v1425 = vpop.permute.xlu0 %1424
      %v1427 = vadd.f32 %v1422, %v1425
      %vm1428 = vcmask 125952
      %1429 = vst.msk [vmem:[%s358] sm:$0xf] %vm1428, %v1427
      %p1430 = scmp.lt.s32.totalorder %s24, 1
      %s1431 = scalar_select %p1430, %s24, 1
      %p1432 = scmp.lt.s32.totalorder %s25, 0
      %s1433 = scalar_select %p1432, %s25, 0
      %s1434 = sadd.s32 %s1433, %s1431
      %s1435 = smul.addr %s1434, 4
      %s1436 = scalar_lea.vmem %s9, %s1435
      // Predicated region
      $region57: #{_lambda_.4} parent=55 // pred_check
        %p1437 = pneg %p248
      $region58: #{_lambda_.4} parent=55 // pred_check_branch
        %1439 = sbr.rel (%p1437) target = $region60
      $region59: #{_lambda_.4} parent=55 // pred_region
        _
      $region60: #{_lambda_.4} parent=55 // pred_fallthru
        _
    $region56: #{_lambda_.4} parent=5 // pred_fallthru
      _
    %p1440 = scmp.le.s32.totalorder 2, %s15
    // Predicated region
    $region61: #{_lambda_.4} parent=5 // pred_check
      %p1441 = pneg %p1440
    $region62: #{_lambda_.4} parent=5 // pred_check_branch
      %1443 = sbr.rel (%p1441) target = $region64
    $region63: #{_lambda_.4} parent=5 // pred_region
      %s1444 = ssub.s32 %s15, 2
      // Predicated region
      $region65: #{_lambda_.4} parent=63 // pred_check
        %p1445 = pneg %p254
      $region66: #{_lambda_.4} parent=63 // pred_check_branch
        %1447 = sbr.rel (%p1445) target = $region68
      $region67: #{_lambda_.4} parent=63 // pred_region
        %p1448 = scmp.lt.s32.totalorder %s26, 1
        %s1449 = scalar_select %p1448, %s26, 1
        %p1450 = scmp.lt.s32.totalorder %s27, 0
        %s1451 = scalar_select %p1450, %s27, 0
        %s1452 = sadd.s32 %s1451, %s1449
        %s1453 = smul.addr %s1452, 4
        %s1454 = scalar_lea.vmem %s9, %s1453
      $region68: #{_lambda_.4} parent=63 // pred_fallthru
        _
    $region64: #{_lambda_.4} parent=5 // pred_fallthru
      _
  $region6: #{_lambda_.4} parent=0 // loop_footer
    %s19 = sadd.s32 1, %s15
  $region7: #{_lambda_.4} parent=0 // loop_footer_branch
    %14 = sbr.rel target = $region3
  $region8: #{_lambda_.4} parent=0 // loop_exit
    _

// kernel: _lambda_.3
$region0: #{_lambda_.3}
  #allocation0 [shape = 'u32[]', space=smem, size = 0x4, offset = 0x4, fixed_abs, tag = 'smem constant byte address 0x4 - core index']
  #allocation1 [shape = 'u32[144,128]{1,0:T(1,128)}', space=vmem, size = 0x12000, scoped, tag = 'internal scratch']
  %s0 = inlined_call_operand.vmem [shape: f32[2,1,4,40], index: 0, kind: input, shape index: {}]
  %s1 = inlined_call_operand.vmem [shape: bf16[4,12], index: 1, kind: input, shape index: {}]
  %s2 = inlined_call_operand.vmem [shape: f32[4,1], index: 2, kind: input, shape index: {}]
  %s3 = inlined_call_operand.vmem [shape: f32[4,1], index: 3, kind: input, shape index: {}, may-alias: {3,4,7,8}]
  %s4 = inlined_call_operand.vmem [shape: f32[4,1], index: 4, kind: input, shape index: {}, may-alias: {3,4,7,8}]
  %s5 = inlined_call_operand.vmem [shape: bf16[4,12], index: 5, kind: input, shape index: {}]
  %s6 = inlined_call_operand.vmem [shape: f32[4,1], index: 6, kind: input, shape index: {}]
  %s7 = inlined_call_operand.vmem [shape: f32[4,1], index: 7, kind: input, shape index: {}, may-alias: {3,4,7,8}]
  %s8 = inlined_call_operand.vmem [shape: f32[4,1], index: 8, kind: input, shape index: {}, may-alias: {3,4,7,8}]
  %s9 = inlined_call_operand.vmem [shape: f32[2,4,16], index: 9, kind: output, shape index: {}]
  %s10 = sld [smem:[#allocation0]]
  $region69: #{_lambda_.3} parent=0
    _
  %s12 = ssub.s32 1, %s10
  %s13 = scalar_select 0, %s12, %s10
  loop: start=0, step=1, limit=4
  $region2: #{_lambda_.3} parent=0 // loop_pre_header
    _
  $region3: #{_lambda_.3} parent=0 // loop_header
    %s15 = sphi 0, %s19
    %p16 = scmp.ge.s32.totalorder %s15, 4
    %s22 = sphi 0, %s34
    %s23 = sphi 0, %s30
    %s24 = sphi 0, %s22
    %s25 = sphi 0, %s23
    %s26 = sphi 0, %s24
    %s27 = sphi 0, %s25
    %s39 = sphi 0, %s41
    %s42 = sphi 0, %s39
    %s43 = sphi 0, %s42
    %s59 = sphi 0, %s43
    %s63 = sphi 0, %s63
    %s65 = sphi 0, %s63
    %s66 = sphi 0, %s65
    %s80 = sphi 0, %s66
    %s84 = sphi 0, %s84
    %s86 = sphi 0, %s84
    %s87 = sphi 0, %s86
    %s101 = sphi 0, %s87
    %s105 = sphi 0, %s105
    %s107 = sphi 0, %s105
    %s108 = sphi 0, %s107
    %s122 = sphi 0, %s108
    %s126 = sphi 0, %s126
    %s128 = sphi 0, %s126
    %s129 = sphi 0, %s128
    %s143 = sphi 0, %s129
    %s147 = sphi 0, %s147
    %s149 = sphi 0, %s147
    %s150 = sphi 0, %s149
    %s164 = sphi 0, %s150
    %s168 = sphi 0, %s168
    %s170 = sphi 0, %s168
    %s171 = sphi 0, %s170
    %s185 = sphi 0, %s171
    %s189 = sphi 0, %s189
    %s191 = sphi 0, %s189
    %s192 = sphi 0, %s191
    %s206 = sphi 0, %s192
    %s210 = sphi 0, %s210
    %s212 = sphi 0, %s210
    %s213 = sphi 0, %s212
    %s227 = sphi 0, %s213
    %s235 = sphi 0, %s237
    %s238 = sphi 0, %s235
    %s239 = sphi 0, %s238
    %s255 = sphi 0, %s239
  $region4: #{_lambda_.3} parent=0 // loop_header_branch
    %18 = sbr.rel (%p16) target = $region8
  $region5: #{_lambda_.3} parent=0 // loop_body
    %s20 = ssub.s32 %s15, 1
    %s21 = ssub.s32 %s15, 2
    %s28 = sadd.s32 1, %s23
    %p29 = scmp.ge.s32.totalorder %s28, 1
    %s30 = scalar_select %p29, 0, %s28
    %s31 = sadd.s32 1, %s22
    %s32 = scalar_select %p29, %s31, %s22
    %p33 = scmp.ge.s32.totalorder %s32, 2
    %s34 = scalar_select %p33, 0, %s32
    %s35 = ssub.s32 %s22, %s34
    %s36 = ssub.s32 %s23, %s30
    %s37 = sor.u32 %s35, %s36
    %p38 = scmp.eq.s32.totalorder %s37, 0
    %s40 = sadd.s32 %s39, 1
    %s41 = scalar_select %p38, %s39, %s40
    %p44 = pneg %p38
    %p45 = scmp.eq.s32.totalorder %s15, 1
    %p46 = por %p44, %p45
    %p47 = scmp.ne.s32.totalorder %s39, %s42
    %p48 = scmp.eq.s32.totalorder %s15, 0
    %p49 = por %p47, %p48
    %p50 = scmp.ne.s32.totalorder %s39, %s42
    %p51 = scmp.eq.s32.totalorder %s20, 1
    %p52 = por %p50, %p51
    %p53 = scmp.ne.s32.totalorder %s42, %s43
    %p54 = scmp.eq.s32.totalorder %s20, 0
    %p55 = por %p53, %p54
    %p56 = scmp.ne.s32.totalorder %s42, %s43
    %p57 = scmp.eq.s32.totalorder %s21, 1
    %p58 = por %p56, %p57
    %p60 = scmp.ne.s32.totalorder %s43, %s59
    %p61 = scmp.eq.s32.totalorder %s21, 0
    %p62 = por %p60, %p61
    %s64 = sadd.s32 %s63, 1
    %p67 = scmp.eq.s32.totalorder %s15, 1
    %p68 = scmp.ne.s32.totalorder %s63, %s65
    %p69 = scmp.eq.s32.totalorder %s15, 0
    %p70 = por %p68, %p69
    %p71 = scmp.ne.s32.totalorder %s63, %s65
    %p72 = scmp.eq.s32.totalorder %s20, 1
    %p73 = por %p71, %p72
    %p74 = scmp.ne.s32.totalorder %s65, %s66
    %p75 = scmp.eq.s32.totalorder %s20, 0
    %p76 = por %p74, %p75
    %p77 = scmp.ne.s32.totalorder %s65, %s66
    %p78 = scmp.eq.s32.totalorder %s21, 1
    %p79 = por %p77, %p78
    %p81 = scmp.ne.s32.totalorder %s66, %s80
    %p82 = scmp.eq.s32.totalorder %s21, 0
    %p83 = por %p81, %p82
    %s85 = sadd.s32 %s84, 1
    %p88 = scmp.eq.s32.totalorder %s15, 1
    %p89 = scmp.ne.s32.totalorder %s84, %s86
    %p90 = scmp.eq.s32.totalorder %s15, 0
    %p91 = por %p89, %p90
    %p92 = scmp.ne.s32.totalorder %s84, %s86
    %p93 = scmp.eq.s32.totalorder %s20, 1
    %p94 = por %p92, %p93
    %p95 = scmp.ne.s32.totalorder %s86, %s87
    %p96 = scmp.eq.s32.totalorder %s20, 0
    %p97 = por %p95, %p96
    %p98 = scmp.ne.s32.totalorder %s86, %s87
    %p99 = scmp.eq.s32.totalorder %s21, 1
    %p100 = por %p98, %p99
    %p102 = scmp.ne.s32.totalorder %s87, %s101
    %p103 = scmp.eq.s32.totalorder %s21, 0
    %p104 = por %p102, %p103
    %s106 = sadd.s32 %s105, 1
    %p109 = scmp.eq.s32.totalorder %s15, 1
    %p110 = scmp.ne.s32.totalorder %s105, %s107
    %p111 = scmp.eq.s32.totalorder %s15, 0
    %p112 = por %p110, %p111
    %p113 = scmp.ne.s32.totalorder %s105, %s107
    %p114 = scmp.eq.s32.totalorder %s20, 1
    %p115 = por %p113, %p114
    %p116 = scmp.ne.s32.totalorder %s107, %s108
    %p117 = scmp.eq.s32.totalorder %s20, 0
    %p118 = por %p116, %p117
    %p119 = scmp.ne.s32.totalorder %s107, %s108
    %p120 = scmp.eq.s32.totalorder %s21, 1
    %p121 = por %p119, %p120
    %p123 = scmp.ne.s32.totalorder %s108, %s122
    %p124 = scmp.eq.s32.totalorder %s21, 0
    %p125 = por %p123, %p124
    %s127 = sadd.s32 %s126, 1
    %p130 = scmp.eq.s32.totalorder %s15, 1
    %p131 = scmp.ne.s32.totalorder %s126, %s128
    %p132 = scmp.eq.s32.totalorder %s15, 0
    %p133 = por %p131, %p132
    %p134 = scmp.ne.s32.totalorder %s126, %s128
    %p135 = scmp.eq.s32.totalorder %s20, 1
    %p136 = por %p134, %p135
    %p137 = scmp.ne.s32.totalorder %s128, %s129
    %p138 = scmp.eq.s32.totalorder %s20, 0
    %p139 = por %p137, %p138
    %p140 = scmp.ne.s32.totalorder %s128, %s129
    %p141 = scmp.eq.s32.totalorder %s21, 1
    %p142 = por %p140, %p141
    %p144 = scmp.ne.s32.totalorder %s129, %s143
    %p145 = scmp.eq.s32.totalorder %s21, 0
    %p146 = por %p144, %p145
    %s148 = sadd.s32 %s147, 1
    %p151 = scmp.eq.s32.totalorder %s15, 1
    %p152 = scmp.ne.s32.totalorder %s147, %s149
    %p153 = scmp.eq.s32.totalorder %s15, 0
    %p154 = por %p152, %p153
    %p155 = scmp.ne.s32.totalorder %s147, %s149
    %p156 = scmp.eq.s32.totalorder %s20, 1
    %p157 = por %p155, %p156
    %p158 = scmp.ne.s32.totalorder %s149, %s150
    %p159 = scmp.eq.s32.totalorder %s20, 0
    %p160 = por %p158, %p159
    %p161 = scmp.ne.s32.totalorder %s149, %s150
    %p162 = scmp.eq.s32.totalorder %s21, 1
    %p163 = por %p161, %p162
    %p165 = scmp.ne.s32.totalorder %s150, %s164
    %p166 = scmp.eq.s32.totalorder %s21, 0
    %p167 = por %p165, %p166
    %s169 = sadd.s32 %s168, 1
    %p172 = scmp.eq.s32.totalorder %s15, 1
    %p173 = scmp.ne.s32.totalorder %s168, %s170
    %p174 = scmp.eq.s32.totalorder %s15, 0
    %p175 = por %p173, %p174
    %p176 = scmp.ne.s32.totalorder %s168, %s170
    %p177 = scmp.eq.s32.totalorder %s20, 1
    %p178 = por %p176, %p177
    %p179 = scmp.ne.s32.totalorder %s170, %s171
    %p180 = scmp.eq.s32.totalorder %s20, 0
    %p181 = por %p179, %p180
    %p182 = scmp.ne.s32.totalorder %s170, %s171
    %p183 = scmp.eq.s32.totalorder %s21, 1
    %p184 = por %p182, %p183
    %p186 = scmp.ne.s32.totalorder %s171, %s185
    %p187 = scmp.eq.s32.totalorder %s21, 0
    %p188 = por %p186, %p187
    %s190 = sadd.s32 %s189, 1
    %p193 = scmp.eq.s32.totalorder %s15, 1
    %p194 = scmp.ne.s32.totalorder %s189, %s191
    %p195 = scmp.eq.s32.totalorder %s15, 0
    %p196 = por %p194, %p195
    %p197 = scmp.ne.s32.totalorder %s189, %s191
    %p198 = scmp.eq.s32.totalorder %s20, 1
    %p199 = por %p197, %p198
    %p200 = scmp.ne.s32.totalorder %s191, %s192
    %p201 = scmp.eq.s32.totalorder %s20, 0
    %p202 = por %p200, %p201
    %p203 = scmp.ne.s32.totalorder %s191, %s192
    %p204 = scmp.eq.s32.totalorder %s21, 1
    %p205 = por %p203, %p204
    %p207 = scmp.ne.s32.totalorder %s192, %s206
    %p208 = scmp.eq.s32.totalorder %s21, 0
    %p209 = por %p207, %p208
    %s211 = sadd.s32 %s210, 1
    %p214 = scmp.eq.s32.totalorder %s15, 1
    %p215 = scmp.ne.s32.totalorder %s210, %s212
    %p216 = scmp.eq.s32.totalorder %s15, 0
    %p217 = por %p215, %p216
    %p218 = scmp.ne.s32.totalorder %s210, %s212
    %p219 = scmp.eq.s32.totalorder %s20, 1
    %p220 = por %p218, %p219
    %p221 = scmp.ne.s32.totalorder %s212, %s213
    %p222 = scmp.eq.s32.totalorder %s20, 0
    %p223 = por %p221, %p222
    %p224 = scmp.ne.s32.totalorder %s212, %s213
    %p225 = scmp.eq.s32.totalorder %s21, 1
    %p226 = por %p224, %p225
    %p228 = scmp.ne.s32.totalorder %s213, %s227
    %p229 = scmp.eq.s32.totalorder %s21, 0
    %p230 = por %p228, %p229
    %s231 = ssub.s32 %s22, %s34
    %s232 = ssub.s32 %s23, %s30
    %s233 = sor.u32 %s231, %s232
    %p234 = scmp.eq.s32.totalorder %s233, 0
    %s236 = sadd.s32 %s235, 1
    %s237 = scalar_select %p234, %s235, %s236
    %p240 = pneg %p234
    %p241 = scmp.eq.s32.totalorder %s15, 1
    %p242 = por %p240, %p241
    %p243 = scmp.ne.s32.totalorder %s235, %s238
    %p244 = scmp.eq.s32.totalorder %s15, 0
    %p245 = por %p243, %p244
    %p246 = scmp.ne.s32.totalorder %s235, %s238
    %p247 = scmp.eq.s32.totalorder %s20, 1
    %p248 = por %p246, %p247
    %p249 = scmp.ne.s32.totalorder %s238, %s239
    %p250 = scmp.eq.s32.totalorder %s20, 0
    %p251 = por %p249, %p250
    %p252 = scmp.ne.s32.totalorder %s238, %s239
    %p253 = scmp.eq.s32.totalorder %s21, 1
    %p254 = por %p252, %p253
    %p256 = scmp.ne.s32.totalorder %s239, %s255
    %p257 = scmp.eq.s32.totalorder %s21, 0
    %p258 = por %p256, %p257
    %p259 = scmp.le.s32.totalorder 1, %s15
    %p260 = scmp.lt.s32.totalorder %s15, 3
    %p261 = pnand %p259, %p260
    %p262 = pneg %p261
    // Predicated region
    $region9: #{_lambda_.3} parent=5 // pred_check
      _
    $region10: #{_lambda_.3} parent=5 // pred_check_branch
      %264 = sbr.rel (%p261) target = $region12
    $region11: #{_lambda_.3} parent=5 // pred_region
      %s265 = ssub.s32 %s15, 1
      // Predicated region
      $region13: #{_lambda_.3} parent=11 // pred_check
        %p266 = pneg %p76
      $region14: #{_lambda_.3} parent=11 // pred_check_branch
        %268 = sbr.rel (%p266) target = $region16
      $region15: #{_lambda_.3} parent=11 // pred_region
        _
      $region16: #{_lambda_.3} parent=11 // pred_fallthru
        _
      // Predicated region
      $region17: #{_lambda_.3} parent=11 // pred_check
        %p269 = pneg %p97
      $region18: #{_lambda_.3} parent=11 // pred_check_branch
        %271 = sbr.rel (%p269) target = $region20
      $region19: #{_lambda_.3} parent=11 // pred_region
        _
      $region20: #{_lambda_.3} parent=11 // pred_fallthru
        _
      // Predicated region
      $region21: #{_lambda_.3} parent=11 // pred_check
        %p272 = pneg %p118
      $region22: #{_lambda_.3} parent=11 // pred_check_branch
        %274 = sbr.rel (%p272) target = $region24
      $region23: #{_lambda_.3} parent=11 // pred_region
        _
      $region24: #{_lambda_.3} parent=11 // pred_fallthru
        _
      // Predicated region
      $region25: #{_lambda_.3} parent=11 // pred_check
        %p275 = pneg %p139
      $region26: #{_lambda_.3} parent=11 // pred_check_branch
        %277 = sbr.rel (%p275) target = $region28
      $region27: #{_lambda_.3} parent=11 // pred_region
        _
      $region28: #{_lambda_.3} parent=11 // pred_fallthru
        _
      // Predicated region
      $region29: #{_lambda_.3} parent=11 // pred_check
        %p278 = pneg %p160
      $region30: #{_lambda_.3} parent=11 // pred_check_branch
        %280 = sbr.rel (%p278) target = $region32
      $region31: #{_lambda_.3} parent=11 // pred_region
        _
      $region32: #{_lambda_.3} parent=11 // pred_fallthru
        _
      // Predicated region
      $region33: #{_lambda_.3} parent=11 // pred_check
        %p281 = pneg %p181
      $region34: #{_lambda_.3} parent=11 // pred_check_branch
        %283 = sbr.rel (%p281) target = $region36
      $region35: #{_lambda_.3} parent=11 // pred_region
        _
      $region36: #{_lambda_.3} parent=11 // pred_fallthru
        _
      // Predicated region
      $region37: #{_lambda_.3} parent=11 // pred_check
        %p284 = pneg %p202
      $region38: #{_lambda_.3} parent=11 // pred_check_branch
        %286 = sbr.rel (%p284) target = $region40
      $region39: #{_lambda_.3} parent=11 // pred_region
        _
      $region40: #{_lambda_.3} parent=11 // pred_fallthru
        _
      // Predicated region
      $region41: #{_lambda_.3} parent=11 // pred_check
        %p287 = pneg %p223
      $region42: #{_lambda_.3} parent=11 // pred_check_branch
        %289 = sbr.rel (%p287) target = $region44
      $region43: #{_lambda_.3} parent=11 // pred_region
        _
      $region44: #{_lambda_.3} parent=11 // pred_fallthru
        _
    $region12: #{_lambda_.3} parent=5 // pred_fallthru
      _
    %p290 = scmp.lt.s32.totalorder %s15, 2
    // Predicated region
    $region45: #{_lambda_.3} parent=5 // pred_check
      %p291 = pneg %p290
    $region46: #{_lambda_.3} parent=5 // pred_check_branch
      %293 = sbr.rel (%p291) target = $region48
    $region47: #{_lambda_.3} parent=5 // pred_region
      // Predicated region
      $region49: #{_lambda_.3} parent=47 // pred_check
        %p294 = pneg %p49
      $region50: #{_lambda_.3} parent=47 // pred_check_branch
        %296 = sbr.rel (%p294) target = $region52
      $region51: #{_lambda_.3} parent=47 // pred_region
        %p297 = scmp.lt.s32.totalorder %s22, 1
        %s298 = scalar_select %p297, %s22, 1
        %p299 = scmp.lt.s32.totalorder %s23, 0
        %s300 = scalar_select %p299, %s23, 0
        %s301 = sadd.s32 %s300, %s298
        %s302 = smul.addr %s301, 4
        %s303 = scalar_lea.vmem %s0, %s302
      $region52: #{_lambda_.3} parent=47 // pred_fallthru
        _
    $region48: #{_lambda_.3} parent=5 // pred_fallthru
      _
    %p304 = scmp.le.s32.totalorder 1, %s15
    %p305 = scmp.lt.s32.totalorder %s15, 3
    %p306 = pnand %p304, %p305
    %p307 = pneg %p306
    // Predicated region
    $region53: #{_lambda_.3} parent=5 // pred_check
      _
    $region54: #{_lambda_.3} parent=5 // pred_check_branch
      %309 = sbr.rel (%p306) target = $region56
    $region55: #{_lambda_.3} parent=5 // pred_region
      %s310 = ssub.s32 %s15, 1
      %p311 = scmp.lt.s32.totalorder %s24, 1
      %s312 = scalar_select %p311, %s24, 1
      %p313 = scmp.lt.s32.totalorder %s25, 0
      %s314 = scalar_select %p313, %s25, 0
      %s315 = sadd.s32 %s314, %s312
      %s316 = smul.addr %s315, 4
      %s317 = scalar_lea.vmem %s0, %s316
      %p318 = pneg %p55
      %p319 = pneg %p52
      %p320 = pneg %p76
      %p321 = pneg %p73
      %p322 = pneg %p97
      %p323 = pneg %p94
      %p324 = pneg %p118
      %p325 = pneg %p115
      %p326 = pneg %p139
      %p327 = pneg %p136
      %p328 = pneg %p160
      %p329 = pneg %p157
      %p330 = pneg %p181
      %p331 = pneg %p178
      %p332 = pneg %p202
      %p333 = pneg %p199
      %p334 = pneg %p223
      %p335 = pneg %p220
      %p336 = pneg %p251
      %p337 = pneg %p248
      %p338 = scmp.lt.s32.totalorder %s24, 1
      %s339 = scalar_select %p338, %s24, 1
      %p340 = scmp.lt.s32.totalorder %s25, 0
      %s341 = scalar_select %p340, %s25, 0
      %s342 = sadd.s32 %s341, %s339
      %s343 = smul.addr %s342, 4
      %s344 = scalar_lea.vmem %s9, %s343
      %p345 = scmp.lt.s32.totalorder %s24, 1
      %s346 = scalar_select %p345, %s24, 1
      %p347 = scmp.lt.s32.totalorder %s25, 0
      %s348 = scalar_select %p347, %s25, 0
      %s349 = sadd.s32 %s348, %s346
      %s350 = smul.addr %s349, 4
      %s351 = scalar_lea.vmem %s0, %s350
      %p352 = scmp.lt.s32.totalorder %s24, 1
      %s353 = scalar_select %p352, %s24, 1
      %p354 = scmp.lt.s32.totalorder %s25, 0
      %s355 = scalar_select %p354, %s25, 0
      %s356 = sadd.s32 %s355, %s353
      %s357 = smul.addr %s356, 4
      %s358 = scalar_lea.vmem %s9, %s357
      %s360 = smul.u32 %s25, 16
      %v361 = vld [vmem:[%s351] sm:$0xf]
      %v362 = vld [vmem:[%s3] sm:$0xf]
      %v363 = vld [vmem:[%s4] sm:$0xf]
      %s364 = ssub.s32 %s360, 12
      %v365 = vmul.f32 %v361, 0.018778928
      %v366 = vmul.f32 %v361, 0.004057933
      %v367 = vmul.f32 %v361, -0.11531475
      %369 = vrot.lane.b32.xlu0 %v367, 1
      %v370 = vpop.permute.xlu0 %369
      %v372 = vadd.f32 %v365, %v370
      %v373 = vmul.f32 %v361, -0.05108693
      %375 = vrot.lane.b32.xlu0 %v373, 1
      %v376 = vpop.permute.xlu0 %375
      %v378 = vadd.f32 %v366, %v376
      %v379 = vmul.f32 %v361, 0.8864196
      %381 = vrot.lane.b32.xlu0 %v379, 2
      %v382 = vpop.permute.xlu0 %381
      %v384 = vadd.f32 %v372, %v382
      %v385 = vmul.f32 %v361, 0.25714523
      %387 = vrot.lane.b32.xlu0 %v385, 2
      %v388 = vpop.permute.xlu0 %387
      %v390 = vadd.f32 %v378, %v388
      %391 = vrot.lane.b32.xlu0 %v385, 3
      %v392 = vpop.permute.xlu0 %391
      %v394 = vadd.f32 %v384, %v392
      %395 = vrot.lane.b32.xlu0 %v379, 3
      %v396 = vpop.permute.xlu0 %395
      %v398 = vadd.f32 %v390, %v396
      %399 = vrot.lane.b32.xlu0 %v373, 4
      %v400 = vpop.permute.xlu0 %399
      %v402 = vadd.f32 %v394, %v400
      %403 = vrot.lane.b32.xlu0 %v367, 4
      %v404 = vpop.permute.xlu0 %403
      %v406 = vadd.f32 %v398, %v404
      %408 = vrot.lane.b32.xlu0 %v366, 5
      %v409 = vpop.permute.xlu0 %408
      %v411 = vadd.f32 %v402, %v409
      %413 = vrot.lane.b32.xlu0 %v365, 5
      %v414 = vpop.permute.xlu0 %413
      %v416 = vadd.f32 %v406, %v414
      %418 = vset.pattern.permute.xlu0 0
      %419 = vperm.xlu0 %418, %v362
      %v420 = vpop.permute.xlu0 %419
      %v422 = vmul.f32 %v411, %v420
      %v423 = vand.u32 2147483647, %v422
      %vm424 = vcmp.le.f32.partialorder %v423, 0.7853982
      %vm425 = vcmp.lt.s32.totalorder %v422, 0
      %v426 = vand.u32 %v422, 2139095040
      %v427 = vshrl.u32 %v426, 23
      %v428 = vsub.s32 %v427, 127
      %v429 = vand.u32 2147483647, %v422
      %v430 = vand.u32 %v429, 8388607
      %v431 = vor.u32 %v430, 8388608
      %v432 = vsub.s32 0, %v431
      %v433 = vadd.s32 %v428, 1
      %vm434 = vcmp.gt.s32.totalorder %v433, 0
      %v435 = vsel %vm434, %v433, 0
      %v436 = vshrl.u32 %v435, 5
      %v437 = vand.u32 %v435, 31
      %v438 = vsub.s32 32, %v437
      %v439 = vshrl.u32 683565275, %v438
      %v440 = vshll.u32 683565275, %v437
      %v441 = vshrl.u32 2475754826, %v438
      %v442 = vor.u32 %v440, %v441
      %v443 = vshll.u32 2475754826, %v437
      %v444 = vshrl.u32 2131351028, %v438
      %v445 = vor.u32 %v443, %v444
      %v446 = vshll.u32 2131351028, %v437
      %v447 = vshrl.u32 2102212464, %v438
      %v448 = vor.u32 %v446, %v447
      %v449 = vshll.u32 2102212464, %v437
      %v450 = vshrl.u32 920167782, %v438
      %v451 = vor.u32 %v449, %v450
      %v452 = vshll.u32 920167782, %v437
      %v453 = vshrl.u32 1326507024, %v438
      %v454 = vor.u32 %v452, %v453
      %vm455 = vcmp.lt.s32.totalorder %v436, 1
      %vm456 = vcmp.lt.s32.totalorder %v436, 2
      %vm457 = vcmp.lt.s32.totalorder %v436, 3
      %vm458 = vcmp.lt.s32.totalorder %v436, 4
      %v459 = vsel %vm455, %v439, %v442
      %v460 = vsel %vm458, %v448, 2102212464
      %v461 = vsel %vm457, %v445, %v460
      %v462 = vsel %vm456, %v459, %v461
      %v463 = vsel %vm455, %v442, %v445
      %v464 = vsel %vm458, %v451, 920167782
      %v465 = vsel %vm457, %v448, %v464
      %v466 = vsel %vm456, %v463, %v465
      %v467 = vsel %vm455, %v445, %v448
      %v468 = vsel %vm458, %v454, 1326507024
      %v469 = vsel %vm457, %v451, %v468
      %v470 = vsel %vm456, %v467, %v469
      %v471 = vshll.u32 %v431, 8
      %v472 = vmul.u32.u64.compose %v471, %v470
      %v473 = vextract.low.u32 %v472
      %v474 = vextract.high.u32 %v472
      %v475 = vmul.u32.u64.compose %v471, %v466
      %v476 = vextract.low.u32 %v475
      %v477 = vextract.high.u32 %v475
      %v478 = vmul.u32 %v471, %v462
      %v479 = vadd.s32 %v474, %v476
      %vm480 = vc.u32 %v474, %v476
      %v481 = vadd.s32 %v477, 1
      %v482 = vsel %vm480, %v481, %v477
      %v483 = vadd.s32 %v478, %v482
      %v484 = vadd.s32 %v483, 536870912
      %v485 = vshrl.u32 %v484, 30
      %v486 = vshll.u32 %v485, 30
      %v487 = vsub.s32 %v483, %v486
      %vm488 = vcmp.lt.s32.totalorder %v487, 0
      %v489 = vsub.s32 0, %v487
      %v490 = vsel %vm488, %v489, %v487
      %v491 = vclz %v490
      %v492 = vsub.s32 %v491, 2
      %vm493 = vcmp.gt.s32.totalorder 0, %v492
      %v494 = vsel %vm493, 0, %v492
      %v495 = vsub.s32 32, %v494
      %v496 = vshll.u32 %v487, %v494
      %v497 = vshrl.u32 %v479, %v495
      %v498 = vor.u32 %v496, %v497
      %v499 = vsub.s32 4294967266, %v494
      %v500 = vadd.s32 %v499, 127
      %v501 = vshll.u32 %v500, 23
      %v502 = vor.u32 4788187, %v501
      %v503 = vand.u32 2147483647, %v502
      %v505 = vcvt.s32.f32 %v498
      %v506 = vmul.f32 %v505, %v503
      %v507 = vxor.u32 %v506, 2147483648
      %v508 = vsel %vm425, %v507, %v506
      %v509 = vsub.s32 4, %v485
      %v510 = vsel %vm425, %v509, %v485
      %v511 = vsel %vm424, %v422, %v508
      %v512 = vsel %vm424, 0, %v510
      %v513 = vcosq.f32.pop %v511
      %v514 = vsinq.f32.pop %v511
      %vm515 = vweird.f32 %v422
      %v516 = vadd.s32 %v512, 3
      %v517 = vand.u32 %v516, 3
      %vm518 = vcmp.lt.s32.totalorder %v517, 2
      %vm519 = vcmp.eq.s32.totalorder %v517, 0
      %v520 = vxor.u32 %v514, 2147483648
      %v521 = vsel %vm519, %v513, %v520
      %vm522 = vcmp.eq.s32.totalorder %v517, 2
      %v523 = vxor.u32 %v513, 2147483648
      %v524 = vsel %vm522, %v523, %v514
      %v525 = vsel %vm518, %v521, %v524
      %v526 = vsel %vm515, nan, %v525
      %v527 = vmul.f32 %v526, %v526
      %529 = vset.pattern.permute.xlu0 0
      %530 = vperm.xlu0 %529, %v363
      %v531 = vpop.permute.xlu0 %530
      %v533 = vmul.f32 %v531, %v527
      %v534 = vadd.f32 %v411, %v533
      %v535 = vmul.f32 %v416, %v420
      %v536 = vand.u32 2147483647, %v535
      %vm537 = vcmp.le.f32.partialorder %v536, 0.7853982
      %vm538 = vcmp.lt.s32.totalorder %v535, 0
      %v539 = vand.u32 %v535, 2139095040
      %v540 = vshrl.u32 %v539, 23
      %v541 = vsub.s32 %v540, 127
      %v542 = vand.u32 2147483647, %v535
      %v543 = vand.u32 %v542, 8388607
      %v544 = vor.u32 %v543, 8388608
      %v545 = vsub.s32 0, %v544
      %v546 = vadd.s32 %v541, 1
      %vm547 = vcmp.gt.s32.totalorder %v546, 0
      %v548 = vsel %vm547, %v546, 0
      %v549 = vshrl.u32 %v548, 5
      %v550 = vand.u32 %v548, 31
      %v551 = vsub.s32 32, %v550
      %v552 = vshrl.u32 683565275, %v551
      %v553 = vshll.u32 683565275, %v550
      %v554 = vshrl.u32 2475754826, %v551
      %v555 = vor.u32 %v553, %v554
      %v556 = vshll.u32 2475754826, %v550
      %v557 = vshrl.u32 2131351028, %v551
      %v558 = vor.u32 %v556, %v557
      %v559 = vshll.u32 2131351028, %v550
      %v560 = vshrl.u32 2102212464, %v551
      %v561 = vor.u32 %v559, %v560
      %v562 = vshll.u32 2102212464, %v550
      %v563 = vshrl.u32 920167782, %v551
      %v564 = vor.u32 %v562, %v563
      %v565 = vshll.u32 920167782, %v550
      %v566 = vshrl.u32 1326507024, %v551
      %v567 = vor.u32 %v565, %v566
      %vm568 = vcmp.lt.s32.totalorder %v549, 1
      %vm569 = vcmp.lt.s32.totalorder %v549, 2
      %vm570 = vcmp.lt.s32.totalorder %v549, 3
      %vm571 = vcmp.lt.s32.totalorder %v549, 4
      %v572 = vsel %vm568, %v552, %v555
      %v573 = vsel %vm571, %v561, 2102212464
      %v574 = vsel %vm570, %v558, %v573
      %v575 = vsel %vm569, %v572, %v574
      %v576 = vsel %vm568, %v555, %v558
      %v577 = vsel %vm571, %v564, 920167782
      %v578 = vsel %vm570, %v561, %v577
      %v579 = vsel %vm569, %v576, %v578
      %v580 = vsel %vm568, %v558, %v561
      %v581 = vsel %vm571, %v567, 1326507024
      %v582 = vsel %vm570, %v564, %v581
      %v583 = vsel %vm569, %v580, %v582
      %v584 = vshll.u32 %v544, 8
      %v585 = vmul.u32.u64.compose %v584, %v583
      %v586 = vextract.low.u32 %v585
      %v587 = vextract.high.u32 %v585
      %v588 = vmul.u32.u64.compose %v584, %v579
      %v589 = vextract.low.u32 %v588
      %v590 = vextract.high.u32 %v588
      %v591 = vmul.u32 %v584, %v575
      %v592 = vadd.s32 %v587, %v589
      %vm593 = vc.u32 %v587, %v589
      %v594 = vadd.s32 %v590, 1
      %v595 = vsel %vm593, %v594, %v590
      %v596 = vadd.s32 %v591, %v595
      %v597 = vadd.s32 %v596, 536870912
      %v598 = vshrl.u32 %v597, 30
      %v599 = vshll.u32 %v598, 30
      %v600 = vsub.s32 %v596, %v599
      %vm601 = vcmp.lt.s32.totalorder %v600, 0
      %v602 = vsub.s32 0, %v600
      %v603 = vsel %vm601, %v602, %v600
      %v604 = vclz %v603
      %v605 = vsub.s32 %v604, 2
      %vm606 = vcmp.gt.s32.totalorder 0, %v605
      %v607 = vsel %vm606, 0, %v605
      %v608 = vsub.s32 32, %v607
      %v609 = vshll.u32 %v600, %v607
      %v610 = vshrl.u32 %v592, %v608
      %v611 = vor.u32 %v609, %v610
      %v612 = vsub.s32 4294967266, %v607
      %v613 = vadd.s32 %v612, 127
      %v614 = vshll.u32 %v613, 23
      %v615 = vor.u32 4788187, %v614
      %v616 = vand.u32 2147483647, %v615
      %v618 = vcvt.s32.f32 %v611
      %v619 = vmul.f32 %v618, %v616
      %v620 = vxor.u32 %v619, 2147483648
      %v621 = vsel %vm538, %v620, %v619
      %v622 = vsub.s32 4, %v598
      %v623 = vsel %vm538, %v622, %v598
      %v624 = vsel %vm537, %v535, %v621
      %v625 = vsel %vm537, 0, %v623
      %v626 = vcosq.f32.pop %v624
      %v627 = vsinq.f32.pop %v624
      %vm628 = vweird.f32 %v535
      %v629 = vadd.s32 %v625, 3
      %v630 = vand.u32 %v629, 3
      %vm631 = vcmp.lt.s32.totalorder %v630, 2
      %vm632 = vcmp.eq.s32.totalorder %v630, 0
      %v633 = vxor.u32 %v627, 2147483648
      %v634 = vsel %vm632, %v626, %v633
      %vm635 = vcmp.eq.s32.totalorder %v630, 2
      %v636 = vxor.u32 %v626, 2147483648
      %v637 = vsel %vm635, %v636, %v627
      %v638 = vsel %vm631, %v634, %v637
      %v639 = vsel %vm628, nan, %v638
      %v640 = vmul.f32 %v639, %v639
      %v641 = vmul.f32 %v531, %v640
      %v642 = vadd.f32 %v416, %v641
      %s643 = ssub.s32 %s360, 18
      %v644 = vlaneseq
      %v645 = vand.u32 %v644, 127
      %v646 = vstv %s643
      %v647 = vadd.s32 %v645, %v646
      %vm648 = vcmp.ge.s32.totalorder %v647, 0
      %650 = vrot.lane.b32.xlu0 %v642, 123
      %v651 = vpop.permute.xlu0 %650
      %v653 = vsel %vm648, %v651, 0.0
      %v654 = vmul.f32 %v534, 0.009389464
      %v655 = vmul.f32 %v653, 0.0020289666
      %657 = vrot.lane.b32.xlu0 %v655, 5
      %v658 = vpop.permute.xlu0 %657
      %v660 = vadd.f32 %v654, %v658
      %v661 = vmul.f32 %v534, -0.057657376
      %663 = vrot.lane.b32.xlu0 %v661, 127
      %v664 = vpop.permute.xlu0 %663
      %v666 = vadd.f32 %v660, %v664
      %v667 = vmul.f32 %v653, -0.025543464
      %669 = vrot.lane.b32.xlu0 %v667, 4
      %v670 = vpop.permute.xlu0 %669
      %v672 = vadd.f32 %v666, %v670
      %v673 = vmul.f32 %v534, 0.4432098
      %675 = vrot.lane.b32.xlu0 %v673, 126
      %v676 = vpop.permute.xlu0 %675
      %v678 = vadd.f32 %v672, %v676
      %v679 = vmul.f32 %v653, 0.12857261
      %681 = vrot.lane.b32.xlu0 %v679, 3
      %v682 = vpop.permute.xlu0 %681
      %v684 = vadd.f32 %v678, %v682
      %v685 = vmul.f32 %v534, 0.12857261
      %687 = vrot.lane.b32.xlu0 %v685, 125
      %v688 = vpop.permute.xlu0 %687
      %v690 = vadd.f32 %v684, %v688
      %v691 = vmul.f32 %v653, 0.4432098
      %693 = vrot.lane.b32.xlu0 %v691, 2
      %v694 = vpop.permute.xlu0 %693
      %v696 = vadd.f32 %v690, %v694
      %v697 = vmul.f32 %v534, -0.025543464
      %699 = vrot.lane.b32.xlu0 %v697, 124
      %v700 = vpop.permute.xlu0 %699
      %v702 = vadd.f32 %v696, %v700
      %v703 = vmul.f32 %v653, -0.057657376
      %705 = vrot.lane.b32.xlu0 %v703, 1
      %v706 = vpop.permute.xlu0 %705
      %v708 = vadd.f32 %v702, %v706
      %v709 = vmul.f32 %v534, 0.0020289666
      %711 = vrot.lane.b32.xlu0 %v709, 123
      %v712 = vpop.permute.xlu0 %711
      %v714 = vadd.f32 %v708, %v712
      %v715 = vmul.f32 %v653, 0.009389464
      %v716 = vadd.f32 %v714, %v715
      %v717 = vstv %s364
      %v718 = vadd.s32 %v645, %v717
      %vm719 = vcmp.lt.s32.totalorder %v718, 16
      %721 = vrot.lane.b32.xlu0 %v716, 123
      %v722 = vpop.permute.xlu0 %721
      %v724 = vsel %vm719, %v722, 0.0
      %v725 = vld [vmem:[%s1] sm:$0x3]
      %v726 = vld [vmem:[%s2] sm:$0xf]
      %v727 = vpack.c.bf16 %v724, %v724
      %v730 = vunpack.c.l.s4 1983009808
      %v731 = vunpack.c.0.s8 %v730
      %v732 = vlaneseq
      %v733 = vshrl.u32 %v732, 7
      %v734 = vsub.s32 %v731, %v733
      %v735 = vrot.slane %v725, %v734
      %736 = vrot.lane.b32.xlu0 %v735, 124
      %v737 = vpop.permute.xlu0 %736
      %739 = vrot.lane.b32.xlu0 %v727, 127
      %v740 = vpop.permute.xlu0 %739
      %vm741 = vcmask 31744
      %v743 = vsel %vm741, %v737, 0
      %vm745 = vcmask 1041408
      %v747 = vsel %vm745, %v740, 0
      %749 = vmatprep.subr.bf16.mxu0 0
      %750 = vmatpush1.bf16.msra.mxu0 %v747
      %751 = vmatprep.subr.bf16.mxu0 0
      %752 = vmatpush1.bf16.msra.mxu0 0
      %753 = vmatprep.subr.bf16.mxu0 0
      %754 = vmatpush1.bf16.msra.mxu0 0
      %755 = vmatprep.subr.bf16.mxu0 0
      %756 = vmatpush1.bf16.msra.mxu0 0
      %757 = vmatprep.subr.bf16.mxu0 0
      %758 = vmatpush1.bf16.msra.mxu0 0
      %759 = vmatprep.subr.bf16.mxu0 0
      %760 = vmatpush1.bf16.msra.mxu0 0
      %761 = vmatprep.subr.bf16.mxu0 0
      %762 = vmatpush1.bf16.msra.mxu0 0
      %763 = vmatprep.subr.bf16.mxu0 0
      %764 = vmatpush1.bf16.msra.mxu0 0
      %765 = vmatprep.subr.bf16.mxu0 0
      %766 = vmatpush1.bf16.msra.mxu0 0
      %767 = vmatprep.subr.bf16.mxu0 0
      %768 = vmatpush1.bf16.msra.mxu0 0
      %769 = vmatprep.subr.bf16.mxu0 0
      %770 = vmatpush1.bf16.msra.mxu0 0
      %771 = vmatprep.subr.bf16.mxu0 0
      %772 = vmatpush1.bf16.msra.mxu0 0
      %773 = vmatprep.subr.bf16.mxu0 0
      %774 = vmatpush1.bf16.msra.mxu0 0
      %775 = vmatprep.subr.bf16.mxu0 0
      %776 = vmatpush1.bf16.msra.mxu0 0
      %777 = vmatprep.subr.bf16.mxu0 0
      %778 = vmatpush1.bf16.msra.mxu0 0
      %779 = vmatprep.subr.bf16.mxu0 0
      %780 = vmatpush1.bf16.msra.mxu0 0
      %781 = vmatprep.mubr.bf16.mxu0 0
      %782 = vmatmul.mubr.bf16.gmra.mrb[0].mxu0 %v743
      %v783 = vpop.f32.mrb[0].mxu0
      %v784 = vadd.f32 0.0, %v783
      %v785 = vpop.f32.mrb[0].mxu0
      %v786 = vpop.f32.mrb[0].mxu0
      %v787 = vpop.f32.mrb[0].mxu0
      %788 = vdwg.mxu0
      %v790 = vsel %vm741, %v725, 0
      %v793 = vsel %vm745, %v727, 0
      %795 = vmatprep.subr.bf16.mxu0 0
      %796 = vmatpush1.bf16.msra.mxu0 %v793
      %797 = vmatprep.subr.bf16.mxu0 0
      %798 = vmatpush1.bf16.msra.mxu0 0
      %799 = vmatprep.subr.bf16.mxu0 0
      %800 = vmatpush1.bf16.msra.mxu0 0
      %801 = vmatprep.subr.bf16.mxu0 0
      %802 = vmatpush1.bf16.msra.mxu0 0
      %803 = vmatprep.subr.bf16.mxu0 0
      %804 = vmatpush1.bf16.msra.mxu0 0
      %805 = vmatprep.subr.bf16.mxu0 0
      %806 = vmatpush1.bf16.msra.mxu0 0
      %807 = vmatprep.subr.bf16.mxu0 0
      %808 = vmatpush1.bf16.msra.mxu0 0
      %809 = vmatprep.subr.bf16.mxu0 0
      %810 = vmatpush1.bf16.msra.mxu0 0
      %811 = vmatprep.subr.bf16.mxu0 0
      %812 = vmatpush1.bf16.msra.mxu0 0
      %813 = vmatprep.subr.bf16.mxu0 0
      %814 = vmatpush1.bf16.msra.mxu0 0
      %815 = vmatprep.subr.bf16.mxu0 0
      %816 = vmatpush1.bf16.msra.mxu0 0
      %817 = vmatprep.subr.bf16.mxu0 0
      %818 = vmatpush1.bf16.msra.mxu0 0
      %819 = vmatprep.subr.bf16.mxu0 0
      %820 = vmatpush1.bf16.msra.mxu0 0
      %821 = vmatprep.subr.bf16.mxu0 0
      %822 = vmatpush1.bf16.msra.mxu0 0
      %823 = vmatprep.subr.bf16.mxu0 0
      %824 = vmatpush1.bf16.msra.mxu0 0
      %825 = vmatprep.subr.bf16.mxu0 0
      %826 = vmatpush1.bf16.msra.mxu0 0
      %827 = vmatprep.mubr.bf16.mxu0 0
      %828 = vmatmul.mubr.bf16.gmra.mrb[0].mxu0 %v790
      %v829 = vpop.f32.mrb[0].mxu0
      %v830 = vadd.f32 %v784, %v829
      %v831 = vpop.f32.mrb[0].mxu0
      %v832 = vpop.f32.mrb[0].mxu0
      %v833 = vpop.f32.mrb[0].mxu0
      %834 = vdwg.mxu0
      %835 = vrot.lane.b32.xlu0 %v735, 120
      %v836 = vpop.permute.xlu0 %835
      %837 = vrot.lane.b32.xlu0 %v727, 126
      %v838 = vpop.permute.xlu0 %837
      %v840 = vsel %vm741, %v836, 0
      %v843 = vsel %vm745, %v838, 0
      %845 = vmatprep.subr.bf16.mxu0 0
      %846 = vmatpush1.bf16.msra.mxu0 %v843
      %847 = vmatprep.subr.bf16.mxu0 0
      %848 = vmatpush1.bf16.msra.mxu0 0
      %849 = vmatprep.subr.bf16.mxu0 0
      %850 = vmatpush1.bf16.msra.mxu0 0
      %851 = vmatprep.subr.bf16.mxu0 0
      %852 = vmatpush1.bf16.msra.mxu0 0
      %853 = vmatprep.subr.bf16.mxu0 0
      %854 = vmatpush1.bf16.msra.mxu0 0
      %855 = vmatprep.subr.bf16.mxu0 0
      %856 = vmatpush1.bf16.msra.mxu0 0
      %857 = vmatprep.subr.bf16.mxu0 0
      %858 = vmatpush1.bf16.msra.mxu0 0
      %859 = vmatprep.subr.bf16.mxu0 0
      %860 = vmatpush1.bf16.msra.mxu0 0
      %861 = vmatprep.subr.bf16.mxu0 0
      %862 = vmatpush1.bf16.msra.mxu0 0
      %863 = vmatprep.subr.bf16.mxu0 0
      %864 = vmatpush1.bf16.msra.mxu0 0
      %865 = vmatprep.subr.bf16.mxu0 0
      %866 = vmatpush1.bf16.msra.mxu0 0
      %867 = vmatprep.subr.bf16.mxu0 0
      %868 = vmatpush1.bf16.msra.mxu0 0
      %869 = vmatprep.subr.bf16.mxu0 0
      %870 = vmatpush1.bf16.msra.mxu0 0
      %871 = vmatprep.subr.bf16.mxu0 0
      %872 = vmatpush1.bf16.msra.mxu0 0
      %873 = vmatprep.subr.bf16.mxu0 0
      %874 = vmatpush1.bf16.msra.mxu0 0
      %875 = vmatprep.subr.bf16.mxu0 0
      %876 = vmatpush1.bf16.msra.mxu0 0
      %877 = vmatprep.mubr.bf16.mxu0 0
      %878 = vmatmul.mubr.bf16.gmra.mrb[0].mxu0 %v840
      %v879 = vpop.f32.mrb[0].mxu0
      %v880 = vadd.f32 0.0, %v879
      %v881 = vpop.f32.mrb[0].mxu0
      %v882 = vpop.f32.mrb[0].mxu0
      %v883 = vpop.f32.mrb[0].mxu0
      %884 = vdwg.mxu0
      %v885 = vadd.f32 %v830, %v880
      %887 = vset.pattern.permute.xlu0 0
      %888 = vperm.xlu0 %887, %v726
      %v889 = vpop.permute.xlu0 %888
      %v891 = vadd.f32 %v885, %v889
      %s892 = ssub.s32 %s360, 11
      %v893 = vstv %s892
      %v894 = vadd.s32 %v645, %v893
      %vm895 = vcmp.ge.s32.totalorder %v894, 0
      %v896 = vsel %vm895, %v891, 0.0
      %v897 = vld [vmem:[%s7] sm:$0xf]
      %v898 = vld [vmem:[%s8] sm:$0xf]
      %s899 = ssub.s32 %s360, 1
      %v900 = vmul.f32 %v896, 0.018778928
      %v901 = vmul.f32 %v896, 0.004057933
      %v902 = vmul.f32 %v896, -0.11531475
      %904 = vrot.lane.b32.xlu0 %v902, 1
      %v905 = vpop.permute.xlu0 %904
      %v907 = vadd.f32 %v900, %v905
      %v908 = vmul.f32 %v896, -0.05108693
      %910 = vrot.lane.b32.xlu0 %v908, 1
      %v911 = vpop.permute.xlu0 %910
      %v913 = vadd.f32 %v901, %v911
      %v914 = vmul.f32 %v896, 0.8864196
      %916 = vrot.lane.b32.xlu0 %v914, 2
      %v917 = vpop.permute.xlu0 %916
      %v919 = vadd.f32 %v907, %v917
      %v920 = vmul.f32 %v896, 0.25714523
      %922 = vrot.lane.b32.xlu0 %v920, 2
      %v923 = vpop.permute.xlu0 %922
      %v925 = vadd.f32 %v913, %v923
      %926 = vrot.lane.b32.xlu0 %v920, 3
      %v927 = vpop.permute.xlu0 %926
      %v929 = vadd.f32 %v919, %v927
      %930 = vrot.lane.b32.xlu0 %v914, 3
      %v931 = vpop.permute.xlu0 %930
      %v933 = vadd.f32 %v925, %v931
      %934 = vrot.lane.b32.xlu0 %v908, 4
      %v935 = vpop.permute.xlu0 %934
      %v937 = vadd.f32 %v929, %v935
      %938 = vrot.lane.b32.xlu0 %v902, 4
      %v939 = vpop.permute.xlu0 %938
      %v941 = vadd.f32 %v933, %v939
      %943 = vrot.lane.b32.xlu0 %v901, 5
      %v944 = vpop.permute.xlu0 %943
      %v946 = vadd.f32 %v937, %v944
      %948 = vrot.lane.b32.xlu0 %v900, 5
      %v949 = vpop.permute.xlu0 %948
      %v951 = vadd.f32 %v941, %v949
      %953 = vset.pattern.permute.xlu0 0
      %954 = vperm.xlu0 %953, %v897
      %v955 = vpop.permute.xlu0 %954
      %v957 = vmul.f32 %v946, %v955
      %v958 = vand.u32 2147483647, %v957
      %vm959 = vcmp.le.f32.partialorder %v958, 0.7853982
      %vm960 = vcmp.lt.s32.totalorder %v957, 0
      %v961 = vand.u32 %v957, 2139095040
      %v962 = vshrl.u32 %v961, 23
      %v963 = vsub.s32 %v962, 127
      %v964 = vand.u32 2147483647, %v957
      %v965 = vand.u32 %v964, 8388607
      %v966 = vor.u32 %v965, 8388608
      %v967 = vsub.s32 0, %v966
      %v968 = vadd.s32 %v963, 1
      %vm969 = vcmp.gt.s32.totalorder %v968, 0
      %v970 = vsel %vm969, %v968, 0
      %v971 = vshrl.u32 %v970, 5
      %v972 = vand.u32 %v970, 31
      %v973 = vsub.s32 32, %v972
      %v974 = vshrl.u32 683565275, %v973
      %v975 = vshll.u32 683565275, %v972
      %v976 = vshrl.u32 2475754826, %v973
      %v977 = vor.u32 %v975, %v976
      %v978 = vshll.u32 2475754826, %v972
      %v979 = vshrl.u32 2131351028, %v973
      %v980 = vor.u32 %v978, %v979
      %v981 = vshll.u32 2131351028, %v972
      %v982 = vshrl.u32 2102212464, %v973
      %v983 = vor.u32 %v981, %v982
      %v984 = vshll.u32 2102212464, %v972
      %v985 = vshrl.u32 920167782, %v973
      %v986 = vor.u32 %v984, %v985
      %v987 = vshll.u32 920167782, %v972
      %v988 = vshrl.u32 1326507024, %v973
      %v989 = vor.u32 %v987, %v988
      %vm990 = vcmp.lt.s32.totalorder %v971, 1
      %vm991 = vcmp.lt.s32.totalorder %v971, 2
      %vm992 = vcmp.lt.s32.totalorder %v971, 3
      %vm993 = vcmp.lt.s32.totalorder %v971, 4
      %v994 = vsel %vm990, %v974, %v977
      %v995 = vsel %vm993, %v983, 2102212464
      %v996 = vsel %vm992, %v980, %v995
      %v997 = vsel %vm991, %v994, %v996
      %v998 = vsel %vm990, %v977, %v980
      %v999 = vsel %vm993, %v986, 920167782
      %v1000 = vsel %vm992, %v983, %v999
      %v1001 = vsel %vm991, %v998, %v1000
      %v1002 = vsel %vm990, %v980, %v983
      %v1003 = vsel %vm993, %v989, 1326507024
      %v1004 = vsel %vm992, %v986, %v1003
      %v1005 = vsel %vm991, %v1002, %v1004
      %v1006 = vshll.u32 %v966, 8
      %v1007 = vmul.u32.u64.compose %v1006, %v1005
      %v1008 = vextract.low.u32 %v1007
      %v1009 = vextract.high.u32 %v1007
      %v1010 = vmul.u32.u64.compose %v1006, %v1001
      %v1011 = vextract.low.u32 %v1010
      %v1012 = vextract.high.u32 %v1010
      %v1013 = vmul.u32 %v1006, %v997
      %v1014 = vadd.s32 %v1009, %v1011
      %vm1015 = vc.u32 %v1009, %v1011
      %v1016 = vadd.s32 %v1012, 1
      %v1017 = vsel %vm1015, %v1016, %v1012
      %v1018 = vadd.s32 %v1013, %v1017
      %v1019 = vadd.s32 %v1018, 536870912
      %v1020 = vshrl.u32 %v1019, 30
      %v1021 = vshll.u32 %v1020, 30
      %v1022 = vsub.s32 %v1018, %v1021
      %vm1023 = vcmp.lt.s32.totalorder %v1022, 0
      %v1024 = vsub.s32 0, %v1022
      %v1025 = vsel %vm1023, %v1024, %v1022
      %v1026 = vclz %v1025
      %v1027 = vsub.s32 %v1026, 2
      %vm1028 = vcmp.gt.s32.totalorder 0, %v1027
      %v1029 = vsel %vm1028, 0, %v1027
      %v1030 = vsub.s32 32, %v1029
      %v1031 = vshll.u32 %v1022, %v1029
      %v1032 = vshrl.u32 %v1014, %v1030
      %v1033 = vor.u32 %v1031, %v1032
      %v1034 = vsub.s32 4294967266, %v1029
      %v1035 = vadd.s32 %v1034, 127
      %v1036 = vshll.u32 %v1035, 23
      %v1037 = vor.u32 4788187, %v1036
      %v1038 = vand.u32 2147483647, %v1037
      %v1040 = vcvt.s32.f32 %v1033
      %v1041 = vmul.f32 %v1040, %v1038
      %v1042 = vxor.u32 %v1041, 2147483648
      %v1043 = vsel %vm960, %v1042, %v1041
      %v1044 = vsub.s32 4, %v1020
      %v1045 = vsel %vm960, %v1044, %v1020
      %v1046 = vsel %vm959, %v957, %v1043
      %v1047 = vsel %vm959, 0, %v1045
      %v1048 = vcosq.f32.pop %v1046
      %v1049 = vsinq.f32.pop %v1046
      %vm1050 = vweird.f32 %v957
      %v1051 = vadd.s32 %v1047, 3
      %v1052 = vand.u32 %v1051, 3
      %vm1053 = vcmp.lt.s32.totalorder %v1052, 2
      %vm1054 = vcmp.eq.s32.totalorder %v1052, 0
      %v1055 = vxor.u32 %v1049, 2147483648
      %v1056 = vsel %vm1054, %v1048, %v1055
      %vm1057 = vcmp.eq.s32.totalorder %v1052, 2
      %v1058 = vxor.u32 %v1048, 2147483648
      %v1059 = vsel %vm1057, %v1058, %v1049
      %v1060 = vsel %vm1053, %v1056, %v1059
      %v1061 = vsel %vm1050, nan, %v1060
      %v1062 = vmul.f32 %v1061, %v1061
      %1064 = vset.pattern.permute.xlu0 0
      %1065 = vperm.xlu0 %1064, %v898
      %v1066 = vpop.permute.xlu0 %1065
      %v1068 = vmul.f32 %v1066, %v1062
      %v1069 = vadd.f32 %v946, %v1068
      %v1070 = vmul.f32 %v951, %v955
      %v1071 = vand.u32 2147483647, %v1070
      %vm1072 = vcmp.le.f32.partialorder %v1071, 0.7853982
      %vm1073 = vcmp.lt.s32.totalorder %v1070, 0
      %v1074 = vand.u32 %v1070, 2139095040
      %v1075 = vshrl.u32 %v1074, 23
      %v1076 = vsub.s32 %v1075, 127
      %v1077 = vand.u32 2147483647, %v1070
      %v1078 = vand.u32 %v1077, 8388607
      %v1079 = vor.u32 %v1078, 8388608
      %v1080 = vsub.s32 0, %v1079
      %v1081 = vadd.s32 %v1076, 1
      %vm1082 = vcmp.gt.s32.totalorder %v1081, 0
      %v1083 = vsel %vm1082, %v1081, 0
      %v1084 = vshrl.u32 %v1083, 5
      %v1085 = vand.u32 %v1083, 31
      %v1086 = vsub.s32 32, %v1085
      %v1087 = vshrl.u32 683565275, %v1086
      %v1088 = vshll.u32 683565275, %v1085
      %v1089 = vshrl.u32 2475754826, %v1086
      %v1090 = vor.u32 %v1088, %v1089
      %v1091 = vshll.u32 2475754826, %v1085
      %v1092 = vshrl.u32 2131351028, %v1086
      %v1093 = vor.u32 %v1091, %v1092
      %v1094 = vshll.u32 2131351028, %v1085
      %v1095 = vshrl.u32 2102212464, %v1086
      %v1096 = vor.u32 %v1094, %v1095
      %v1097 = vshll.u32 2102212464, %v1085
      %v1098 = vshrl.u32 920167782, %v1086
      %v1099 = vor.u32 %v1097, %v1098
      %v1100 = vshll.u32 920167782, %v1085
      %v1101 = vshrl.u32 1326507024, %v1086
      %v1102 = vor.u32 %v1100, %v1101
      %vm1103 = vcmp.lt.s32.totalorder %v1084, 1
      %vm1104 = vcmp.lt.s32.totalorder %v1084, 2
      %vm1105 = vcmp.lt.s32.totalorder %v1084, 3
      %vm1106 = vcmp.lt.s32.totalorder %v1084, 4
      %v1107 = vsel %vm1103, %v1087, %v1090
      %v1108 = vsel %vm1106, %v1096, 2102212464
      %v1109 = vsel %vm1105, %v1093, %v1108
      %v1110 = vsel %vm1104, %v1107, %v1109
      %v1111 = vsel %vm1103, %v1090, %v1093
      %v1112 = vsel %vm1106, %v1099, 920167782
      %v1113 = vsel %vm1105, %v1096, %v1112
      %v1114 = vsel %vm1104, %v1111, %v1113
      %v1115 = vsel %vm1103, %v1093, %v1096
      %v1116 = vsel %vm1106, %v1102, 1326507024
      %v1117 = vsel %vm1105, %v1099, %v1116
      %v1118 = vsel %vm1104, %v1115, %v1117
      %v1119 = vshll.u32 %v1079, 8
      %v1120 = vmul.u32.u64.compose %v1119, %v1118
      %v1121 = vextract.low.u32 %v1120
      %v1122 = vextract.high.u32 %v1120
      %v1123 = vmul.u32.u64.compose %v1119, %v1114
      %v1124 = vextract.low.u32 %v1123
      %v1125 = vextract.high.u32 %v1123
      %v1126 = vmul.u32 %v1119, %v1110
      %v1127 = vadd.s32 %v1122, %v1124
      %vm1128 = vc.u32 %v1122, %v1124
      %v1129 = vadd.s32 %v1125, 1
      %v1130 = vsel %vm1128, %v1129, %v1125
      %v1131 = vadd.s32 %v1126, %v1130
      %v1132 = vadd.s32 %v1131, 536870912
      %v1133 = vshrl.u32 %v1132, 30
      %v1134 = vshll.u32 %v1133, 30
      %v1135 = vsub.s32 %v1131, %v1134
      %vm1136 = vcmp.lt.s32.totalorder %v1135, 0
      %v1137 = vsub.s32 0, %v1135
      %v1138 = vsel %vm1136, %v1137, %v1135
      %v1139 = vclz %v1138
      %v1140 = vsub.s32 %v1139, 2
      %vm1141 = vcmp.gt.s32.totalorder 0, %v1140
      %v1142 = vsel %vm1141, 0, %v1140
      %v1143 = vsub.s32 32, %v1142
      %v1144 = vshll.u32 %v1135, %v1142
      %v1145 = vshrl.u32 %v1127, %v1143
      %v1146 = vor.u32 %v1144, %v1145
      %v1147 = vsub.s32 4294967266, %v1142
      %v1148 = vadd.s32 %v1147, 127
      %v1149 = vshll.u32 %v1148, 23
      %v1150 = vor.u32 4788187, %v1149
      %v1151 = vand.u32 2147483647, %v1150
      %v1153 = vcvt.s32.f32 %v1146
      %v1154 = vmul.f32 %v1153, %v1151
      %v1155 = vxor.u32 %v1154, 2147483648
      %v1156 = vsel %vm1073, %v1155, %v1154
      %v1157 = vsub.s32 4, %v1133
      %v1158 = vsel %vm1073, %v1157, %v1133
      %v1159 = vsel %vm1072, %v1070, %v1156
      %v1160 = vsel %vm1072, 0, %v1158
      %v1161 = vcosq.f32.pop %v1159
      %v1162 = vsinq.f32.pop %v1159
      %vm1163 = vweird.f32 %v1070
      %v1164 = vadd.s32 %v1160, 3
      %v1165 = vand.u32 %v1164, 3
      %vm1166 = vcmp.lt.s32.totalorder %v1165, 2
      %vm1167 = vcmp.eq.s32.totalorder %v1165, 0
      %v1168 = vxor.u32 %v1162, 2147483648
      %v1169 = vsel %vm1167, %v1161, %v1168
      %vm1170 = vcmp.eq.s32.totalorder %v1165, 2
      %v1171 = vxor.u32 %v1161, 2147483648
      %v1172 = vsel %vm1170, %v1171, %v1162
      %v1173 = vsel %vm1166, %v1169, %v1172
      %v1174 = vsel %vm1163, nan, %v1173
      %v1175 = vmul.f32 %v1174, %v1174
      %v1176 = vmul.f32 %v1066, %v1175
      %v1177 = vadd.f32 %v951, %v1176
      %s1178 = ssub.s32 %s360, 7
      %v1179 = vstv %s1178
      %v1180 = vadd.s32 %v645, %v1179
      %vm1181 = vcmp.ge.s32.totalorder %v1180, 0
      %1183 = vrot.lane.b32.xlu0 %v1177, 123
      %v1184 = vpop.permute.xlu0 %1183
      %v1186 = vsel %vm1181, %v1184, 0.0
      %v1187 = vmul.f32 %v1069, 0.009389464
      %v1188 = vmul.f32 %v1186, 0.0020289666
      %1190 = vrot.lane.b32.xlu0 %v1188, 5
      %v1191 = vpop.permute.xlu0 %1190
      %v1193 = vadd.f32 %v1187, %v1191
      %v1194 = vmul.f32 %v1069, -0.057657376
      %1196 = vrot.lane.b32.xlu0 %v1194, 127
      %v1197 = vpop.permute.xlu0 %1196
      %v1199 = vadd.f32 %v1193, %v1197
      %v1200 = vmul.f32 %v1186, -0.025543464
      %1202 = vrot.lane.b32.xlu0 %v1200, 4
      %v1203 = vpop.permute.xlu0 %1202
      %v1205 = vadd.f32 %v1199, %v1203
      %v1206 = vmul.f32 %v1069, 0.4432098
      %1208 = vrot.lane.b32.xlu0 %v1206, 126
      %v1209 = vpop.permute.xlu0 %1208
      %v1211 = vadd.f32 %v1205, %v1209
      %v1212 = vmul.f32 %v1186, 0.12857261
      %1214 = vrot.lane.b32.xlu0 %v1212, 3
      %v1215 = vpop.permute.xlu0 %1214
      %v1217 = vadd.f32 %v1211, %v1215
      %v1218 = vmul.f32 %v1069, 0.12857261
      %1220 = vrot.lane.b32.xlu0 %v1218, 125
      %v1221 = vpop.permute.xlu0 %1220
      %v1223 = vadd.f32 %v1217, %v1221
      %v1224 = vmul.f32 %v1186, 0.4432098
      %1226 = vrot.lane.b32.xlu0 %v1224, 2
      %v1227 = vpop.permute.xlu0 %1226
      %v1229 = vadd.f32 %v1223, %v1227
      %v1230 = vmul.f32 %v1069, -0.025543464
      %1232 = vrot.lane.b32.xlu0 %v1230, 124
      %v1233 = vpop.permute.xlu0 %1232
      %v1235 = vadd.f32 %v1229, %v1233
      %v1236 = vmul.f32 %v1186, -0.057657376
      %1238 = vrot.lane.b32.xlu0 %v1236, 1
      %v1239 = vpop.permute.xlu0 %1238
      %v1241 = vadd.f32 %v1235, %v1239
      %v1242 = vmul.f32 %v1069, 0.0020289666
      %1244 = vrot.lane.b32.xlu0 %v1242, 123
      %v1245 = vpop.permute.xlu0 %1244
      %v1247 = vadd.f32 %v1241, %v1245
      %v1248 = vmul.f32 %v1186, 0.009389464
      %v1249 = vadd.f32 %v1247, %v1248
      %v1250 = vstv %s899
      %v1251 = vadd.s32 %v645, %v1250
      %vm1252 = vcmp.lt.s32.totalorder %v1251, 16
      %1254 = vrot.lane.b32.xlu0 %v1249, 123
      %v1255 = vpop.permute.xlu0 %1254
      %v1257 = vsel %vm1252, %v1255, 0.0
      %v1258 = vld [vmem:[%s5] sm:$0x3]
      %v1259 = vld [vmem:[%s6] sm:$0xf]
      %v1260 = vpack.c.bf16 %v1257, %v1257
      %v1263 = vunpack.c.l.s4 1983009808
      %v1264 = vunpack.c.0.s8 %v1263
      %v1265 = vlaneseq
      %v1266 = vshrl.u32 %v1265, 7
      %v1267 = vsub.s32 %v1264, %v1266
      %v1268 = vrot.slane %v1258, %v1267
      %1269 = vrot.lane.b32.xlu0 %v1268, 124
      %v1270 = vpop.permute.xlu0 %1269
      %1272 = vrot.lane.b32.xlu0 %v1260, 127
      %v1273 = vpop.permute.xlu0 %1272
      %v1275 = vsel %vm741, %v1270, 0
      %v1278 = vsel %vm745, %v1273, 0
      %1280 = vmatprep.subr.bf16.mxu0 0
      %1281 = vmatpush1.bf16.msra.mxu0 %v1278
      %1282 = vmatprep.subr.bf16.mxu0 0
      %1283 = vmatpush1.bf16.msra.mxu0 0
      %1284 = vmatprep.subr.bf16.mxu0 0
      %1285 = vmatpush1.bf16.msra.mxu0 0
      %1286 = vmatprep.subr.bf16.mxu0 0
      %1287 = vmatpush1.bf16.msra.mxu0 0
      %1288 = vmatprep.subr.bf16.mxu0 0
      %1289 = vmatpush1.bf16.msra.mxu0 0
      %1290 = vmatprep.subr.bf16.mxu0 0
      %1291 = vmatpush1.bf16.msra.mxu0 0
      %1292 = vmatprep.subr.bf16.mxu0 0
      %1293 = vmatpush1.bf16.msra.mxu0 0
      %1294 = vmatprep.subr.bf16.mxu0 0
      %1295 = vmatpush1.bf16.msra.mxu0 0
      %1296 = vmatprep.subr.bf16.mxu0 0
      %1297 = vmatpush1.bf16.msra.mxu0 0
      %1298 = vmatprep.subr.bf16.mxu0 0
      %1299 = vmatpush1.bf16.msra.mxu0 0
      %1300 = vmatprep.subr.bf16.mxu0 0
      %1301 = vmatpush1.bf16.msra.mxu0 0
      %1302 = vmatprep.subr.bf16.mxu0 0
      %1303 = vmatpush1.bf16.msra.mxu0 0
      %1304 = vmatprep.subr.bf16.mxu0 0
      %1305 = vmatpush1.bf16.msra.mxu0 0
      %1306 = vmatprep.subr.bf16.mxu0 0
      %1307 = vmatpush1.bf16.msra.mxu0 0
      %1308 = vmatprep.subr.bf16.mxu0 0
      %1309 = vmatpush1.bf16.msra.mxu0 0
      %1310 = vmatprep.subr.bf16.mxu0 0
      %1311 = vmatpush1.bf16.msra.mxu0 0
      %1312 = vmatprep.mubr.bf16.mxu0 0
      %1313 = vmatmul.mubr.bf16.gmra.mrb[0].mxu0 %v1275
      %v1314 = vpop.f32.mrb[0].mxu0
      %v1315 = vadd.f32 0.0, %v1314
      %v1316 = vpop.f32.mrb[0].mxu0
      %v1317 = vpop.f32.mrb[0].mxu0
      %v1318 = vpop.f32.mrb[0].mxu0
      %1319 = vdwg.mxu0
      %v1321 = vsel %vm741, %v1258, 0
      %v1324 = vsel %vm745, %v1260, 0
      %1326 = vmatprep.subr.bf16.mxu0 0
      %1327 = vmatpush1.bf16.msra.mxu0 %v1324
      %1328 = vmatprep.subr.bf16.mxu0 0
      %1329 = vmatpush1.bf16.msra.mxu0 0
      %1330 = vmatprep.subr.bf16.mxu0 0
      %1331 = vmatpush1.bf16.msra.mxu0 0
      %1332 = vmatprep.subr.bf16.mxu0 0
      %1333 = vmatpush1.bf16.msra.mxu0 0
      %1334 = vmatprep.subr.bf16.mxu0 0
      %1335 = vmatpush1.bf16.msra.mxu0 0
      %1336 = vmatprep.subr.bf16.mxu0 0
      %1337 = vmatpush1.bf16.msra.mxu0 0
      %1338 = vmatprep.subr.bf16.mxu0 0
      %1339 = vmatpush1.bf16.msra.mxu0 0
      %1340 = vmatprep.subr.bf16.mxu0 0
      %1341 = vmatpush1.bf16.msra.mxu0 0
      %1342 = vmatprep.subr.bf16.mxu0 0
      %1343 = vmatpush1.bf16.msra.mxu0 0
      %1344 = vmatprep.subr.bf16.mxu0 0
      %1345 = vmatpush1.bf16.msra.mxu0 0
      %1346 = vmatprep.subr.bf16.mxu0 0
      %1347 = vmatpush1.bf16.msra.mxu0 0
      %1348 = vmatprep.subr.bf16.mxu0 0
      %1349 = vmatpush1.bf16.msra.mxu0 0
      %1350 = vmatprep.subr.bf16.mxu0 0
      %1351 = vmatpush1.bf16.msra.mxu0 0
      %1352 = vmatprep.subr.bf16.mxu0 0
      %1353 = vmatpush1.bf16.msra.mxu0 0
      %1354 = vmatprep.subr.bf16.mxu0 0
      %1355 = vmatpush1.bf16.msra.mxu0 0
      %1356 = vmatprep.subr.bf16.mxu0 0
      %1357 = vmatpush1.bf16.msra.mxu0 0
      %1358 = vmatprep.mubr.bf16.mxu0 0
      %1359 = vmatmul.mubr.bf16.gmra.mrb[0].mxu0 %v1321
      %v1360 = vpop.f32.mrb[0].mxu0
      %v1361 = vadd.f32 %v1315, %v1360
      %v1362 = vpop.f32.mrb[0].mxu0
      %v1363 = vpop.f32.mrb[0].mxu0
      %v1364 = vpop.f32.mrb[0].mxu0
      %1365 = vdwg.mxu0
      %1366 = vrot.lane.b32.xlu0 %v1268, 120
      %v1367 = vpop.permute.xlu0 %1366
      %1368 = vrot.lane.b32.xlu0 %v1260, 126
      %v1369 = vpop.permute.xlu0 %1368
      %v1371 = vsel %vm741, %v1367, 0
      %v1374 = vsel %vm745, %v1369, 0
      %1376 = vmatprep.subr.bf16.mxu0 0
      %1377 = vmatpush1.bf16.msra.mxu0 %v1374
      %1378 = vmatprep.subr.bf16.mxu0 0
      %1379 = vmatpush1.bf16.msra.mxu0 0
      %1380 = vmatprep.subr.bf16.mxu0 0
      %1381 = vmatpush1.bf16.msra.mxu0 0
      %1382 = vmatprep.subr.bf16.mxu0 0
      %1383 = vmatpush1.bf16.msra.mxu0 0
      %1384 = vmatprep.subr.bf16.mxu0 0
      %1385 = vmatpush1.bf16.msra.mxu0 0
      %1386 = vmatprep.subr.bf16.mxu0 0
      %1387 = vmatpush1.bf16.msra.mxu0 0
      %1388 = vmatprep.subr.bf16.mxu0 0
      %1389 = vmatpush1.bf16.msra.mxu0 0
      %1390 = vmatprep.subr.bf16.mxu0 0
      %1391 = vmatpush1.bf16.msra.mxu0 0
      %1392 = vmatprep.subr.bf16.mxu0 0
      %1393 = vmatpush1.bf16.msra.mxu0 0
      %1394 = vmatprep.subr.bf16.mxu0 0
      %1395 = vmatpush1.bf16.msra.mxu0 0
      %1396 = vmatprep.subr.bf16.mxu0 0
      %1397 = vmatpush1.bf16.msra.mxu0 0
      %1398 = vmatprep.subr.bf16.mxu0 0
      %1399 = vmatpush1.bf16.msra.mxu0 0
      %1400 = vmatprep.subr.bf16.mxu0 0
      %1401 = vmatpush1.bf16.msra.mxu0 0
      %1402 = vmatprep.subr.bf16.mxu0 0
      %1403 = vmatpush1.bf16.msra.mxu0 0
      %1404 = vmatprep.subr.bf16.mxu0 0
      %1405 = vmatpush1.bf16.msra.mxu0 0
      %1406 = vmatprep.subr.bf16.mxu0 0
      %1407 = vmatpush1.bf16.msra.mxu0 0
      %1408 = vmatprep.mubr.bf16.mxu0 0
      %1409 = vmatmul.mubr.bf16.gmra.mrb[0].mxu0 %v1371
      %v1410 = vpop.f32.mrb[0].mxu0
      %v1411 = vadd.f32 0.0, %v1410
      %v1412 = vpop.f32.mrb[0].mxu0
      %v1413 = vpop.f32.mrb[0].mxu0
      %v1414 = vpop.f32.mrb[0].mxu0
      %1415 = vdwg.mxu0
      %v1416 = vadd.f32 %v1361, %v1411
      %1418 = vset.pattern.permute.xlu0 0
      %1419 = vperm.xlu0 %1418, %v1259
      %v1420 = vpop.permute.xlu0 %1419
      %v1422 = vadd.f32 %v1416, %v1420
      %1424 = vrot.lane.b32.xlu0 %v361, 106
      %v1425 = vpop.permute.xlu0 %1424
      %v1427 = vadd.f32 %v1422, %v1425
      %vm1428 = vcmask 125952
      %1429 = vst.msk [vmem:[%s358] sm:$0xf] %vm1428, %v1427
      %p1430 = scmp.lt.s32.totalorder %s24, 1
      %s1431 = scalar_select %p1430, %s24, 1
      %p1432 = scmp.lt.s32.totalorder %s25, 0
      %s1433 = scalar_select %p1432, %s25, 0
      %s1434 = sadd.s32 %s1433, %s1431
      %s1435 = smul.addr %s1434, 4
      %s1436 = scalar_lea.vmem %s9, %s1435
      // Predicated region
      $region57: #{_lambda_.3} parent=55 // pred_check
        %p1437 = pneg %p248
      $region58: #{_lambda_.3} parent=55 // pred_check_branch
        %1439 = sbr.rel (%p1437) target = $region60
      $region59: #{_lambda_.3} parent=55 // pred_region
        _
      $region60: #{_lambda_.3} parent=55 // pred_fallthru
        _
    $region56: #{_lambda_.3} parent=5 // pred_fallthru
      _
    %p1440 = scmp.le.s32.totalorder 2, %s15
    // Predicated region
    $region61: #{_lambda_.3} parent=5 // pred_check
      %p1441 = pneg %p1440
    $region62: #{_lambda_.3} parent=5 // pred_check_branch
      %1443 = sbr.rel (%p1441) target = $region64
    $region63: #{_lambda_.3} parent=5 // pred_region
      %s1444 = ssub.s32 %s15, 2
      // Predicated region
      $region65: #{_lambda_.3} parent=63 // pred_check
        %p1445 = pneg %p254
      $region66: #{_lambda_.3} parent=63 // pred_check_branch
        %1447 = sbr.rel (%p1445) target = $region68
      $region67: #{_lambda_.3} parent=63 // pred_region
        %p1448 = scmp.lt.s32.totalorder %s26, 1
        %s1449 = scalar_select %p1448, %s26, 1
        %p1450 = scmp.lt.s32.totalorder %s27, 0
        %s1451 = scalar_select %p1450, %s27, 0
        %s1452 = sadd.s32 %s1451, %s1449
        %s1453 = smul.addr %s1452, 4
        %s1454 = scalar_lea.vmem %s9, %s1453
      $region68: #{_lambda_.3} parent=63 // pred_fallthru
        _
    $region64: #{_lambda_.3} parent=5 // pred_fallthru
      _
  $region6: #{_lambda_.3} parent=0 // loop_footer
    %s19 = sadd.s32 1, %s15
  $region7: #{_lambda_.3} parent=0 // loop_footer_branch
    %14 = sbr.rel target = $region3
  $region8: #{_lambda_.3} parent=0 // loop_exit
    _

</llo_original>
